<compile_context>
chip_gen: v6e
topology: v6e:2x2x1
jax: 0.10.0
libtpu: 0.0.40
codegen_flags: <defaults>
</compile_context>

<pallas_src>
import functools

import jax
import jax.numpy as jnp
import numpy as np
from jax.experimental import pallas as pl
from jax.experimental.pallas import tpu as pltpu

CIN, COUT = 3, 64
KH = KW = 7
STRIDE, PAD = 2, 3
POOL_K, POOL_S, POOL_P = 3, 2, 1
EPS = 1e-5

SDP = STRIDE * POOL_S                       # 4: space-to-depth factor (input px per pooled px)
SDC = SDP * SDP * CIN                       # 48: channels of the space-to-depth image
KP = 3 * 3 * SDC                            # 432: flattened 3x3x48 S-neighbourhood per pooled px
NTAP = POOL_K * POOL_K                      # 9 pool taps packed in the matmul N dimension
_TAPS = [(dr, dc) for dr in (-1, 0, 1) for dc in (-1, 0, 1)]
NEG = -1.0e30


# ----------------------------------------------------------------------------
# Fused stem kernel: build patches in VMEM -> matmul -> masked 9-way max -> relu(+bias)
# ----------------------------------------------------------------------------
def _stem_kernel(s_ref, w_ref, bias_ref, m_ref, o_ref, patch_ref, *, TP, Wp, C):
    # s_ref    : (1, Hq, Wq, 48) bf16  space-to-depth(4) padded image (resident per image)
    # w_ref    : (432, 9*64)     bf16  conv kernel at the 9 pool-tap offsets, BN scale folded in
    # bias_ref : (1, 64)         f32   folded BatchNorm shift
    # m_ref    : (2, TP*Wp, 1)   f32   additive -1e30 masks for top-edge / left-edge taps
    # o_ref    : (1, TP*Wp, 64)  bf16  pooled output rows of this tile
    # patch_ref: (TP*Wp, 432)    bf16  VMEM scratch: per-pooled-pixel receptive field
    row0 = pl.program_id(1) * TP            # first pooled row of this tile

    # Build the patch tile from the resident S block: 9 * TP small slab copies,
    # dynamic index only on the untiled Hq dim, static slices elsewhere (no HBM traffic).
    for a in range(3):
        for b in range(3):
            k0 = (3 * a + b) * SDC
            for p in range(TP):
                patch_ref[p * Wp:(p + 1) * Wp, k0:k0 + SDC] = \
                    s_ref[0, row0 + p + a, pl.ds(b, Wp), :]

    # One MXU matmul: per pooled pixel, all 9 conv outputs of its pool window (BN-scaled).
    y = jnp.dot(patch_ref[...], w_ref[...],
                preferred_element_type=jnp.float32)          # (rows, 576) f32

    # maxpool(3,2,1): max over the 9 lane blocks.  Taps at conv row/col -1 are pool padding;
    # they are masked to ~-inf (max runs BEFORE bias+relu, so 0 would not be neutral).
    mh = m_ref[0]                                            # (rows, 1): -1e30 where ph == 0
    mw = m_ref[1]                                            # (rows, 1): -1e30 where pw == 0
    best = None
    for tap, (dr, dc) in enumerate(_TAPS):
        blk = y[:, tap * C:(tap + 1) * C]
        if dr < 0:
            blk = blk + mh
        if dc < 0:
            blk = blk + mw
        best = blk if best is None else jnp.maximum(best, blk)

    # Single BN-shift + ReLU on the small (rows, 64) result; bf16 store (only HBM write).
    o_ref[0] = jnp.maximum(best + bias_ref[...], 0.0).astype(o_ref.dtype)


def _pick_tile(Hp, Wp, target_rows=1024):
    """Largest pooled-row tile TP dividing Hp with TP*Wp <= target_rows (sublane friendly)."""
    cands = [tp for tp in range(1, Hp + 1)
             if Hp % tp == 0 and ((tp * Wp) % 8 == 0 or tp == Hp)]
    fit = [tp for tp in cands if tp * Wp <= target_rows]
    if fit:
        return max(fit)
    return min(cands) if cands else Hp


def stem_forward_pallas(s, w_taps, bias, masks, *, Hp, Wp, TP):
    N, Hq, Wq, _ = s.shape
    T = Hp // TP
    rows = TP * Wp
    Mp = Hp * Wp
    kernel = functools.partial(_stem_kernel, TP=TP, Wp=Wp, C=COUT)
    return pl.pallas_call(
        kernel,
        out_shape=jax.ShapeDtypeStruct((N, Mp, COUT), jnp.bfloat16),
        grid_spec=pltpu.PrefetchScalarGridSpec(
            num_scalar_prefetch=0,
            grid=(N, T),
            in_specs=[
                # Whole S block per image; block index ignores t, so it is fetched once per
                # image and stays resident across its row tiles.
                pl.BlockSpec((1, Hq, Wq, SDC), lambda n, t: (n, 0, 0, 0)),
                pl.BlockSpec((KP, NTAP * COUT), lambda n, t: (0, 0)),
                pl.BlockSpec((1, COUT), lambda n, t: (0, 0)),
                pl.BlockSpec((2, rows, 1), lambda n, t: (0, t, 0)),
            ],
            out_specs=pl.BlockSpec((1, rows, COUT), lambda n, t: (n, t, 0)),
            scratch_shapes=[pltpu.VMEM((rows, KP), jnp.bfloat16)],
        ),
        compiler_params=pltpu.CompilerParams(
            dimension_semantics=("parallel", "parallel")),
    )(s, w_taps, bias, masks)


# ----------------------------------------------------------------------------
# Wrapper-side layout plumbing (XLA, all O(image bytes)): space-to-depth + tap weights
# ----------------------------------------------------------------------------
def _stem_weights(conv_w, scale):
    """(COUT,CIN,7,7), (COUT,) -> (432, 9*COUT): conv kernel at each pool-tap offset,
    re-ordered to the space-to-depth K layout, with the BN scale folded in (sign-safe)."""
    w_hwio = jnp.transpose(conv_w, (2, 3, 1, 0)) * scale.reshape(1, 1, 1, COUT)  # (7,7,3,64)
    cols = []
    for dr, dc in _TAPS:
        pi, pj = 2 * (dr + 1), 2 * (dc + 1)
        wb = jnp.pad(w_hwio, ((pi, 12 - KH - pi), (pj, 12 - KW - pj),
                              (0, 0), (0, 0)))                 # (12,12,3,64), (i,j,c,co)
        # K layout used by the kernel: (a, b, r, s, c) with i = 4a+r, j = 4b+s.
        wb = wb.reshape(3, 4, 3, 4, CIN, COUT)                 # (a,r,b,s,c,co)
        wb = jnp.transpose(wb, (0, 2, 1, 3, 4, 5)).reshape(KP, COUT)
        cols.append(wb)
    return jnp.concatenate(cols, axis=1)                       # (432, 576)


# ----------------------------------------------------------------------------
# Forward pass (== Network.forward with the resnet18 stem truncated at 'maxpool')
# ----------------------------------------------------------------------------
def forward(images_nchw, params):
    N, C, H, W = images_nchw.shape
    assert C == CIN and H % 4 == 0 and W % 4 == 0, "stem kernel expects H, W multiples of 4"
    Hp, Wp = H // 4, W // 4                                    # pooled output spatial dims
    Hq, Wq = Hp + 2, Wp + 2                                    # space-to-depth grid (padded)
    Mp = Hp * Wp

    # NCHW -> NHWC bf16 (documented deviation: conv runs on bf16 inputs/weights, f32 accum),
    # pad (conv pad 3 + pool-tap margin 2 on top/left, 3 on bottom/right), space-to-depth(4).
    x = jnp.transpose(images_nchw, (0, 2, 3, 1)).astype(jnp.bfloat16)
    pad_lo = PAD + POOL_P * STRIDE                             # 5
    xp = jnp.pad(x, ((0, 0), (pad_lo, PAD), (pad_lo, PAD), (0, 0)))
    s = xp.reshape(N, Hq, SDP, Wq, SDP, CIN)
    s = jnp.transpose(s, (0, 1, 3, 2, 4, 5)).reshape(N, Hq, Wq, SDC)   # (N,Hq,Wq,48) bf16

    # Folded BatchNorm (eval): scale into the weights, shift applied after the pool max.
    scale = params["gamma"] / jnp.sqrt(params["var"] + EPS)
    bias = (params["beta"] - params["mean"] * scale).reshape(1, COUT).astype(jnp.float32)
    w_taps = _stem_weights(params["conv1_w"], scale).astype(jnp.bfloat16)

    # Precomputed additive edge masks (replaces in-kernel // and %): row-major pooled pixels.
    ridx = jnp.arange(Mp, dtype=jnp.int32)
    mh = jnp.where(ridx < Wp, NEG, 0.0)                        # global ph == 0
    mw = jnp.where(ridx % Wp == 0, NEG, 0.0)                   # pw == 0
    masks = jnp.stack([mh, mw]).reshape(2, Mp, 1).astype(jnp.float32)

    TP = _pick_tile(Hp, Wp)
    z = stem_forward_pallas(s, w_taps, bias, masks, Hp=Hp, Wp=Wp, TP=TP)  # (N, Mp, 64) bf16
    z = z.reshape(N, Hp, Wp, COUT)
    # Keep the PyTorch NCHW contract; consumers happy with NHWC/bf16 should skip this pass.
    return jnp.transpose(z, (0, 3, 1, 2))


# ----------------------------------------------------------------------------
# Pure-JAX f32 reference (faithful to the PyTorch stem) for verification
# ----------------------------------------------------------------------------
def reference(images_nchw, params):
    x = jnp.transpose(images_nchw, (0, 2, 3, 1))
    w = jnp.transpose(params["conv1_w"], (2, 3, 1, 0))
    y = jax.lax.conv_general_dilated(
        x, w, (STRIDE, STRIDE), [(PAD, PAD), (PAD, PAD)],
        dimension_numbers=("NHWC", "HWIO", "NHWC"))
    scale = params["gamma"] / jnp.sqrt(params["var"] + EPS)
    bias = params["beta"] - params["mean"] * scale
    y = jnp.maximum(y * scale + bias, 0.0)
    y = jax.lax.reduce_window(
        y, -jnp.inf, jax.lax.max,
        (1, POOL_K, POOL_K, 1), (1, POOL_S, POOL_S, 1),
        [(0, 0), (POOL_P, POOL_P), (POOL_P, POOL_P), (0, 0)])
    return jnp.transpose(y, (0, 3, 1, 2))


if __name__ == "__main__":
    key = jax.random.PRNGKey(0)
    k_img, k_w, k_g, k_b, k_m, k_v = jax.random.split(key, 6)

    images = jax.random.normal(k_img, (2, CIN, 32, 32), jnp.float32)
    params = dict(
        conv1_w=jax.random.normal(k_w, (COUT, CIN, KH, KW), jnp.float32) * 0.05,
        gamma=jax.random.uniform(k_g, (COUT,), jnp.float32, 0.5, 1.5),
        beta=jax.random.normal(k_b, (COUT,), jnp.float32) * 0.1,
        mean=jax.random.normal(k_m, (COUT,), jnp.float32) * 0.1,
        var=jax.random.uniform(k_v, (COUT,), jnp.float32, 0.5, 1.5),
    )

    out = jax.block_until_ready(jax.jit(forward)(images, params))
    ref = jax.block_until_ready(reference(images, params))

    assert out.shape == (2, COUT, 8, 8), out.shape
    # Kernel uses bf16 inputs/weights/output (f32 accumulation); reference is pure f32.
    np.testing.assert_allclose(np.asarray(out, dtype=np.float32), np.asarray(ref),
                               rtol=2e-2, atol=2e-2)
    print("KERNEL_OK")
</pallas_src>

<mosaic_0001>
module attributes {stable_mosaic.version = 11 : i64} {
  func.func @_stem_kernel(%arg0: i32, %arg1: i32, %arg2: memref<1x10x10x48xbf16, #tpu.memory_space<vmem>>, %arg3: memref<432x576xbf16, #tpu.memory_space<vmem>>, %arg4: memref<1x64xf32, #tpu.memory_space<vmem>>, %arg5: memref<2x64x1xf32, #tpu.memory_space<vmem>>, %arg6: memref<1x64x64xbf16, #tpu.memory_space<vmem>>, %arg7: memref<64x432xbf16, #tpu.memory_space<vmem>>) attributes {dimension_semantics = [#tpu.dimension_semantics<parallel>, #tpu.dimension_semantics<parallel>], iteration_bounds = array<i64: 2, 1>, scalar_prefetch = 0 : i64, scratch_operands = 1 : i64, tpu.core_type = #tpu.core_type<tc>, window_params = [{transform_indices = @transform_0, window_bounds = array<i64: 1, 10, 10, 48>}, {pipeline_mode = #tpu.pipeline_mode<synchronous>, transform_indices = @transform_1, window_bounds = array<i64: 432, 576>}, {pipeline_mode = #tpu.pipeline_mode<synchronous>, transform_indices = @transform_2, window_bounds = array<i64: 1, 64>}, {transform_indices = @transform_3, window_bounds = array<i64: 2, 64, 1>}, {transform_indices = @transform_4, window_bounds = array<i64: 1, 64, 64>}]} {
    %c8_i32 = arith.constant 8 : i32
    %0 = arith.muli %arg1, %c8_i32 : i32
    %c0_i32 = arith.constant 0 : i32
    %1 = arith.addi %0, %c0_i32 : i32
    %c0_i32_0 = arith.constant 0 : i32
    %2 = arith.addi %1, %c0_i32_0 : i32
    %c0 = arith.constant 0 : index
    %3 = arith.index_cast %2 : i32 to index
    %c0_1 = arith.constant 0 : index
    %c0_2 = arith.constant 0 : index
    %4 = vector.load %arg2[%c0, %3, %c0_1, %c0_2] : memref<1x10x10x48xbf16, #tpu.memory_space<vmem>>, vector<1x1x8x48xbf16>
    %5 = vector.shape_cast %4 : vector<1x1x8x48xbf16> to vector<8x48xbf16>
    %c0_3 = arith.constant 0 : index
    %c0_4 = arith.constant 0 : index
    %6 = vector.load %arg7[%c0_3, %c0_4] : memref<64x432xbf16, #tpu.memory_space<vmem>>, vector<8x48xbf16>
    tpu.vector_store %arg7[%c0_3, %c0_4], %5 {strides = array<i32>} : memref<64x432xbf16, #tpu.memory_space<vmem>>, vector<8x48xbf16>,
    %c1_i32 = arith.constant 1 : i32
    %7 = arith.addi %0, %c1_i32 : i32
    %c0_i32_5 = arith.constant 0 : i32
    %8 = arith.addi %7, %c0_i32_5 : i32
    %c0_6 = arith.constant 0 : index
    %9 = arith.index_cast %8 : i32 to index
    %c0_7 = arith.constant 0 : index
    %c0_8 = arith.constant 0 : index
    %10 = vector.load %arg2[%c0_6, %9, %c0_7, %c0_8] : memref<1x10x10x48xbf16, #tpu.memory_space<vmem>>, vector<1x1x8x48xbf16>
    %11 = vector.shape_cast %10 : vector<1x1x8x48xbf16> to vector<8x48xbf16>
    %c8 = arith.constant 8 : index
    %c0_9 = arith.constant 0 : index
    %12 = vector.load %arg7[%c8, %c0_9] : memref<64x432xbf16, #tpu.memory_space<vmem>>, vector<8x48xbf16>
    tpu.vector_store %arg7[%c8, %c0_9], %11 {strides = array<i32>} : memref<64x432xbf16, #tpu.memory_space<vmem>>, vector<8x48xbf16>,
    %c2_i32 = arith.constant 2 : i32
    %13 = arith.addi %0, %c2_i32 : i32
    %c0_i32_10 = arith.constant 0 : i32
    %14 = arith.addi %13, %c0_i32_10 : i32
    %c0_11 = arith.constant 0 : index
    %15 = arith.index_cast %14 : i32 to index
    %c0_12 = arith.constant 0 : index
    %c0_13 = arith.constant 0 : index
    %16 = vector.load %arg2[%c0_11, %15, %c0_12, %c0_13] : memref<1x10x10x48xbf16, #tpu.memory_space<vmem>>, vector<1x1x8x48xbf16>
    %17 = vector.shape_cast %16 : vector<1x1x8x48xbf16> to vector<8x48xbf16>
    %c16 = arith.constant 16 : index
    %c0_14 = arith.constant 0 : index
    %18 = vector.load %arg7[%c16, %c0_14] : memref<64x432xbf16, #tpu.memory_space<vmem>>, vector<8x48xbf16>
    tpu.vector_store %arg7[%c16, %c0_14], %17 {strides = array<i32>} : memref<64x432xbf16, #tpu.memory_space<vmem>>, vector<8x48xbf16>,
    %c3_i32 = arith.constant 3 : i32
    %19 = arith.addi %0, %c3_i32 : i32
    %c0_i32_15 = arith.constant 0 : i32
    %20 = arith.addi %19, %c0_i32_15 : i32
    %c0_16 = arith.constant 0 : index
    %21 = arith.index_cast %20 : i32 to index
    %c0_17 = arith.constant 0 : index
    %c0_18 = arith.constant 0 : index
    %22 = vector.load %arg2[%c0_16, %21, %c0_17, %c0_18] : memref<1x10x10x48xbf16, #tpu.memory_space<vmem>>, vector<1x1x8x48xbf16>
    %23 = vector.shape_cast %22 : vector<1x1x8x48xbf16> to vector<8x48xbf16>
    %c24 = arith.constant 24 : index
    %c0_19 = arith.constant 0 : index
    %24 = vector.load %arg7[%c24, %c0_19] : memref<64x432xbf16, #tpu.memory_space<vmem>>, vector<8x48xbf16>
    tpu.vector_store %arg7[%c24, %c0_19], %23 {strides = array<i32>} : memref<64x432xbf16, #tpu.memory_space<vmem>>, vector<8x48xbf16>,
    %c4_i32 = arith.constant 4 : i32
    %25 = arith.addi %0, %c4_i32 : i32
    %c0_i32_20 = arith.constant 0 : i32
    %26 = arith.addi %25, %c0_i32_20 : i32
    %c0_21 = arith.constant 0 : index
    %27 = arith.index_cast %26 : i32 to index
    %c0_22 = arith.constant 0 : index
    %c0_23 = arith.constant 0 : index
    %28 = vector.load %arg2[%c0_21, %27, %c0_22, %c0_23] : memref<1x10x10x48xbf16, #tpu.memory_space<vmem>>, vector<1x1x8x48xbf16>
    %29 = vector.shape_cast %28 : vector<1x1x8x48xbf16> to vector<8x48xbf16>
    %c32 = arith.constant 32 : index
    %c0_24 = arith.constant 0 : index
    %30 = vector.load %arg7[%c32, %c0_24] : memref<64x432xbf16, #tpu.memory_space<vmem>>, vector<8x48xbf16>
    tpu.vector_store %arg7[%c32, %c0_24], %29 {strides = array<i32>} : memref<64x432xbf16, #tpu.memory_space<vmem>>, vector<8x48xbf16>,
    %c5_i32 = arith.constant 5 : i32
    %31 = arith.addi %0, %c5_i32 : i32
    %c0_i32_25 = arith.constant 0 : i32
    %32 = arith.addi %31, %c0_i32_25 : i32
    %c0_26 = arith.constant 0 : index
    %33 = arith.index_cast %32 : i32 to index
    %c0_27 = arith.constant 0 : index
    %c0_28 = arith.constant 0 : index
    %34 = vector.load %arg2[%c0_26, %33, %c0_27, %c0_28] : memref<1x10x10x48xbf16, #tpu.memory_space<vmem>>, vector<1x1x8x48xbf16>
    %35 = vector.shape_cast %34 : vector<1x1x8x48xbf16> to vector<8x48xbf16>
    %c40 = arith.constant 40 : index
    %c0_29 = arith.constant 0 : index
    %36 = vector.load %arg7[%c40, %c0_29] : memref<64x432xbf16, #tpu.memory_space<vmem>>, vector<8x48xbf16>
    tpu.vector_store %arg7[%c40, %c0_29], %35 {strides = array<i32>} : memref<64x432xbf16, #tpu.memory_space<vmem>>, vector<8x48xbf16>,
    %c6_i32 = arith.constant 6 : i32
    %37 = arith.addi %0, %c6_i32 : i32
    %c0_i32_30 = arith.constant 0 : i32
    %38 = arith.addi %37, %c0_i32_30 : i32
    %c0_31 = arith.constant 0 : index
    %39 = arith.index_cast %38 : i32 to index
    %c0_32 = arith.constant 0 : index
    %c0_33 = arith.constant 0 : index
    %40 = vector.load %arg2[%c0_31, %39, %c0_32, %c0_33] : memref<1x10x10x48xbf16, #tpu.memory_space<vmem>>, vector<1x1x8x48xbf16>
    %41 = vector.shape_cast %40 : vector<1x1x8x48xbf16> to vector<8x48xbf16>
    %c48 = arith.constant 48 : index
    %c0_34 = arith.constant 0 : index
    %42 = vector.load %arg7[%c48, %c0_34] : memref<64x432xbf16, #tpu.memory_space<vmem>>, vector<8x48xbf16>
    tpu.vector_store %arg7[%c48, %c0_34], %41 {strides = array<i32>} : memref<64x432xbf16, #tpu.memory_space<vmem>>, vector<8x48xbf16>,
    %c7_i32 = arith.constant 7 : i32
    %43 = arith.addi %0, %c7_i32 : i32
    %c0_i32_35 = arith.constant 0 : i32
    %44 = arith.addi %43, %c0_i32_35 : i32
    %c0_36 = arith.constant 0 : index
    %45 = arith.index_cast %44 : i32 to index
    %c0_37 = arith.constant 0 : index
    %c0_38 = arith.constant 0 : index
    %46 = vector.load %arg2[%c0_36, %45, %c0_37, %c0_38] : memref<1x10x10x48xbf16, #tpu.memory_space<vmem>>, vector<1x1x8x48xbf16>
    %47 = vector.shape_cast %46 : vector<1x1x8x48xbf16> to vector<8x48xbf16>
    %c56 = arith.constant 56 : index
    %c0_39 = arith.constant 0 : index
    %48 = vector.load %arg7[%c56, %c0_39] : memref<64x432xbf16, #tpu.memory_space<vmem>>, vector<8x48xbf16>
    tpu.vector_store %arg7[%c56, %c0_39], %47 {strides = array<i32>} : memref<64x432xbf16, #tpu.memory_space<vmem>>, vector<8x48xbf16>,
    %c0_i32_40 = arith.constant 0 : i32
    %49 = arith.addi %0, %c0_i32_40 : i32
    %c0_i32_41 = arith.constant 0 : i32
    %50 = arith.addi %49, %c0_i32_41 : i32
    %c0_42 = arith.constant 0 : index
    %51 = arith.index_cast %50 : i32 to index
    %c1 = arith.constant 1 : index
    %c0_43 = arith.constant 0 : index
    %52 = vector.load %arg2[%c0_42, %51, %c1, %c0_43] : memref<1x10x10x48xbf16, #tpu.memory_space<vmem>>, vector<1x1x8x48xbf16>
    %53 = vector.shape_cast %52 : vector<1x1x8x48xbf16> to vector<8x48xbf16>
    %c0_44 = arith.constant 0 : index
    %c48_45 = arith.constant 48 : index
    %54 = vector.load %arg7[%c0_44, %c48_45] : memref<64x432xbf16, #tpu.memory_space<vmem>>, vector<8x48xbf16>
    tpu.vector_store %arg7[%c0_44, %c48_45], %53 {strides = array<i32>} : memref<64x432xbf16, #tpu.memory_space<vmem>>, vector<8x48xbf16>,
    %c1_i32_46 = arith.constant 1 : i32
    %55 = arith.addi %0, %c1_i32_46 : i32
    %c0_i32_47 = arith.constant 0 : i32
    %56 = arith.addi %55, %c0_i32_47 : i32
    %c0_48 = arith.constant 0 : index
    %57 = arith.index_cast %56 : i32 to index
    %c1_49 = arith.constant 1 : index
    %c0_50 = arith.constant 0 : index
    %58 = vector.load %arg2[%c0_48, %57, %c1_49, %c0_50] : memref<1x10x10x48xbf16, #tpu.memory_space<vmem>>, vector<1x1x8x48xbf16>
    %59 = vector.shape_cast %58 : vector<1x1x8x48xbf16> to vector<8x48xbf16>
    %c8_51 = arith.constant 8 : index
    %c48_52 = arith.constant 48 : index
    %60 = vector.load %arg7[%c8_51, %c48_52] : memref<64x432xbf16, #tpu.memory_space<vmem>>, vector<8x48xbf16>
    tpu.vector_store %arg7[%c8_51, %c48_52], %59 {strides = array<i32>} : memref<64x432xbf16, #tpu.memory_space<vmem>>, vector<8x48xbf16>,
    %c2_i32_53 = arith.constant 2 : i32
    %61 = arith.addi %0, %c2_i32_53 : i32
    %c0_i32_54 = arith.constant 0 : i32
    %62 = arith.addi %61, %c0_i32_54 : i32
    %c0_55 = arith.constant 0 : index
    %63 = arith.index_cast %62 : i32 to index
    %c1_56 = arith.constant 1 : index
    %c0_57 = arith.constant 0 : index
    %64 = vector.load %arg2[%c0_55, %63, %c1_56, %c0_57] : memref<1x10x10x48xbf16, #tpu.memory_space<vmem>>, vector<1x1x8x48xbf16>
    %65 = vector.shape_cast %64 : vector<1x1x8x48xbf16> to vector<8x48xbf16>
    %c16_58 = arith.constant 16 : index
    %c48_59 = arith.constant 48 : index
    %66 = vector.load %arg7[%c16_58, %c48_59] : memref<64x432xbf16, #tpu.memory_space<vmem>>, vector<8x48xbf16>
    tpu.vector_store %arg7[%c16_58, %c48_59], %65 {strides = array<i32>} : memref<64x432xbf16, #tpu.memory_space<vmem>>, vector<8x48xbf16>,
    %c3_i32_60 = arith.constant 3 : i32
    %67 = arith.addi %0, %c3_i32_60 : i32
    %c0_i32_61 = arith.constant 0 : i32
    %68 = arith.addi %67, %c0_i32_61 : i32
    %c0_62 = arith.constant 0 : index
    %69 = arith.index_cast %68 : i32 to index
    %c1_63 = arith.constant 1 : index
    %c0_64 = arith.constant 0 : index
    %70 = vector.load %arg2[%c0_62, %69, %c1_63, %c0_64] : memref<1x10x10x48xbf16, #tpu.memory_space<vmem>>, vector<1x1x8x48xbf16>
    %71 = vector.shape_cast %70 : vector<1x1x8x48xbf16> to vector<8x48xbf16>
    %c24_65 = arith.constant 24 : index
    %c48_66 = arith.constant 48 : index
    %72 = vector.load %arg7[%c24_65, %c48_66] : memref<64x432xbf16, #tpu.memory_space<vmem>>, vector<8x48xbf16>
    tpu.vector_store %arg7[%c24_65, %c48_66], %71 {strides = array<i32>} : memref<64x432xbf16, #tpu.memory_space<vmem>>, vector<8x48xbf16>,
    %c4_i32_67 = arith.constant 4 : i32
    %73 = arith.addi %0, %c4_i32_67 : i32
    %c0_i32_68 = arith.constant 0 : i32
    %74 = arith.addi %73, %c0_i32_68 : i32
    %c0_69 = arith.constant 0 : index
    %75 = arith.index_cast %74 : i32 to index
    %c1_70 = arith.constant 1 : index
    %c0_71 = arith.constant 0 : index
    %76 = vector.load %arg2[%c0_69, %75, %c1_70, %c0_71] : memref<1x10x10x48xbf16, #tpu.memory_space<vmem>>, vector<1x1x8x48xbf16>
    %77 = vector.shape_cast %76 : vector<1x1x8x48xbf16> to vector<8x48xbf16>
    %c32_72 = arith.constant 32 : index
    %c48_73 = arith.constant 48 : index
    %78 = vector.load %arg7[%c32_72, %c48_73] : memref<64x432xbf16, #tpu.memory_space<vmem>>, vector<8x48xbf16>
    tpu.vector_store %arg7[%c32_72, %c48_73], %77 {strides = array<i32>} : memref<64x432xbf16, #tpu.memory_space<vmem>>, vector<8x48xbf16>,
    %c5_i32_74 = arith.constant 5 : i32
    %79 = arith.addi %0, %c5_i32_74 : i32
    %c0_i32_75 = arith.constant 0 : i32
    %80 = arith.addi %79, %c0_i32_75 : i32
    %c0_76 = arith.constant 0 : index
    %81 = arith.index_cast %80 : i32 to index
    %c1_77 = arith.constant 1 : index
    %c0_78 = arith.constant 0 : index
    %82 = vector.load %arg2[%c0_76, %81, %c1_77, %c0_78] : memref<1x10x10x48xbf16, #tpu.memory_space<vmem>>, vector<1x1x8x48xbf16>
    %83 = vector.shape_cast %82 : vector<1x1x8x48xbf16> to vector<8x48xbf16>
    %c40_79 = arith.constant 40 : index
    %c48_80 = arith.constant 48 : index
    %84 = vector.load %arg7[%c40_79, %c48_80] : memref<64x432xbf16, #tpu.memory_space<vmem>>, vector<8x48xbf16>
    tpu.vector_store %arg7[%c40_79, %c48_80], %83 {strides = array<i32>} : memref<64x432xbf16, #tpu.memory_space<vmem>>, vector<8x48xbf16>,
    %c6_i32_81 = arith.constant 6 : i32
    %85 = arith.addi %0, %c6_i32_81 : i32
    %c0_i32_82 = arith.constant 0 : i32
    %86 = arith.addi %85, %c0_i32_82 : i32
    %c0_83 = arith.constant 0 : index
    %87 = arith.index_cast %86 : i32 to index
    %c1_84 = arith.constant 1 : index
    %c0_85 = arith.constant 0 : index
    %88 = vector.load %arg2[%c0_83, %87, %c1_84, %c0_85] : memref<1x10x10x48xbf16, #tpu.memory_space<vmem>>, vector<1x1x8x48xbf16>
    %89 = vector.shape_cast %88 : vector<1x1x8x48xbf16> to vector<8x48xbf16>
    %c48_86 = arith.constant 48 : index
    %c48_87 = arith.constant 48 : index
    %90 = vector.load %arg7[%c48_86, %c48_87] : memref<64x432xbf16, #tpu.memory_space<vmem>>, vector<8x48xbf16>
    tpu.vector_store %arg7[%c48_86, %c48_87], %89 {strides = array<i32>} : memref<64x432xbf16, #tpu.memory_space<vmem>>, vector<8x48xbf16>,
    %c7_i32_88 = arith.constant 7 : i32
    %91 = arith.addi %0, %c7_i32_88 : i32
    %c0_i32_89 = arith.constant 0 : i32
    %92 = arith.addi %91, %c0_i32_89 : i32
    %c0_90 = arith.constant 0 : index
    %93 = arith.index_cast %92 : i32 to index
    %c1_91 = arith.constant 1 : index
    %c0_92 = arith.constant 0 : index
    %94 = vector.load %arg2[%c0_90, %93, %c1_91, %c0_92] : memref<1x10x10x48xbf16, #tpu.memory_space<vmem>>, vector<1x1x8x48xbf16>
    %95 = vector.shape_cast %94 : vector<1x1x8x48xbf16> to vector<8x48xbf16>
    %c56_93 = arith.constant 56 : index
    %c48_94 = arith.constant 48 : index
    %96 = vector.load %arg7[%c56_93, %c48_94] : memref<64x432xbf16, #tpu.memory_space<vmem>>, vector<8x48xbf16>
    tpu.vector_store %arg7[%c56_93, %c48_94], %95 {strides = array<i32>} : memref<64x432xbf16, #tpu.memory_space<vmem>>, vector<8x48xbf16>,
    %c0_i32_95 = arith.constant 0 : i32
    %97 = arith.addi %0, %c0_i32_95 : i32
    %c0_i32_96 = arith.constant 0 : i32
    %98 = arith.addi %97, %c0_i32_96 : i32
    %c0_97 = arith.constant 0 : index
    %99 = arith.index_cast %98 : i32 to index
    %c2 = arith.constant 2 : index
    %c0_98 = arith.constant 0 : index
    %100 = vector.load %arg2[%c0_97, %99, %c2, %c0_98] : memref<1x10x10x48xbf16, #tpu.memory_space<vmem>>, vector<1x1x8x48xbf16>
    %101 = vector.shape_cast %100 : vector<1x1x8x48xbf16> to vector<8x48xbf16>
    %c0_99 = arith.constant 0 : index
    %c96 = arith.constant 96 : index
    %102 = vector.load %arg7[%c0_99, %c96] : memref<64x432xbf16, #tpu.memory_space<vmem>>, vector<8x48xbf16>
    tpu.vector_store %arg7[%c0_99, %c96], %101 {strides = array<i32>} : memref<64x432xbf16, #tpu.memory_space<vmem>>, vector<8x48xbf16>,
    %c1_i32_100 = arith.constant 1 : i32
    %103 = arith.addi %0, %c1_i32_100 : i32
    %c0_i32_101 = arith.constant 0 : i32
    %104 = arith.addi %103, %c0_i32_101 : i32
    %c0_102 = arith.constant 0 : index
    %105 = arith.index_cast %104 : i32 to index
    %c2_103 = arith.constant 2 : index
    %c0_104 = arith.constant 0 : index
    %106 = vector.load %arg2[%c0_102, %105, %c2_103, %c0_104] : memref<1x10x10x48xbf16, #tpu.memory_space<vmem>>, vector<1x1x8x48xbf16>
    %107 = vector.shape_cast %106 : vector<1x1x8x48xbf16> to vector<8x48xbf16>
    %c8_105 = arith.constant 8 : index
    %c96_106 = arith.constant 96 : index
    %108 = vector.load %arg7[%c8_105, %c96_106] : memref<64x432xbf16, #tpu.memory_space<vmem>>, vector<8x48xbf16>
    tpu.vector_store %arg7[%c8_105, %c96_106], %107 {strides = array<i32>} : memref<64x432xbf16, #tpu.memory_space<vmem>>, vector<8x48xbf16>,
    %c2_i32_107 = arith.constant 2 : i32
    %109 = arith.addi %0, %c2_i32_107 : i32
    %c0_i32_108 = arith.constant 0 : i32
    %110 = arith.addi %109, %c0_i32_108 : i32
    %c0_109 = arith.constant 0 : index
    %111 = arith.index_cast %110 : i32 to index
    %c2_110 = arith.constant 2 : index
    %c0_111 = arith.constant 0 : index
    %112 = vector.load %arg2[%c0_109, %111, %c2_110, %c0_111] : memref<1x10x10x48xbf16, #tpu.memory_space<vmem>>, vector<1x1x8x48xbf16>
    %113 = vector.shape_cast %112 : vector<1x1x8x48xbf16> to vector<8x48xbf16>
    %c16_112 = arith.constant 16 : index
    %c96_113 = arith.constant 96 : index
    %114 = vector.load %arg7[%c16_112, %c96_113] : memref<64x432xbf16, #tpu.memory_space<vmem>>, vector<8x48xbf16>
    tpu.vector_store %arg7[%c16_112, %c96_113], %113 {strides = array<i32>} : memref<64x432xbf16, #tpu.memory_space<vmem>>, vector<8x48xbf16>,
    %c3_i32_114 = arith.constant 3 : i32
    %115 = arith.addi %0, %c3_i32_114 : i32
    %c0_i32_115 = arith.constant 0 : i32
    %116 = arith.addi %115, %c0_i32_115 : i32
    %c0_116 = arith.constant 0 : index
    %117 = arith.index_cast %116 : i32 to index
    %c2_117 = arith.constant 2 : index
    %c0_118 = arith.constant 0 : index
    %118 = vector.load %arg2[%c0_116, %117, %c2_117, %c0_118] : memref<1x10x10x48xbf16, #tpu.memory_space<vmem>>, vector<1x1x8x48xbf16>
    %119 = vector.shape_cast %118 : vector<1x1x8x48xbf16> to vector<8x48xbf16>
    %c24_119 = arith.constant 24 : index
    %c96_120 = arith.constant 96 : index
    %120 = vector.load %arg7[%c24_119, %c96_120] : memref<64x432xbf16, #tpu.memory_space<vmem>>, vector<8x48xbf16>
    tpu.vector_store %arg7[%c24_119, %c96_120], %119 {strides = array<i32>} : memref<64x432xbf16, #tpu.memory_space<vmem>>, vector<8x48xbf16>,
    %c4_i32_121 = arith.constant 4 : i32
    %121 = arith.addi %0, %c4_i32_121 : i32
    %c0_i32_122 = arith.constant 0 : i32
    %122 = arith.addi %121, %c0_i32_122 : i32
    %c0_123 = arith.constant 0 : index
    %123 = arith.index_cast %122 : i32 to index
    %c2_124 = arith.constant 2 : index
    %c0_125 = arith.constant 0 : index
    %124 = vector.load %arg2[%c0_123, %123, %c2_124, %c0_125] : memref<1x10x10x48xbf16, #tpu.memory_space<vmem>>, vector<1x1x8x48xbf16>
    %125 = vector.shape_cast %124 : vector<1x1x8x48xbf16> to vector<8x48xbf16>
    %c32_126 = arith.constant 32 : index
    %c96_127 = arith.constant 96 : index
    %126 = vector.load %arg7[%c32_126, %c96_127] : memref<64x432xbf16, #tpu.memory_space<vmem>>, vector<8x48xbf16>
    tpu.vector_store %arg7[%c32_126, %c96_127], %125 {strides = array<i32>} : memref<64x432xbf16, #tpu.memory_space<vmem>>, vector<8x48xbf16>,
    %c5_i32_128 = arith.constant 5 : i32
    %127 = arith.addi %0, %c5_i32_128 : i32
    %c0_i32_129 = arith.constant 0 : i32
    %128 = arith.addi %127, %c0_i32_129 : i32
    %c0_130 = arith.constant 0 : index
    %129 = arith.index_cast %128 : i32 to index
    %c2_131 = arith.constant 2 : index
    %c0_132 = arith.constant 0 : index
    %130 = vector.load %arg2[%c0_130, %129, %c2_131, %c0_132] : memref<1x10x10x48xbf16, #tpu.memory_space<vmem>>, vector<1x1x8x48xbf16>
    %131 = vector.shape_cast %130 : vector<1x1x8x48xbf16> to vector<8x48xbf16>
    %c40_133 = arith.constant 40 : index
    %c96_134 = arith.constant 96 : index
    %132 = vector.load %arg7[%c40_133, %c96_134] : memref<64x432xbf16, #tpu.memory_space<vmem>>, vector<8x48xbf16>
    tpu.vector_store %arg7[%c40_133, %c96_134], %131 {strides = array<i32>} : memref<64x432xbf16, #tpu.memory_space<vmem>>, vector<8x48xbf16>,
    %c6_i32_135 = arith.constant 6 : i32
    %133 = arith.addi %0, %c6_i32_135 : i32
    %c0_i32_136 = arith.constant 0 : i32
    %134 = arith.addi %133, %c0_i32_136 : i32
    %c0_137 = arith.constant 0 : index
    %135 = arith.index_cast %134 : i32 to index
    %c2_138 = arith.constant 2 : index
    %c0_139 = arith.constant 0 : index
    %136 = vector.load %arg2[%c0_137, %135, %c2_138, %c0_139] : memref<1x10x10x48xbf16, #tpu.memory_space<vmem>>, vector<1x1x8x48xbf16>
    %137 = vector.shape_cast %136 : vector<1x1x8x48xbf16> to vector<8x48xbf16>
    %c48_140 = arith.constant 48 : index
    %c96_141 = arith.constant 96 : index
    %138 = vector.load %arg7[%c48_140, %c96_141] : memref<64x432xbf16, #tpu.memory_space<vmem>>, vector<8x48xbf16>
    tpu.vector_store %arg7[%c48_140, %c96_141], %137 {strides = array<i32>} : memref<64x432xbf16, #tpu.memory_space<vmem>>, vector<8x48xbf16>,
    %c7_i32_142 = arith.constant 7 : i32
    %139 = arith.addi %0, %c7_i32_142 : i32
    %c0_i32_143 = arith.constant 0 : i32
    %140 = arith.addi %139, %c0_i32_143 : i32
    %c0_144 = arith.constant 0 : index
    %141 = arith.index_cast %140 : i32 to index
    %c2_145 = arith.constant 2 : index
    %c0_146 = arith.constant 0 : index
    %142 = vector.load %arg2[%c0_144, %141, %c2_145, %c0_146] : memref<1x10x10x48xbf16, #tpu.memory_space<vmem>>, vector<1x1x8x48xbf16>
    %143 = vector.shape_cast %142 : vector<1x1x8x48xbf16> to vector<8x48xbf16>
    %c56_147 = arith.constant 56 : index
    %c96_148 = arith.constant 96 : index
    %144 = vector.load %arg7[%c56_147, %c96_148] : memref<64x432xbf16, #tpu.memory_space<vmem>>, vector<8x48xbf16>
    tpu.vector_store %arg7[%c56_147, %c96_148], %143 {strides = array<i32>} : memref<64x432xbf16, #tpu.memory_space<vmem>>, vector<8x48xbf16>,
    %c0_i32_149 = arith.constant 0 : i32
    %145 = arith.addi %0, %c0_i32_149 : i32
    %c1_i32_150 = arith.constant 1 : i32
    %146 = arith.addi %145, %c1_i32_150 : i32
    %c0_151 = arith.constant 0 : index
    %147 = arith.index_cast %146 : i32 to index
    %c0_152 = arith.constant 0 : index
    %c0_153 = arith.constant 0 : index
    %148 = vector.load %arg2[%c0_151, %147, %c0_152, %c0_153] : memref<1x10x10x48xbf16, #tpu.memory_space<vmem>>, vector<1x1x8x48xbf16>
    %149 = vector.shape_cast %148 : vector<1x1x8x48xbf16> to vector<8x48xbf16>
    %c0_154 = arith.constant 0 : index
    %c144 = arith.constant 144 : index
    %150 = vector.load %arg7[%c0_154, %c144] : memref<64x432xbf16, #tpu.memory_space<vmem>>, vector<8x48xbf16>
    tpu.vector_store %arg7[%c0_154, %c144], %149 {strides = array<i32>} : memref<64x432xbf16, #tpu.memory_space<vmem>>, vector<8x48xbf16>,
    %c1_i32_155 = arith.constant 1 : i32
    %151 = arith.addi %0, %c1_i32_155 : i32
    %c1_i32_156 = arith.constant 1 : i32
    %152 = arith.addi %151, %c1_i32_156 : i32
    %c0_157 = arith.constant 0 : index
    %153 = arith.index_cast %152 : i32 to index
    %c0_158 = arith.constant 0 : index
    %c0_159 = arith.constant 0 : index
    %154 = vector.load %arg2[%c0_157, %153, %c0_158, %c0_159] : memref<1x10x10x48xbf16, #tpu.memory_space<vmem>>, vector<1x1x8x48xbf16>
    %155 = vector.shape_cast %154 : vector<1x1x8x48xbf16> to vector<8x48xbf16>
    %c8_160 = arith.constant 8 : index
    %c144_161 = arith.constant 144 : index
    %156 = vector.load %arg7[%c8_160, %c144_161] : memref<64x432xbf16, #tpu.memory_space<vmem>>, vector<8x48xbf16>
    tpu.vector_store %arg7[%c8_160, %c144_161], %155 {strides = array<i32>} : memref<64x432xbf16, #tpu.memory_space<vmem>>, vector<8x48xbf16>,
    %c2_i32_162 = arith.constant 2 : i32
    %157 = arith.addi %0, %c2_i32_162 : i32
    %c1_i32_163 = arith.constant 1 : i32
    %158 = arith.addi %157, %c1_i32_163 : i32
    %c0_164 = arith.constant 0 : index
    %159 = arith.index_cast %158 : i32 to index
    %c0_165 = arith.constant 0 : index
    %c0_166 = arith.constant 0 : index
    %160 = vector.load %arg2[%c0_164, %159, %c0_165, %c0_166] : memref<1x10x10x48xbf16, #tpu.memory_space<vmem>>, vector<1x1x8x48xbf16>
    %161 = vector.shape_cast %160 : vector<1x1x8x48xbf16> to vector<8x48xbf16>
    %c16_167 = arith.constant 16 : index
    %c144_168 = arith.constant 144 : index
    %162 = vector.load %arg7[%c16_167, %c144_168] : memref<64x432xbf16, #tpu.memory_space<vmem>>, vector<8x48xbf16>
    tpu.vector_store %arg7[%c16_167, %c144_168], %161 {strides = array<i32>} : memref<64x432xbf16, #tpu.memory_space<vmem>>, vector<8x48xbf16>,
    %c3_i32_169 = arith.constant 3 : i32
    %163 = arith.addi %0, %c3_i32_169 : i32
    %c1_i32_170 = arith.constant 1 : i32
    %164 = arith.addi %163, %c1_i32_170 : i32
    %c0_171 = arith.constant 0 : index
    %165 = arith.index_cast %164 : i32 to index
    %c0_172 = arith.constant 0 : index
    %c0_173 = arith.constant 0 : index
    %166 = vector.load %arg2[%c0_171, %165, %c0_172, %c0_173] : memref<1x10x10x48xbf16, #tpu.memory_space<vmem>>, vector<1x1x8x48xbf16>
    %167 = vector.shape_cast %166 : vector<1x1x8x48xbf16> to vector<8x48xbf16>
    %c24_174 = arith.constant 24 : index
    %c144_175 = arith.constant 144 : index
    %168 = vector.load %arg7[%c24_174, %c144_175] : memref<64x432xbf16, #tpu.memory_space<vmem>>, vector<8x48xbf16>
    tpu.vector_store %arg7[%c24_174, %c144_175], %167 {strides = array<i32>} : memref<64x432xbf16, #tpu.memory_space<vmem>>, vector<8x48xbf16>,
    %c4_i32_176 = arith.constant 4 : i32
    %169 = arith.addi %0, %c4_i32_176 : i32
    %c1_i32_177 = arith.constant 1 : i32
    %170 = arith.addi %169, %c1_i32_177 : i32
    %c0_178 = arith.constant 0 : index
    %171 = arith.index_cast %170 : i32 to index
    %c0_179 = arith.constant 0 : index
    %c0_180 = arith.constant 0 : index
    %172 = vector.load %arg2[%c0_178, %171, %c0_179, %c0_180] : memref<1x10x10x48xbf16, #tpu.memory_space<vmem>>, vector<1x1x8x48xbf16>
    %173 = vector.shape_cast %172 : vector<1x1x8x48xbf16> to vector<8x48xbf16>
    %c32_181 = arith.constant 32 : index
    %c144_182 = arith.constant 144 : index
    %174 = vector.load %arg7[%c32_181, %c144_182] : memref<64x432xbf16, #tpu.memory_space<vmem>>, vector<8x48xbf16>
    tpu.vector_store %arg7[%c32_181, %c144_182], %173 {strides = array<i32>} : memref<64x432xbf16, #tpu.memory_space<vmem>>, vector<8x48xbf16>,
    %c5_i32_183 = arith.constant 5 : i32
    %175 = arith.addi %0, %c5_i32_183 : i32
    %c1_i32_184 = arith.constant 1 : i32
    %176 = arith.addi %175, %c1_i32_184 : i32
    %c0_185 = arith.constant 0 : index
    %177 = arith.index_cast %176 : i32 to index
    %c0_186 = arith.constant 0 : index
    %c0_187 = arith.constant 0 : index
    %178 = vector.load %arg2[%c0_185, %177, %c0_186, %c0_187] : memref<1x10x10x48xbf16, #tpu.memory_space<vmem>>, vector<1x1x8x48xbf16>
    %179 = vector.shape_cast %178 : vector<1x1x8x48xbf16> to vector<8x48xbf16>
    %c40_188 = arith.constant 40 : index
    %c144_189 = arith.constant 144 : index
    %180 = vector.load %arg7[%c40_188, %c144_189] : memref<64x432xbf16, #tpu.memory_space<vmem>>, vector<8x48xbf16>
    tpu.vector_store %arg7[%c40_188, %c144_189], %179 {strides = array<i32>} : memref<64x432xbf16, #tpu.memory_space<vmem>>, vector<8x48xbf16>,
    %c6_i32_190 = arith.constant 6 : i32
    %181 = arith.addi %0, %c6_i32_190 : i32
    %c1_i32_191 = arith.constant 1 : i32
    %182 = arith.addi %181, %c1_i32_191 : i32
    %c0_192 = arith.constant 0 : index
    %183 = arith.index_cast %182 : i32 to index
    %c0_193 = arith.constant 0 : index
    %c0_194 = arith.constant 0 : index
    %184 = vector.load %arg2[%c0_192, %183, %c0_193, %c0_194] : memref<1x10x10x48xbf16, #tpu.memory_space<vmem>>, vector<1x1x8x48xbf16>
    %185 = vector.shape_cast %184 : vector<1x1x8x48xbf16> to vector<8x48xbf16>
    %c48_195 = arith.constant 48 : index
    %c144_196 = arith.constant 144 : index
    %186 = vector.load %arg7[%c48_195, %c144_196] : memref<64x432xbf16, #tpu.memory_space<vmem>>, vector<8x48xbf16>
    tpu.vector_store %arg7[%c48_195, %c144_196], %185 {strides = array<i32>} : memref<64x432xbf16, #tpu.memory_space<vmem>>, vector<8x48xbf16>,
    %c7_i32_197 = arith.constant 7 : i32
    %187 = arith.addi %0, %c7_i32_197 : i32
    %c1_i32_198 = arith.constant 1 : i32
    %188 = arith.addi %187, %c1_i32_198 : i32
    %c0_199 = arith.constant 0 : index
    %189 = arith.index_cast %188 : i32 to index
    %c0_200 = arith.constant 0 : index
    %c0_201 = arith.constant 0 : index
    %190 = vector.load %arg2[%c0_199, %189, %c0_200, %c0_201] : memref<1x10x10x48xbf16, #tpu.memory_space<vmem>>, vector<1x1x8x48xbf16>
    %191 = vector.shape_cast %190 : vector<1x1x8x48xbf16> to vector<8x48xbf16>
    %c56_202 = arith.constant 56 : index
    %c144_203 = arith.constant 144 : index
    %192 = vector.load %arg7[%c56_202, %c144_203] : memref<64x432xbf16, #tpu.memory_space<vmem>>, vector<8x48xbf16>
    tpu.vector_store %arg7[%c56_202, %c144_203], %191 {strides = array<i32>} : memref<64x432xbf16, #tpu.memory_space<vmem>>, vector<8x48xbf16>,
    %c0_i32_204 = arith.constant 0 : i32
    %193 = arith.addi %0, %c0_i32_204 : i32
    %c1_i32_205 = arith.constant 1 : i32
    %194 = arith.addi %193, %c1_i32_205 : i32
    %c0_206 = arith.constant 0 : index
    %195 = arith.index_cast %194 : i32 to index
    %c1_207 = arith.constant 1 : index
    %c0_208 = arith.constant 0 : index
    %196 = vector.load %arg2[%c0_206, %195, %c1_207, %c0_208] : memref<1x10x10x48xbf16, #tpu.memory_space<vmem>>, vector<1x1x8x48xbf16>
    %197 = vector.shape_cast %196 : vector<1x1x8x48xbf16> to vector<8x48xbf16>
    %c0_209 = arith.constant 0 : index
    %c192 = arith.constant 192 : index
    %198 = vector.load %arg7[%c0_209, %c192] : memref<64x432xbf16, #tpu.memory_space<vmem>>, vector<8x48xbf16>
    tpu.vector_store %arg7[%c0_209, %c192], %197 {strides = array<i32>} : memref<64x432xbf16, #tpu.memory_space<vmem>>, vector<8x48xbf16>,
    %c1_i32_210 = arith.constant 1 : i32
    %199 = arith.addi %0, %c1_i32_210 : i32
    %c1_i32_211 = arith.constant 1 : i32
    %200 = arith.addi %199, %c1_i32_211 : i32
    %c0_212 = arith.constant 0 : index
    %201 = arith.index_cast %200 : i32 to index
    %c1_213 = arith.constant 1 : index
    %c0_214 = arith.constant 0 : index
    %202 = vector.load %arg2[%c0_212, %201, %c1_213, %c0_214] : memref<1x10x10x48xbf16, #tpu.memory_space<vmem>>, vector<1x1x8x48xbf16>
    %203 = vector.shape_cast %202 : vector<1x1x8x48xbf16> to vector<8x48xbf16>
    %c8_215 = arith.constant 8 : index
    %c192_216 = arith.constant 192 : index
    %204 = vector.load %arg7[%c8_215, %c192_216] : memref<64x432xbf16, #tpu.memory_space<vmem>>, vector<8x48xbf16>
    tpu.vector_store %arg7[%c8_215, %c192_216], %203 {strides = array<i32>} : memref<64x432xbf16, #tpu.memory_space<vmem>>, vector<8x48xbf16>,
    %c2_i32_217 = arith.constant 2 : i32
    %205 = arith.addi %0, %c2_i32_217 : i32
    %c1_i32_218 = arith.constant 1 : i32
    %206 = arith.addi %205, %c1_i32_218 : i32
    %c0_219 = arith.constant 0 : index
    %207 = arith.index_cast %206 : i32 to index
    %c1_220 = arith.constant 1 : index
    %c0_221 = arith.constant 0 : index
    %208 = vector.load %arg2[%c0_219, %207, %c1_220, %c0_221] : memref<1x10x10x48xbf16, #tpu.memory_space<vmem>>, vector<1x1x8x48xbf16>
    %209 = vector.shape_cast %208 : vector<1x1x8x48xbf16> to vector<8x48xbf16>
    %c16_222 = arith.constant 16 : index
    %c192_223 = arith.constant 192 : index
    %210 = vector.load %arg7[%c16_222, %c192_223] : memref<64x432xbf16, #tpu.memory_space<vmem>>, vector<8x48xbf16>
    tpu.vector_store %arg7[%c16_222, %c192_223], %209 {strides = array<i32>} : memref<64x432xbf16, #tpu.memory_space<vmem>>, vector<8x48xbf16>,
    %c3_i32_224 = arith.constant 3 : i32
    %211 = arith.addi %0, %c3_i32_224 : i32
    %c1_i32_225 = arith.constant 1 : i32
    %212 = arith.addi %211, %c1_i32_225 : i32
    %c0_226 = arith.constant 0 : index
    %213 = arith.index_cast %212 : i32 to index
    %c1_227 = arith.constant 1 : index
    %c0_228 = arith.constant 0 : index
    %214 = vector.load %arg2[%c0_226, %213, %c1_227, %c0_228] : memref<1x10x10x48xbf16, #tpu.memory_space<vmem>>, vector<1x1x8x48xbf16>
    %215 = vector.shape_cast %214 : vector<1x1x8x48xbf16> to vector<8x48xbf16>
    %c24_229 = arith.constant 24 : index
    %c192_230 = arith.constant 192 : index
    %216 = vector.load %arg7[%c24_229, %c192_230] : memref<64x432xbf16, #tpu.memory_space<vmem>>, vector<8x48xbf16>
    tpu.vector_store %arg7[%c24_229, %c192_230], %215 {strides = array<i32>} : memref<64x432xbf16, #tpu.memory_space<vmem>>, vector<8x48xbf16>,
    %c4_i32_231 = arith.constant 4 : i32
    %217 = arith.addi %0, %c4_i32_231 : i32
    %c1_i32_232 = arith.constant 1 : i32
    %218 = arith.addi %217, %c1_i32_232 : i32
    %c0_233 = arith.constant 0 : index
    %219 = arith.index_cast %218 : i32 to index
    %c1_234 = arith.constant 1 : index
    %c0_235 = arith.constant 0 : index
    %220 = vector.load %arg2[%c0_233, %219, %c1_234, %c0_235] : memref<1x10x10x48xbf16, #tpu.memory_space<vmem>>, vector<1x1x8x48xbf16>
    %221 = vector.shape_cast %220 : vector<1x1x8x48xbf16> to vector<8x48xbf16>
    %c32_236 = arith.constant 32 : index
    %c192_237 = arith.constant 192 : index
    %222 = vector.load %arg7[%c32_236, %c192_237] : memref<64x432xbf16, #tpu.memory_space<vmem>>, vector<8x48xbf16>
    tpu.vector_store %arg7[%c32_236, %c192_237], %221 {strides = array<i32>} : memref<64x432xbf16, #tpu.memory_space<vmem>>, vector<8x48xbf16>,
    %c5_i32_238 = arith.constant 5 : i32
    %223 = arith.addi %0, %c5_i32_238 : i32
    %c1_i32_239 = arith.constant 1 : i32
    %224 = arith.addi %223, %c1_i32_239 : i32
    %c0_240 = arith.constant 0 : index
    %225 = arith.index_cast %224 : i32 to index
    %c1_241 = arith.constant 1 : index
    %c0_242 = arith.constant 0 : index
    %226 = vector.load %arg2[%c0_240, %225, %c1_241, %c0_242] : memref<1x10x10x48xbf16, #tpu.memory_space<vmem>>, vector<1x1x8x48xbf16>
    %227 = vector.shape_cast %226 : vector<1x1x8x48xbf16> to vector<8x48xbf16>
    %c40_243 = arith.constant 40 : index
    %c192_244 = arith.constant 192 : index
    %228 = vector.load %arg7[%c40_243, %c192_244] : memref<64x432xbf16, #tpu.memory_space<vmem>>, vector<8x48xbf16>
    tpu.vector_store %arg7[%c40_243, %c192_244], %227 {strides = array<i32>} : memref<64x432xbf16, #tpu.memory_space<vmem>>, vector<8x48xbf16>,
    %c6_i32_245 = arith.constant 6 : i32
    %229 = arith.addi %0, %c6_i32_245 : i32
    %c1_i32_246 = arith.constant 1 : i32
    %230 = arith.addi %229, %c1_i32_246 : i32
    %c0_247 = arith.constant 0 : index
    %231 = arith.index_cast %230 : i32 to index
    %c1_248 = arith.constant 1 : index
    %c0_249 = arith.constant 0 : index
    %232 = vector.load %arg2[%c0_247, %231, %c1_248, %c0_249] : memref<1x10x10x48xbf16, #tpu.memory_space<vmem>>, vector<1x1x8x48xbf16>
    %233 = vector.shape_cast %232 : vector<1x1x8x48xbf16> to vector<8x48xbf16>
    %c48_250 = arith.constant 48 : index
    %c192_251 = arith.constant 192 : index
    %234 = vector.load %arg7[%c48_250, %c192_251] : memref<64x432xbf16, #tpu.memory_space<vmem>>, vector<8x48xbf16>
    tpu.vector_store %arg7[%c48_250, %c192_251], %233 {strides = array<i32>} : memref<64x432xbf16, #tpu.memory_space<vmem>>, vector<8x48xbf16>,
    %c7_i32_252 = arith.constant 7 : i32
    %235 = arith.addi %0, %c7_i32_252 : i32
    %c1_i32_253 = arith.constant 1 : i32
    %236 = arith.addi %235, %c1_i32_253 : i32
    %c0_254 = arith.constant 0 : index
    %237 = arith.index_cast %236 : i32 to index
    %c1_255 = arith.constant 1 : index
    %c0_256 = arith.constant 0 : index
    %238 = vector.load %arg2[%c0_254, %237, %c1_255, %c0_256] : memref<1x10x10x48xbf16, #tpu.memory_space<vmem>>, vector<1x1x8x48xbf16>
    %239 = vector.shape_cast %238 : vector<1x1x8x48xbf16> to vector<8x48xbf16>
    %c56_257 = arith.constant 56 : index
    %c192_258 = arith.constant 192 : index
    %240 = vector.load %arg7[%c56_257, %c192_258] : memref<64x432xbf16, #tpu.memory_space<vmem>>, vector<8x48xbf16>
    tpu.vector_store %arg7[%c56_257, %c192_258], %239 {strides = array<i32>} : memref<64x432xbf16, #tpu.memory_space<vmem>>, vector<8x48xbf16>,
    %c0_i32_259 = arith.constant 0 : i32
    %241 = arith.addi %0, %c0_i32_259 : i32
    %c1_i32_260 = arith.constant 1 : i32
    %242 = arith.addi %241, %c1_i32_260 : i32
    %c0_261 = arith.constant 0 : index
    %243 = arith.index_cast %242 : i32 to index
    %c2_262 = arith.constant 2 : index
    %c0_263 = arith.constant 0 : index
    %244 = vector.load %arg2[%c0_261, %243, %c2_262, %c0_263] : memref<1x10x10x48xbf16, #tpu.memory_space<vmem>>, vector<1x1x8x48xbf16>
    %245 = vector.shape_cast %244 : vector<1x1x8x48xbf16> to vector<8x48xbf16>
    %c0_264 = arith.constant 0 : index
    %c240 = arith.constant 240 : index
    %246 = vector.load %arg7[%c0_264, %c240] : memref<64x432xbf16, #tpu.memory_space<vmem>>, vector<8x48xbf16>
    tpu.vector_store %arg7[%c0_264, %c240], %245 {strides = array<i32>} : memref<64x432xbf16, #tpu.memory_space<vmem>>, vector<8x48xbf16>,
    %c1_i32_265 = arith.constant 1 : i32
    %247 = arith.addi %0, %c1_i32_265 : i32
    %c1_i32_266 = arith.constant 1 : i32
    %248 = arith.addi %247, %c1_i32_266 : i32
    %c0_267 = arith.constant 0 : index
    %249 = arith.index_cast %248 : i32 to index
    %c2_268 = arith.constant 2 : index
    %c0_269 = arith.constant 0 : index
    %250 = vector.load %arg2[%c0_267, %249, %c2_268, %c0_269] : memref<1x10x10x48xbf16, #tpu.memory_space<vmem>>, vector<1x1x8x48xbf16>
    %251 = vector.shape_cast %250 : vector<1x1x8x48xbf16> to vector<8x48xbf16>
    %c8_270 = arith.constant 8 : index
    %c240_271 = arith.constant 240 : index
    %252 = vector.load %arg7[%c8_270, %c240_271] : memref<64x432xbf16, #tpu.memory_space<vmem>>, vector<8x48xbf16>
    tpu.vector_store %arg7[%c8_270, %c240_271], %251 {strides = array<i32>} : memref<64x432xbf16, #tpu.memory_space<vmem>>, vector<8x48xbf16>,
    %c2_i32_272 = arith.constant 2 : i32
    %253 = arith.addi %0, %c2_i32_272 : i32
    %c1_i32_273 = arith.constant 1 : i32
    %254 = arith.addi %253, %c1_i32_273 : i32
    %c0_274 = arith.constant 0 : index
    %255 = arith.index_cast %254 : i32 to index
    %c2_275 = arith.constant 2 : index
    %c0_276 = arith.constant 0 : index
    %256 = vector.load %arg2[%c0_274, %255, %c2_275, %c0_276] : memref<1x10x10x48xbf16, #tpu.memory_space<vmem>>, vector<1x1x8x48xbf16>
    %257 = vector.shape_cast %256 : vector<1x1x8x48xbf16> to vector<8x48xbf16>
    %c16_277 = arith.constant 16 : index
    %c240_278 = arith.constant 240 : index
    %258 = vector.load %arg7[%c16_277, %c240_278] : memref<64x432xbf16, #tpu.memory_space<vmem>>, vector<8x48xbf16>
    tpu.vector_store %arg7[%c16_277, %c240_278], %257 {strides = array<i32>} : memref<64x432xbf16, #tpu.memory_space<vmem>>, vector<8x48xbf16>,
    %c3_i32_279 = arith.constant 3 : i32
    %259 = arith.addi %0, %c3_i32_279 : i32
    %c1_i32_280 = arith.constant 1 : i32
    %260 = arith.addi %259, %c1_i32_280 : i32
    %c0_281 = arith.constant 0 : index
    %261 = arith.index_cast %260 : i32 to index
    %c2_282 = arith.constant 2 : index
    %c0_283 = arith.constant 0 : index
    %262 = vector.load %arg2[%c0_281, %261, %c2_282, %c0_283] : memref<1x10x10x48xbf16, #tpu.memory_space<vmem>>, vector<1x1x8x48xbf16>
    %263 = vector.shape_cast %262 : vector<1x1x8x48xbf16> to vector<8x48xbf16>
    %c24_284 = arith.constant 24 : index
    %c240_285 = arith.constant 240 : index
    %264 = vector.load %arg7[%c24_284, %c240_285] : memref<64x432xbf16, #tpu.memory_space<vmem>>, vector<8x48xbf16>
    tpu.vector_store %arg7[%c24_284, %c240_285], %263 {strides = array<i32>} : memref<64x432xbf16, #tpu.memory_space<vmem>>, vector<8x48xbf16>,
    %c4_i32_286 = arith.constant 4 : i32
    %265 = arith.addi %0, %c4_i32_286 : i32
    %c1_i32_287 = arith.constant 1 : i32
    %266 = arith.addi %265, %c1_i32_287 : i32
    %c0_288 = arith.constant 0 : index
    %267 = arith.index_cast %266 : i32 to index
    %c2_289 = arith.constant 2 : index
    %c0_290 = arith.constant 0 : index
    %268 = vector.load %arg2[%c0_288, %267, %c2_289, %c0_290] : memref<1x10x10x48xbf16, #tpu.memory_space<vmem>>, vector<1x1x8x48xbf16>
    %269 = vector.shape_cast %268 : vector<1x1x8x48xbf16> to vector<8x48xbf16>
    %c32_291 = arith.constant 32 : index
    %c240_292 = arith.constant 240 : index
    %270 = vector.load %arg7[%c32_291, %c240_292] : memref<64x432xbf16, #tpu.memory_space<vmem>>, vector<8x48xbf16>
    tpu.vector_store %arg7[%c32_291, %c240_292], %269 {strides = array<i32>} : memref<64x432xbf16, #tpu.memory_space<vmem>>, vector<8x48xbf16>,
    %c5_i32_293 = arith.constant 5 : i32
    %271 = arith.addi %0, %c5_i32_293 : i32
    %c1_i32_294 = arith.constant 1 : i32
    %272 = arith.addi %271, %c1_i32_294 : i32
    %c0_295 = arith.constant 0 : index
    %273 = arith.index_cast %272 : i32 to index
    %c2_296 = arith.constant 2 : index
    %c0_297 = arith.constant 0 : index
    %274 = vector.load %arg2[%c0_295, %273, %c2_296, %c0_297] : memref<1x10x10x48xbf16, #tpu.memory_space<vmem>>, vector<1x1x8x48xbf16>
    %275 = vector.shape_cast %274 : vector<1x1x8x48xbf16> to vector<8x48xbf16>
    %c40_298 = arith.constant 40 : index
    %c240_299 = arith.constant 240 : index
    %276 = vector.load %arg7[%c40_298, %c240_299] : memref<64x432xbf16, #tpu.memory_space<vmem>>, vector<8x48xbf16>
    tpu.vector_store %arg7[%c40_298, %c240_299], %275 {strides = array<i32>} : memref<64x432xbf16, #tpu.memory_space<vmem>>, vector<8x48xbf16>,
    %c6_i32_300 = arith.constant 6 : i32
    %277 = arith.addi %0, %c6_i32_300 : i32
    %c1_i32_301 = arith.constant 1 : i32
    %278 = arith.addi %277, %c1_i32_301 : i32
    %c0_302 = arith.constant 0 : index
    %279 = arith.index_cast %278 : i32 to index
    %c2_303 = arith.constant 2 : index
    %c0_304 = arith.constant 0 : index
    %280 = vector.load %arg2[%c0_302, %279, %c2_303, %c0_304] : memref<1x10x10x48xbf16, #tpu.memory_space<vmem>>, vector<1x1x8x48xbf16>
    %281 = vector.shape_cast %280 : vector<1x1x8x48xbf16> to vector<8x48xbf16>
    %c48_305 = arith.constant 48 : index
    %c240_306 = arith.constant 240 : index
    %282 = vector.load %arg7[%c48_305, %c240_306] : memref<64x432xbf16, #tpu.memory_space<vmem>>, vector<8x48xbf16>
    tpu.vector_store %arg7[%c48_305, %c240_306], %281 {strides = array<i32>} : memref<64x432xbf16, #tpu.memory_space<vmem>>, vector<8x48xbf16>,
    %c7_i32_307 = arith.constant 7 : i32
    %283 = arith.addi %0, %c7_i32_307 : i32
    %c1_i32_308 = arith.constant 1 : i32
    %284 = arith.addi %283, %c1_i32_308 : i32
    %c0_309 = arith.constant 0 : index
    %285 = arith.index_cast %284 : i32 to index
    %c2_310 = arith.constant 2 : index
    %c0_311 = arith.constant 0 : index
    %286 = vector.load %arg2[%c0_309, %285, %c2_310, %c0_311] : memref<1x10x10x48xbf16, #tpu.memory_space<vmem>>, vector<1x1x8x48xbf16>
    %287 = vector.shape_cast %286 : vector<1x1x8x48xbf16> to vector<8x48xbf16>
    %c56_312 = arith.constant 56 : index
    %c240_313 = arith.constant 240 : index
    %288 = vector.load %arg7[%c56_312, %c240_313] : memref<64x432xbf16, #tpu.memory_space<vmem>>, vector<8x48xbf16>
    tpu.vector_store %arg7[%c56_312, %c240_313], %287 {strides = array<i32>} : memref<64x432xbf16, #tpu.memory_space<vmem>>, vector<8x48xbf16>,
    %c0_i32_314 = arith.constant 0 : i32
    %289 = arith.addi %0, %c0_i32_314 : i32
    %c2_i32_315 = arith.constant 2 : i32
    %290 = arith.addi %289, %c2_i32_315 : i32
    %c0_316 = arith.constant 0 : index
    %291 = arith.index_cast %290 : i32 to index
    %c0_317 = arith.constant 0 : index
    %c0_318 = arith.constant 0 : index
    %292 = vector.load %arg2[%c0_316, %291, %c0_317, %c0_318] : memref<1x10x10x48xbf16, #tpu.memory_space<vmem>>, vector<1x1x8x48xbf16>
    %293 = vector.shape_cast %292 : vector<1x1x8x48xbf16> to vector<8x48xbf16>
    %c0_319 = arith.constant 0 : index
    %c288 = arith.constant 288 : index
    %294 = vector.load %arg7[%c0_319, %c288] : memref<64x432xbf16, #tpu.memory_space<vmem>>, vector<8x48xbf16>
    tpu.vector_store %arg7[%c0_319, %c288], %293 {strides = array<i32>} : memref<64x432xbf16, #tpu.memory_space<vmem>>, vector<8x48xbf16>,
    %c1_i32_320 = arith.constant 1 : i32
    %295 = arith.addi %0, %c1_i32_320 : i32
    %c2_i32_321 = arith.constant 2 : i32
    %296 = arith.addi %295, %c2_i32_321 : i32
    %c0_322 = arith.constant 0 : index
    %297 = arith.index_cast %296 : i32 to index
    %c0_323 = arith.constant 0 : index
    %c0_324 = arith.constant 0 : index
    %298 = vector.load %arg2[%c0_322, %297, %c0_323, %c0_324] : memref<1x10x10x48xbf16, #tpu.memory_space<vmem>>, vector<1x1x8x48xbf16>
    %299 = vector.shape_cast %298 : vector<1x1x8x48xbf16> to vector<8x48xbf16>
    %c8_325 = arith.constant 8 : index
    %c288_326 = arith.constant 288 : index
    %300 = vector.load %arg7[%c8_325, %c288_326] : memref<64x432xbf16, #tpu.memory_space<vmem>>, vector<8x48xbf16>
    tpu.vector_store %arg7[%c8_325, %c288_326], %299 {strides = array<i32>} : memref<64x432xbf16, #tpu.memory_space<vmem>>, vector<8x48xbf16>,
    %c2_i32_327 = arith.constant 2 : i32
    %301 = arith.addi %0, %c2_i32_327 : i32
    %c2_i32_328 = arith.constant 2 : i32
    %302 = arith.addi %301, %c2_i32_328 : i32
    %c0_329 = arith.constant 0 : index
    %303 = arith.index_cast %302 : i32 to index
    %c0_330 = arith.constant 0 : index
    %c0_331 = arith.constant 0 : index
    %304 = vector.load %arg2[%c0_329, %303, %c0_330, %c0_331] : memref<1x10x10x48xbf16, #tpu.memory_space<vmem>>, vector<1x1x8x48xbf16>
    %305 = vector.shape_cast %304 : vector<1x1x8x48xbf16> to vector<8x48xbf16>
    %c16_332 = arith.constant 16 : index
    %c288_333 = arith.constant 288 : index
    %306 = vector.load %arg7[%c16_332, %c288_333] : memref<64x432xbf16, #tpu.memory_space<vmem>>, vector<8x48xbf16>
    tpu.vector_store %arg7[%c16_332, %c288_333], %305 {strides = array<i32>} : memref<64x432xbf16, #tpu.memory_space<vmem>>, vector<8x48xbf16>,
    %c3_i32_334 = arith.constant 3 : i32
    %307 = arith.addi %0, %c3_i32_334 : i32
    %c2_i32_335 = arith.constant 2 : i32
    %308 = arith.addi %307, %c2_i32_335 : i32
    %c0_336 = arith.constant 0 : index
    %309 = arith.index_cast %308 : i32 to index
    %c0_337 = arith.constant 0 : index
    %c0_338 = arith.constant 0 : index
    %310 = vector.load %arg2[%c0_336, %309, %c0_337, %c0_338] : memref<1x10x10x48xbf16, #tpu.memory_space<vmem>>, vector<1x1x8x48xbf16>
    %311 = vector.shape_cast %310 : vector<1x1x8x48xbf16> to vector<8x48xbf16>
    %c24_339 = arith.constant 24 : index
    %c288_340 = arith.constant 288 : index
    %312 = vector.load %arg7[%c24_339, %c288_340] : memref<64x432xbf16, #tpu.memory_space<vmem>>, vector<8x48xbf16>
    tpu.vector_store %arg7[%c24_339, %c288_340], %311 {strides = array<i32>} : memref<64x432xbf16, #tpu.memory_space<vmem>>, vector<8x48xbf16>,
    %c4_i32_341 = arith.constant 4 : i32
    %313 = arith.addi %0, %c4_i32_341 : i32
    %c2_i32_342 = arith.constant 2 : i32
    %314 = arith.addi %313, %c2_i32_342 : i32
    %c0_343 = arith.constant 0 : index
    %315 = arith.index_cast %314 : i32 to index
    %c0_344 = arith.constant 0 : index
    %c0_345 = arith.constant 0 : index
    %316 = vector.load %arg2[%c0_343, %315, %c0_344, %c0_345] : memref<1x10x10x48xbf16, #tpu.memory_space<vmem>>, vector<1x1x8x48xbf16>
    %317 = vector.shape_cast %316 : vector<1x1x8x48xbf16> to vector<8x48xbf16>
    %c32_346 = arith.constant 32 : index
    %c288_347 = arith.constant 288 : index
    %318 = vector.load %arg7[%c32_346, %c288_347] : memref<64x432xbf16, #tpu.memory_space<vmem>>, vector<8x48xbf16>
    tpu.vector_store %arg7[%c32_346, %c288_347], %317 {strides = array<i32>} : memref<64x432xbf16, #tpu.memory_space<vmem>>, vector<8x48xbf16>,
    %c5_i32_348 = arith.constant 5 : i32
    %319 = arith.addi %0, %c5_i32_348 : i32
    %c2_i32_349 = arith.constant 2 : i32
    %320 = arith.addi %319, %c2_i32_349 : i32
    %c0_350 = arith.constant 0 : index
    %321 = arith.index_cast %320 : i32 to index
    %c0_351 = arith.constant 0 : index
    %c0_352 = arith.constant 0 : index
    %322 = vector.load %arg2[%c0_350, %321, %c0_351, %c0_352] : memref<1x10x10x48xbf16, #tpu.memory_space<vmem>>, vector<1x1x8x48xbf16>
    %323 = vector.shape_cast %322 : vector<1x1x8x48xbf16> to vector<8x48xbf16>
    %c40_353 = arith.constant 40 : index
    %c288_354 = arith.constant 288 : index
    %324 = vector.load %arg7[%c40_353, %c288_354] : memref<64x432xbf16, #tpu.memory_space<vmem>>, vector<8x48xbf16>
    tpu.vector_store %arg7[%c40_353, %c288_354], %323 {strides = array<i32>} : memref<64x432xbf16, #tpu.memory_space<vmem>>, vector<8x48xbf16>,
    %c6_i32_355 = arith.constant 6 : i32
    %325 = arith.addi %0, %c6_i32_355 : i32
    %c2_i32_356 = arith.constant 2 : i32
    %326 = arith.addi %325, %c2_i32_356 : i32
    %c0_357 = arith.constant 0 : index
    %327 = arith.index_cast %326 : i32 to index
    %c0_358 = arith.constant 0 : index
    %c0_359 = arith.constant 0 : index
    %328 = vector.load %arg2[%c0_357, %327, %c0_358, %c0_359] : memref<1x10x10x48xbf16, #tpu.memory_space<vmem>>, vector<1x1x8x48xbf16>
    %329 = vector.shape_cast %328 : vector<1x1x8x48xbf16> to vector<8x48xbf16>
    %c48_360 = arith.constant 48 : index
    %c288_361 = arith.constant 288 : index
    %330 = vector.load %arg7[%c48_360, %c288_361] : memref<64x432xbf16, #tpu.memory_space<vmem>>, vector<8x48xbf16>
    tpu.vector_store %arg7[%c48_360, %c288_361], %329 {strides = array<i32>} : memref<64x432xbf16, #tpu.memory_space<vmem>>, vector<8x48xbf16>,
    %c7_i32_362 = arith.constant 7 : i32
    %331 = arith.addi %0, %c7_i32_362 : i32
    %c2_i32_363 = arith.constant 2 : i32
    %332 = arith.addi %331, %c2_i32_363 : i32
    %c0_364 = arith.constant 0 : index
    %333 = arith.index_cast %332 : i32 to index
    %c0_365 = arith.constant 0 : index
    %c0_366 = arith.constant 0 : index
    %334 = vector.load %arg2[%c0_364, %333, %c0_365, %c0_366] : memref<1x10x10x48xbf16, #tpu.memory_space<vmem>>, vector<1x1x8x48xbf16>
    %335 = vector.shape_cast %334 : vector<1x1x8x48xbf16> to vector<8x48xbf16>
    %c56_367 = arith.constant 56 : index
    %c288_368 = arith.constant 288 : index
    %336 = vector.load %arg7[%c56_367, %c288_368] : memref<64x432xbf16, #tpu.memory_space<vmem>>, vector<8x48xbf16>
    tpu.vector_store %arg7[%c56_367, %c288_368], %335 {strides = array<i32>} : memref<64x432xbf16, #tpu.memory_space<vmem>>, vector<8x48xbf16>,
    %c0_i32_369 = arith.constant 0 : i32
    %337 = arith.addi %0, %c0_i32_369 : i32
    %c2_i32_370 = arith.constant 2 : i32
    %338 = arith.addi %337, %c2_i32_370 : i32
    %c0_371 = arith.constant 0 : index
    %339 = arith.index_cast %338 : i32 to index
    %c1_372 = arith.constant 1 : index
    %c0_373 = arith.constant 0 : index
    %340 = vector.load %arg2[%c0_371, %339, %c1_372, %c0_373] : memref<1x10x10x48xbf16, #tpu.memory_space<vmem>>, vector<1x1x8x48xbf16>
    %341 = vector.shape_cast %340 : vector<1x1x8x48xbf16> to vector<8x48xbf16>
    %c0_374 = arith.constant 0 : index
    %c336 = arith.constant 336 : index
    %342 = vector.load %arg7[%c0_374, %c336] : memref<64x432xbf16, #tpu.memory_space<vmem>>, vector<8x48xbf16>
    tpu.vector_store %arg7[%c0_374, %c336], %341 {strides = array<i32>} : memref<64x432xbf16, #tpu.memory_space<vmem>>, vector<8x48xbf16>,
    %c1_i32_375 = arith.constant 1 : i32
    %343 = arith.addi %0, %c1_i32_375 : i32
    %c2_i32_376 = arith.constant 2 : i32
    %344 = arith.addi %343, %c2_i32_376 : i32
    %c0_377 = arith.constant 0 : index
    %345 = arith.index_cast %344 : i32 to index
    %c1_378 = arith.constant 1 : index
    %c0_379 = arith.constant 0 : index
    %346 = vector.load %arg2[%c0_377, %345, %c1_378, %c0_379] : memref<1x10x10x48xbf16, #tpu.memory_space<vmem>>, vector<1x1x8x48xbf16>
    %347 = vector.shape_cast %346 : vector<1x1x8x48xbf16> to vector<8x48xbf16>
    %c8_380 = arith.constant 8 : index
    %c336_381 = arith.constant 336 : index
    %348 = vector.load %arg7[%c8_380, %c336_381] : memref<64x432xbf16, #tpu.memory_space<vmem>>, vector<8x48xbf16>
    tpu.vector_store %arg7[%c8_380, %c336_381], %347 {strides = array<i32>} : memref<64x432xbf16, #tpu.memory_space<vmem>>, vector<8x48xbf16>,
    %c2_i32_382 = arith.constant 2 : i32
    %349 = arith.addi %0, %c2_i32_382 : i32
    %c2_i32_383 = arith.constant 2 : i32
    %350 = arith.addi %349, %c2_i32_383 : i32
    %c0_384 = arith.constant 0 : index
    %351 = arith.index_cast %350 : i32 to index
    %c1_385 = arith.constant 1 : index
    %c0_386 = arith.constant 0 : index
    %352 = vector.load %arg2[%c0_384, %351, %c1_385, %c0_386] : memref<1x10x10x48xbf16, #tpu.memory_space<vmem>>, vector<1x1x8x48xbf16>
    %353 = vector.shape_cast %352 : vector<1x1x8x48xbf16> to vector<8x48xbf16>
    %c16_387 = arith.constant 16 : index
    %c336_388 = arith.constant 336 : index
    %354 = vector.load %arg7[%c16_387, %c336_388] : memref<64x432xbf16, #tpu.memory_space<vmem>>, vector<8x48xbf16>
    tpu.vector_store %arg7[%c16_387, %c336_388], %353 {strides = array<i32>} : memref<64x432xbf16, #tpu.memory_space<vmem>>, vector<8x48xbf16>,
    %c3_i32_389 = arith.constant 3 : i32
    %355 = arith.addi %0, %c3_i32_389 : i32
    %c2_i32_390 = arith.constant 2 : i32
    %356 = arith.addi %355, %c2_i32_390 : i32
    %c0_391 = arith.constant 0 : index
    %357 = arith.index_cast %356 : i32 to index
    %c1_392 = arith.constant 1 : index
    %c0_393 = arith.constant 0 : index
    %358 = vector.load %arg2[%c0_391, %357, %c1_392, %c0_393] : memref<1x10x10x48xbf16, #tpu.memory_space<vmem>>, vector<1x1x8x48xbf16>
    %359 = vector.shape_cast %358 : vector<1x1x8x48xbf16> to vector<8x48xbf16>
    %c24_394 = arith.constant 24 : index
    %c336_395 = arith.constant 336 : index
    %360 = vector.load %arg7[%c24_394, %c336_395] : memref<64x432xbf16, #tpu.memory_space<vmem>>, vector<8x48xbf16>
    tpu.vector_store %arg7[%c24_394, %c336_395], %359 {strides = array<i32>} : memref<64x432xbf16, #tpu.memory_space<vmem>>, vector<8x48xbf16>,
    %c4_i32_396 = arith.constant 4 : i32
    %361 = arith.addi %0, %c4_i32_396 : i32
    %c2_i32_397 = arith.constant 2 : i32
    %362 = arith.addi %361, %c2_i32_397 : i32
    %c0_398 = arith.constant 0 : index
    %363 = arith.index_cast %362 : i32 to index
    %c1_399 = arith.constant 1 : index
    %c0_400 = arith.constant 0 : index
    %364 = vector.load %arg2[%c0_398, %363, %c1_399, %c0_400] : memref<1x10x10x48xbf16, #tpu.memory_space<vmem>>, vector<1x1x8x48xbf16>
    %365 = vector.shape_cast %364 : vector<1x1x8x48xbf16> to vector<8x48xbf16>
    %c32_401 = arith.constant 32 : index
    %c336_402 = arith.constant 336 : index
    %366 = vector.load %arg7[%c32_401, %c336_402] : memref<64x432xbf16, #tpu.memory_space<vmem>>, vector<8x48xbf16>
    tpu.vector_store %arg7[%c32_401, %c336_402], %365 {strides = array<i32>} : memref<64x432xbf16, #tpu.memory_space<vmem>>, vector<8x48xbf16>,
    %c5_i32_403 = arith.constant 5 : i32
    %367 = arith.addi %0, %c5_i32_403 : i32
    %c2_i32_404 = arith.constant 2 : i32
    %368 = arith.addi %367, %c2_i32_404 : i32
    %c0_405 = arith.constant 0 : index
    %369 = arith.index_cast %368 : i32 to index
    %c1_406 = arith.constant 1 : index
    %c0_407 = arith.constant 0 : index
    %370 = vector.load %arg2[%c0_405, %369, %c1_406, %c0_407] : memref<1x10x10x48xbf16, #tpu.memory_space<vmem>>, vector<1x1x8x48xbf16>
    %371 = vector.shape_cast %370 : vector<1x1x8x48xbf16> to vector<8x48xbf16>
    %c40_408 = arith.constant 40 : index
    %c336_409 = arith.constant 336 : index
    %372 = vector.load %arg7[%c40_408, %c336_409] : memref<64x432xbf16, #tpu.memory_space<vmem>>, vector<8x48xbf16>
    tpu.vector_store %arg7[%c40_408, %c336_409], %371 {strides = array<i32>} : memref<64x432xbf16, #tpu.memory_space<vmem>>, vector<8x48xbf16>,
    %c6_i32_410 = arith.constant 6 : i32
    %373 = arith.addi %0, %c6_i32_410 : i32
    %c2_i32_411 = arith.constant 2 : i32
    %374 = arith.addi %373, %c2_i32_411 : i32
    %c0_412 = arith.constant 0 : index
    %375 = arith.index_cast %374 : i32 to index
    %c1_413 = arith.constant 1 : index
    %c0_414 = arith.constant 0 : index
    %376 = vector.load %arg2[%c0_412, %375, %c1_413, %c0_414] : memref<1x10x10x48xbf16, #tpu.memory_space<vmem>>, vector<1x1x8x48xbf16>
    %377 = vector.shape_cast %376 : vector<1x1x8x48xbf16> to vector<8x48xbf16>
    %c48_415 = arith.constant 48 : index
    %c336_416 = arith.constant 336 : index
    %378 = vector.load %arg7[%c48_415, %c336_416] : memref<64x432xbf16, #tpu.memory_space<vmem>>, vector<8x48xbf16>
    tpu.vector_store %arg7[%c48_415, %c336_416], %377 {strides = array<i32>} : memref<64x432xbf16, #tpu.memory_space<vmem>>, vector<8x48xbf16>,
    %c7_i32_417 = arith.constant 7 : i32
    %379 = arith.addi %0, %c7_i32_417 : i32
    %c2_i32_418 = arith.constant 2 : i32
    %380 = arith.addi %379, %c2_i32_418 : i32
    %c0_419 = arith.constant 0 : index
    %381 = arith.index_cast %380 : i32 to index
    %c1_420 = arith.constant 1 : index
    %c0_421 = arith.constant 0 : index
    %382 = vector.load %arg2[%c0_419, %381, %c1_420, %c0_421] : memref<1x10x10x48xbf16, #tpu.memory_space<vmem>>, vector<1x1x8x48xbf16>
    %383 = vector.shape_cast %382 : vector<1x1x8x48xbf16> to vector<8x48xbf16>
    %c56_422 = arith.constant 56 : index
    %c336_423 = arith.constant 336 : index
    %384 = vector.load %arg7[%c56_422, %c336_423] : memref<64x432xbf16, #tpu.memory_space<vmem>>, vector<8x48xbf16>
    tpu.vector_store %arg7[%c56_422, %c336_423], %383 {strides = array<i32>} : memref<64x432xbf16, #tpu.memory_space<vmem>>, vector<8x48xbf16>,
    %c0_i32_424 = arith.constant 0 : i32
    %385 = arith.addi %0, %c0_i32_424 : i32
    %c2_i32_425 = arith.constant 2 : i32
    %386 = arith.addi %385, %c2_i32_425 : i32
    %c0_426 = arith.constant 0 : index
    %387 = arith.index_cast %386 : i32 to index
    %c2_427 = arith.constant 2 : index
    %c0_428 = arith.constant 0 : index
    %388 = vector.load %arg2[%c0_426, %387, %c2_427, %c0_428] : memref<1x10x10x48xbf16, #tpu.memory_space<vmem>>, vector<1x1x8x48xbf16>
    %389 = vector.shape_cast %388 : vector<1x1x8x48xbf16> to vector<8x48xbf16>
    %c0_429 = arith.constant 0 : index
    %c384 = arith.constant 384 : index
    %390 = vector.load %arg7[%c0_429, %c384] : memref<64x432xbf16, #tpu.memory_space<vmem>>, vector<8x48xbf16>
    tpu.vector_store %arg7[%c0_429, %c384], %389 {strides = array<i32>} : memref<64x432xbf16, #tpu.memory_space<vmem>>, vector<8x48xbf16>,
    %c1_i32_430 = arith.constant 1 : i32
    %391 = arith.addi %0, %c1_i32_430 : i32
    %c2_i32_431 = arith.constant 2 : i32
    %392 = arith.addi %391, %c2_i32_431 : i32
    %c0_432 = arith.constant 0 : index
    %393 = arith.index_cast %392 : i32 to index
    %c2_433 = arith.constant 2 : index
    %c0_434 = arith.constant 0 : index
    %394 = vector.load %arg2[%c0_432, %393, %c2_433, %c0_434] : memref<1x10x10x48xbf16, #tpu.memory_space<vmem>>, vector<1x1x8x48xbf16>
    %395 = vector.shape_cast %394 : vector<1x1x8x48xbf16> to vector<8x48xbf16>
    %c8_435 = arith.constant 8 : index
    %c384_436 = arith.constant 384 : index
    %396 = vector.load %arg7[%c8_435, %c384_436] : memref<64x432xbf16, #tpu.memory_space<vmem>>, vector<8x48xbf16>
    tpu.vector_store %arg7[%c8_435, %c384_436], %395 {strides = array<i32>} : memref<64x432xbf16, #tpu.memory_space<vmem>>, vector<8x48xbf16>,
    %c2_i32_437 = arith.constant 2 : i32
    %397 = arith.addi %0, %c2_i32_437 : i32
    %c2_i32_438 = arith.constant 2 : i32
    %398 = arith.addi %397, %c2_i32_438 : i32
    %c0_439 = arith.constant 0 : index
    %399 = arith.index_cast %398 : i32 to index
    %c2_440 = arith.constant 2 : index
    %c0_441 = arith.constant 0 : index
    %400 = vector.load %arg2[%c0_439, %399, %c2_440, %c0_441] : memref<1x10x10x48xbf16, #tpu.memory_space<vmem>>, vector<1x1x8x48xbf16>
    %401 = vector.shape_cast %400 : vector<1x1x8x48xbf16> to vector<8x48xbf16>
    %c16_442 = arith.constant 16 : index
    %c384_443 = arith.constant 384 : index
    %402 = vector.load %arg7[%c16_442, %c384_443] : memref<64x432xbf16, #tpu.memory_space<vmem>>, vector<8x48xbf16>
    tpu.vector_store %arg7[%c16_442, %c384_443], %401 {strides = array<i32>} : memref<64x432xbf16, #tpu.memory_space<vmem>>, vector<8x48xbf16>,
    %c3_i32_444 = arith.constant 3 : i32
    %403 = arith.addi %0, %c3_i32_444 : i32
    %c2_i32_445 = arith.constant 2 : i32
    %404 = arith.addi %403, %c2_i32_445 : i32
    %c0_446 = arith.constant 0 : index
    %405 = arith.index_cast %404 : i32 to index
    %c2_447 = arith.constant 2 : index
    %c0_448 = arith.constant 0 : index
    %406 = vector.load %arg2[%c0_446, %405, %c2_447, %c0_448] : memref<1x10x10x48xbf16, #tpu.memory_space<vmem>>, vector<1x1x8x48xbf16>
    %407 = vector.shape_cast %406 : vector<1x1x8x48xbf16> to vector<8x48xbf16>
    %c24_449 = arith.constant 24 : index
    %c384_450 = arith.constant 384 : index
    %408 = vector.load %arg7[%c24_449, %c384_450] : memref<64x432xbf16, #tpu.memory_space<vmem>>, vector<8x48xbf16>
    tpu.vector_store %arg7[%c24_449, %c384_450], %407 {strides = array<i32>} : memref<64x432xbf16, #tpu.memory_space<vmem>>, vector<8x48xbf16>,
    %c4_i32_451 = arith.constant 4 : i32
    %409 = arith.addi %0, %c4_i32_451 : i32
    %c2_i32_452 = arith.constant 2 : i32
    %410 = arith.addi %409, %c2_i32_452 : i32
    %c0_453 = arith.constant 0 : index
    %411 = arith.index_cast %410 : i32 to index
    %c2_454 = arith.constant 2 : index
    %c0_455 = arith.constant 0 : index
    %412 = vector.load %arg2[%c0_453, %411, %c2_454, %c0_455] : memref<1x10x10x48xbf16, #tpu.memory_space<vmem>>, vector<1x1x8x48xbf16>
    %413 = vector.shape_cast %412 : vector<1x1x8x48xbf16> to vector<8x48xbf16>
    %c32_456 = arith.constant 32 : index
    %c384_457 = arith.constant 384 : index
    %414 = vector.load %arg7[%c32_456, %c384_457] : memref<64x432xbf16, #tpu.memory_space<vmem>>, vector<8x48xbf16>
    tpu.vector_store %arg7[%c32_456, %c384_457], %413 {strides = array<i32>} : memref<64x432xbf16, #tpu.memory_space<vmem>>, vector<8x48xbf16>,
    %c5_i32_458 = arith.constant 5 : i32
    %415 = arith.addi %0, %c5_i32_458 : i32
    %c2_i32_459 = arith.constant 2 : i32
    %416 = arith.addi %415, %c2_i32_459 : i32
    %c0_460 = arith.constant 0 : index
    %417 = arith.index_cast %416 : i32 to index
    %c2_461 = arith.constant 2 : index
    %c0_462 = arith.constant 0 : index
    %418 = vector.load %arg2[%c0_460, %417, %c2_461, %c0_462] : memref<1x10x10x48xbf16, #tpu.memory_space<vmem>>, vector<1x1x8x48xbf16>
    %419 = vector.shape_cast %418 : vector<1x1x8x48xbf16> to vector<8x48xbf16>
    %c40_463 = arith.constant 40 : index
    %c384_464 = arith.constant 384 : index
    %420 = vector.load %arg7[%c40_463, %c384_464] : memref<64x432xbf16, #tpu.memory_space<vmem>>, vector<8x48xbf16>
    tpu.vector_store %arg7[%c40_463, %c384_464], %419 {strides = array<i32>} : memref<64x432xbf16, #tpu.memory_space<vmem>>, vector<8x48xbf16>,
    %c6_i32_465 = arith.constant 6 : i32
    %421 = arith.addi %0, %c6_i32_465 : i32
    %c2_i32_466 = arith.constant 2 : i32
    %422 = arith.addi %421, %c2_i32_466 : i32
    %c0_467 = arith.constant 0 : index
    %423 = arith.index_cast %422 : i32 to index
    %c2_468 = arith.constant 2 : index
    %c0_469 = arith.constant 0 : index
    %424 = vector.load %arg2[%c0_467, %423, %c2_468, %c0_469] : memref<1x10x10x48xbf16, #tpu.memory_space<vmem>>, vector<1x1x8x48xbf16>
    %425 = vector.shape_cast %424 : vector<1x1x8x48xbf16> to vector<8x48xbf16>
    %c48_470 = arith.constant 48 : index
    %c384_471 = arith.constant 384 : index
    %426 = vector.load %arg7[%c48_470, %c384_471] : memref<64x432xbf16, #tpu.memory_space<vmem>>, vector<8x48xbf16>
    tpu.vector_store %arg7[%c48_470, %c384_471], %425 {strides = array<i32>} : memref<64x432xbf16, #tpu.memory_space<vmem>>, vector<8x48xbf16>,
    %c7_i32_472 = arith.constant 7 : i32
    %427 = arith.addi %0, %c7_i32_472 : i32
    %c2_i32_473 = arith.constant 2 : i32
    %428 = arith.addi %427, %c2_i32_473 : i32
    %c0_474 = arith.constant 0 : index
    %429 = arith.index_cast %428 : i32 to index
    %c2_475 = arith.constant 2 : index
    %c0_476 = arith.constant 0 : index
    %430 = vector.load %arg2[%c0_474, %429, %c2_475, %c0_476] : memref<1x10x10x48xbf16, #tpu.memory_space<vmem>>, vector<1x1x8x48xbf16>
    %431 = vector.shape_cast %430 : vector<1x1x8x48xbf16> to vector<8x48xbf16>
    %c56_477 = arith.constant 56 : index
    %c384_478 = arith.constant 384 : index
    %432 = vector.load %arg7[%c56_477, %c384_478] : memref<64x432xbf16, #tpu.memory_space<vmem>>, vector<8x48xbf16>
    tpu.vector_store %arg7[%c56_477, %c384_478], %431 {strides = array<i32>} : memref<64x432xbf16, #tpu.memory_space<vmem>>, vector<8x48xbf16>,
    %c0_479 = arith.constant 0 : index
    %c0_480 = arith.constant 0 : index
    %433 = vector.load %arg7[%c0_479, %c0_480] : memref<64x432xbf16, #tpu.memory_space<vmem>>, vector<64x432xbf16>
    %c0_481 = arith.constant 0 : index
    %c0_482 = arith.constant 0 : index
    %434 = vector.load %arg3[%c0_481, %c0_482] : memref<432x576xbf16, #tpu.memory_space<vmem>>, vector<432x576xbf16>
    %cst = arith.constant dense<0.000000e+00> : vector<64x576xf32>
    %435 = tpu.matmul %433, %434, %cst {dimension_numbers = #tpu.dot_dimension_numbers<[1], [0], [0], [1], [0, 0, 1, 1], [], []>} : vector<64x432xbf16>, vector<432x576xbf16>, vector<64x576xf32> -> vector<64x576xf32>
    %c0_483 = arith.constant 0 : index
    %c0_484 = arith.constant 0 : index
    %c0_485 = arith.constant 0 : index
    %436 = vector.load %arg5[%c0_483, %c0_484, %c0_485] : memref<2x64x1xf32, #tpu.memory_space<vmem>>, vector<1x64x1xf32>
    %437 = vector.shape_cast %436 : vector<1x64x1xf32> to vector<64x1xf32>
    %c1_486 = arith.constant 1 : index
    %c0_487 = arith.constant 0 : index
    %c0_488 = arith.constant 0 : index
    %438 = vector.load %arg5[%c1_486, %c0_487, %c0_488] : memref<2x64x1xf32, #tpu.memory_space<vmem>>, vector<1x64x1xf32>
    %439 = vector.shape_cast %438 : vector<1x64x1xf32> to vector<64x1xf32>
    %440 = vector.extract_strided_slice %435 {offsets = [0, 0], sizes = [64, 64], strides = [1, 1]} : vector<64x576xf32> to vector<64x64xf32>
    %441 = vector.broadcast %437 : vector<64x1xf32> to vector<64x64xf32>
    %442 = arith.addf %440, %441 : vector<64x64xf32>
    %443 = vector.broadcast %439 : vector<64x1xf32> to vector<64x64xf32>
    %444 = arith.addf %442, %443 : vector<64x64xf32>
    %445 = vector.extract_strided_slice %435 {offsets = [0, 64], sizes = [64, 64], strides = [1, 1]} : vector<64x576xf32> to vector<64x64xf32>
    %446 = vector.broadcast %437 : vector<64x1xf32> to vector<64x64xf32>
    %447 = arith.addf %445, %446 : vector<64x64xf32>
    %448 = arith.maximumf %444, %447 : vector<64x64xf32>
    %449 = vector.extract_strided_slice %435 {offsets = [0, 128], sizes = [64, 64], strides = [1, 1]} : vector<64x576xf32> to vector<64x64xf32>
    %450 = vector.broadcast %437 : vector<64x1xf32> to vector<64x64xf32>
    %451 = arith.addf %449, %450 : vector<64x64xf32>
    %452 = arith.maximumf %448, %451 : vector<64x64xf32>
    %453 = vector.extract_strided_slice %435 {offsets = [0, 192], sizes = [64, 64], strides = [1, 1]} : vector<64x576xf32> to vector<64x64xf32>
    %454 = vector.broadcast %439 : vector<64x1xf32> to vector<64x64xf32>
    %455 = arith.addf %453, %454 : vector<64x64xf32>
    %456 = arith.maximumf %452, %455 : vector<64x64xf32>
    %457 = vector.extract_strided_slice %435 {offsets = [0, 256], sizes = [64, 64], strides = [1, 1]} : vector<64x576xf32> to vector<64x64xf32>
    %458 = arith.maximumf %456, %457 : vector<64x64xf32>
    %459 = vector.extract_strided_slice %435 {offsets = [0, 320], sizes = [64, 64], strides = [1, 1]} : vector<64x576xf32> to vector<64x64xf32>
    %460 = arith.maximumf %458, %459 : vector<64x64xf32>
    %461 = vector.extract_strided_slice %435 {offsets = [0, 384], sizes = [64, 64], strides = [1, 1]} : vector<64x576xf32> to vector<64x64xf32>
    %462 = vector.broadcast %439 : vector<64x1xf32> to vector<64x64xf32>
    %463 = arith.addf %461, %462 : vector<64x64xf32>
    %464 = arith.maximumf %460, %463 : vector<64x64xf32>
    %465 = vector.extract_strided_slice %435 {offsets = [0, 448], sizes = [64, 64], strides = [1, 1]} : vector<64x576xf32> to vector<64x64xf32>
    %466 = arith.maximumf %464, %465 : vector<64x64xf32>
    %467 = vector.extract_strided_slice %435 {offsets = [0, 512], sizes = [64, 64], strides = [1, 1]} : vector<64x576xf32> to vector<64x64xf32>
    %468 = arith.maximumf %466, %467 : vector<64x64xf32>
    %c0_489 = arith.constant 0 : index
    %c0_490 = arith.constant 0 : index
    %469 = vector.load %arg4[%c0_489, %c0_490] : memref<1x64xf32, #tpu.memory_space<vmem>>, vector<1x64xf32>
    %470 = vector.broadcast %469 : vector<1x64xf32> to vector<64x64xf32>
    %471 = arith.addf %468, %470 : vector<64x64xf32>
    %cst_491 = arith.constant 0.000000e+00 : f32
    %472 = vector.broadcast %cst_491 : f32 to vector<64x64xf32>
    %473 = arith.maximumf %471, %472 : vector<64x64xf32>
    %474 = arith.truncf %473 : vector<64x64xf32> to vector<64x64xbf16>
    %c0_492 = arith.constant 0 : index
    %c0_493 = arith.constant 0 : index
    %c0_494 = arith.constant 0 : index
    %475 = vector.load %arg6[%c0_492, %c0_493, %c0_494] : memref<1x64x64xbf16, #tpu.memory_space<vmem>>, vector<1x64x64xbf16>
    %476 = vector.shape_cast %475 : vector<1x64x64xbf16> to vector<64x64xbf16>
    %477 = vector.shape_cast %474 : vector<64x64xbf16> to vector<1x64x64xbf16>
    tpu.vector_store %arg6[%c0_492, %c0_493, %c0_494], %477 {strides = array<i32>} : memref<1x64x64xbf16, #tpu.memory_space<vmem>>, vector<1x64x64xbf16>,
    return
  }
  func.func @transform_0(%arg0: i32, %arg1: i32) -> (i32, i32, i32, i32) {
    %c0_i32 = arith.constant 0 : i32
    %c0_i32_0 = arith.constant 0 : i32
    %c0_i32_1 = arith.constant 0 : i32
    %c0_i32_2 = arith.constant 0 : i32
    return %arg0, %c0_i32, %c0_i32_0, %c0_i32_1 : i32, i32, i32, i32
  }
  func.func @transform_1(%arg0: i32, %arg1: i32) -> (i32, i32) {
    %c0_i32 = arith.constant 0 : i32
    %c0_i32_0 = arith.constant 0 : i32
    %c0_i32_1 = arith.constant 0 : i32
    return %c0_i32, %c0_i32_0 : i32, i32
  }
  func.func @transform_2(%arg0: i32, %arg1: i32) -> (i32, i32) {
    %c0_i32 = arith.constant 0 : i32
    %c0_i32_0 = arith.constant 0 : i32
    %c0_i32_1 = arith.constant 0 : i32
    return %c0_i32, %c0_i32_0 : i32, i32
  }
  func.func @transform_3(%arg0: i32, %arg1: i32) -> (i32, i32, i32) {
    %c0_i32 = arith.constant 0 : i32
    %c0_i32_0 = arith.constant 0 : i32
    %c0_i32_1 = arith.constant 0 : i32
    return %c0_i32, %arg1, %c0_i32_0 : i32, i32, i32
  }
  func.func @transform_4(%arg0: i32, %arg1: i32) -> (i32, i32, i32) {
    %c0_i32 = arith.constant 0 : i32
    %c0_i32_0 = arith.constant 0 : i32
    return %arg0, %arg1, %c0_i32 : i32, i32, i32
  }
}

</mosaic_0001>

<llo_original>
// kernel: forward.1
$region0: #{forward.1}
  #allocation0 [shape = 'u32[]', space=smem, size = 0x4, offset = 0x4, fixed_abs, tag = 'smem constant byte address 0x4 - core index']
  #allocation1 [shape = 'u32[144,128]{1,0:T(1,128)}', space=vmem, size = 0x12000, scoped, tag = 'internal scratch']
  #allocation2 [shape = 'bf16[64,432]{1,0:T(8,128)(2,1)}', space=vmem, size = 0x10000, scoped, tag = 'scratch operand']
  %s0 = inlined_call_operand.vmem [shape: bf16[2,10,10,48], index: 0, kind: input, shape index: {}]
  %s1 = inlined_call_operand.vmem [shape: bf16[432,576], index: 1, kind: input, shape index: {}]
  %s2 = inlined_call_operand.vmem [shape: f32[1,64], index: 2, kind: input, shape index: {}]
  %s3 = inlined_call_operand.vmem [shape: f32[2,64,1], index: 3, kind: input, shape index: {}]
  %s4 = inlined_call_operand.hbm [shape: bf16[2,64,64], index: 4, kind: output, shape index: {}]
  %s5 = sld [smem:[#allocation0]]
  $region49: #{forward.1} parent=0
    _
  %s7 = ssub.s32 1, %s5
  %s8 = scalar_select 0, %s7, %s5
  $region1: #{forward.1} parent=0
    #allocation3 [shape = 'u8[32768]{0}', space=vmem, size = 0x8000, scoped, tag = 'output window, operand 0']
    #allocation4 [shape = 's32[2]{0}', space=sflag, size = 0x8, scoped, tag = 'scoped memory for forward.1']
    %9 = vsyncpa [#allocation4], 0
    %s10 = scalar_lea.sflag [#allocation4], 1
    %11 = vsyncpa %s10, 0
    loop: start=0, step=1, limit=4
    $region2: #{forward.1} parent=1 // loop_pre_header
      _
    $region3: #{forward.1} parent=1 // loop_header
      %s13 = sphi 0, %s17
      %p14 = scmp.ge.s32.totalorder %s13, 4
      %s20 = sphi 0, %s32
      %s21 = sphi 0, %s28
      %s22 = sphi 0, %s20
      %s23 = sphi 0, %s21
      %s24 = sphi 0, %s22
      %s25 = sphi 0, %s23
      %s35 = sphi 0, %s37
      %s38 = sphi 0, %s35
      %s39 = sphi 0, %s38
      %s55 = sphi 0, %s39
      %s59 = sphi 0, %s59
      %s61 = sphi 0, %s59
      %s62 = sphi 0, %s61
      %s76 = sphi 0, %s62
      %s80 = sphi 0, %s80
      %s82 = sphi 0, %s80
      %s83 = sphi 0, %s82
      %s97 = sphi 0, %s83
      %s103 = sphi 0, %s105
      %s106 = sphi 0, %s103
      %s107 = sphi 0, %s106
      %s123 = sphi 0, %s107
      %s131 = sphi 0, %s133
      %s134 = sphi 0, %s131
      %s135 = sphi 0, %s134
      %s151 = sphi 0, %s135
    $region4: #{forward.1} parent=1 // loop_header_branch
      %16 = sbr.rel (%p14) target = $region8
    $region5: #{forward.1} parent=1 // loop_body
      %s18 = ssub.s32 %s13, 1
      %s19 = ssub.s32 %s13, 2
      %s26 = sadd.s32 1, %s21
      %p27 = scmp.ge.s32.totalorder %s26, 1
      %s28 = scalar_select %p27, 0, %s26
      %s29 = sadd.s32 1, %s20
      %s30 = scalar_select %p27, %s29, %s20
      %p31 = scmp.ge.s32.totalorder %s30, 2
      %s32 = scalar_select %p31, 0, %s30
      %s33 = ssub.s32 %s20, %s32
      %p34 = scmp.eq.s32.totalorder %s33, 0
      %s36 = sadd.s32 %s35, 1
      %s37 = scalar_select %p34, %s35, %s36
      %p40 = pneg %p34
      %p41 = scmp.eq.s32.totalorder %s13, 1
      %p42 = por %p40, %p41
      %p43 = scmp.ne.s32.totalorder %s35, %s38
      %p44 = scmp.eq.s32.totalorder %s13, 0
      %p45 = por %p43, %p44
      %p46 = scmp.ne.s32.totalorder %s35, %s38
      %p47 = scmp.eq.s32.totalorder %s18, 1
      %p48 = por %p46, %p47
      %p49 = scmp.ne.s32.totalorder %s38, %s39
      %p50 = scmp.eq.s32.totalorder %s18, 0
      %p51 = por %p49, %p50
      %p52 = scmp.ne.s32.totalorder %s38, %s39
      %p53 = scmp.eq.s32.totalorder %s19, 1
      %p54 = por %p52, %p53
      %p56 = scmp.ne.s32.totalorder %s39, %s55
      %p57 = scmp.eq.s32.totalorder %s19, 0
      %p58 = por %p56, %p57
      %s60 = sadd.s32 %s59, 1
      %p63 = scmp.eq.s32.totalorder %s13, 1
      %p64 = scmp.ne.s32.totalorder %s59, %s61
      %p65 = scmp.eq.s32.totalorder %s13, 0
      %p66 = por %p64, %p65
      %p67 = scmp.ne.s32.totalorder %s59, %s61
      %p68 = scmp.eq.s32.totalorder %s18, 1
      %p69 = por %p67, %p68
      %p70 = scmp.ne.s32.totalorder %s61, %s62
      %p71 = scmp.eq.s32.totalorder %s18, 0
      %p72 = por %p70, %p71
      %p73 = scmp.ne.s32.totalorder %s61, %s62
      %p74 = scmp.eq.s32.totalorder %s19, 1
      %p75 = por %p73, %p74
      %p77 = scmp.ne.s32.totalorder %s62, %s76
      %p78 = scmp.eq.s32.totalorder %s19, 0
      %p79 = por %p77, %p78
      %s81 = sadd.s32 %s80, 1
      %p84 = scmp.eq.s32.totalorder %s13, 1
      %p85 = scmp.ne.s32.totalorder %s80, %s82
      %p86 = scmp.eq.s32.totalorder %s13, 0
      %p87 = por %p85, %p86
      %p88 = scmp.ne.s32.totalorder %s80, %s82
      %p89 = scmp.eq.s32.totalorder %s18, 1
      %p90 = por %p88, %p89
      %p91 = scmp.ne.s32.totalorder %s82, %s83
      %p92 = scmp.eq.s32.totalorder %s18, 0
      %p93 = por %p91, %p92
      %p94 = scmp.ne.s32.totalorder %s82, %s83
      %p95 = scmp.eq.s32.totalorder %s19, 1
      %p96 = por %p94, %p95
      %p98 = scmp.ne.s32.totalorder %s83, %s97
      %p99 = scmp.eq.s32.totalorder %s19, 0
      %p100 = por %p98, %p99
      %s101 = ssub.s32 %s21, %s28
      %p102 = scmp.eq.s32.totalorder %s101, 0
      %s104 = sadd.s32 %s103, 1
      %s105 = scalar_select %p102, %s103, %s104
      %p108 = pneg %p102
      %p109 = scmp.eq.s32.totalorder %s13, 1
      %p110 = por %p108, %p109
      %p111 = scmp.ne.s32.totalorder %s103, %s106
      %p112 = scmp.eq.s32.totalorder %s13, 0
      %p113 = por %p111, %p112
      %p114 = scmp.ne.s32.totalorder %s103, %s106
      %p115 = scmp.eq.s32.totalorder %s18, 1
      %p116 = por %p114, %p115
      %p117 = scmp.ne.s32.totalorder %s106, %s107
      %p118 = scmp.eq.s32.totalorder %s18, 0
      %p119 = por %p117, %p118
      %p120 = scmp.ne.s32.totalorder %s106, %s107
      %p121 = scmp.eq.s32.totalorder %s19, 1
      %p122 = por %p120, %p121
      %p124 = scmp.ne.s32.totalorder %s107, %s123
      %p125 = scmp.eq.s32.totalorder %s19, 0
      %p126 = por %p124, %p125
      %s127 = ssub.s32 %s20, %s32
      %s128 = ssub.s32 %s21, %s28
      %s129 = sor.u32 %s127, %s128
      %p130 = scmp.eq.s32.totalorder %s129, 0
      %s132 = sadd.s32 %s131, 1
      %s133 = scalar_select %p130, %s131, %s132
      %p136 = pneg %p130
      %p137 = scmp.eq.s32.totalorder %s13, 1
      %p138 = por %p136, %p137
      %p139 = scmp.ne.s32.totalorder %s131, %s134
      %p140 = scmp.eq.s32.totalorder %s13, 0
      %p141 = por %p139, %p140
      %p142 = scmp.ne.s32.totalorder %s131, %s134
      %p143 = scmp.eq.s32.totalorder %s18, 1
      %p144 = por %p142, %p143
      %p145 = scmp.ne.s32.totalorder %s134, %s135
      %p146 = scmp.eq.s32.totalorder %s18, 0
      %p147 = por %p145, %p146
      %p148 = scmp.ne.s32.totalorder %s134, %s135
      %p149 = scmp.eq.s32.totalorder %s19, 1
      %p150 = por %p148, %p149
      %p152 = scmp.ne.s32.totalorder %s135, %s151
      %p153 = scmp.eq.s32.totalorder %s19, 0
      %p154 = por %p152, %p153
      %p155 = scmp.le.s32.totalorder 1, %s13
      %p156 = scmp.lt.s32.totalorder %s13, 3
      %p157 = pnand %p155, %p156
      %p158 = pneg %p157
      // Predicated region
      $region9: #{forward.1} parent=5 // pred_check
        _
      $region10: #{forward.1} parent=5 // pred_check_branch
        %160 = sbr.rel (%p157) target = $region12
      $region11: #{forward.1} parent=5 // pred_region
        %s161 = ssub.s32 %s13, 1
        // Predicated region
        $region13: #{forward.1} parent=11 // pred_check
          %p162 = pneg %p72
        $region14: #{forward.1} parent=11 // pred_check_branch
          %164 = sbr.rel (%p162) target = $region16
        $region15: #{forward.1} parent=11 // pred_region
          _
        $region16: #{forward.1} parent=11 // pred_fallthru
          _
        // Predicated region
        $region17: #{forward.1} parent=11 // pred_check
          %p165 = pneg %p93
        $region18: #{forward.1} parent=11 // pred_check_branch
          %167 = sbr.rel (%p165) target = $region20
        $region19: #{forward.1} parent=11 // pred_region
          _
        $region20: #{forward.1} parent=11 // pred_fallthru
          _
        // Predicated region
        $region21: #{forward.1} parent=11 // pred_check
          %p168 = pneg %p119
        $region22: #{forward.1} parent=11 // pred_check_branch
          %170 = sbr.rel (%p168) target = $region24
        $region23: #{forward.1} parent=11 // pred_region
          %s171 = smul.u32 8, %s23
          %p172 = scmp.lt.s32.totalorder %s171, 7
          %s173 = scalar_select %p172, %s171, 7
          %s174 = smul.addr %s173, 8
          %s175 = scalar_lea.vmem %s3, %s174
          %s176 = smul.u32 8, %s23
        $region24: #{forward.1} parent=11 // pred_fallthru
          _
      $region12: #{forward.1} parent=5 // pred_fallthru
        _
      %p177 = scmp.lt.s32.totalorder %s13, 2
      // Predicated region
      $region25: #{forward.1} parent=5 // pred_check
        %p178 = pneg %p177
      $region26: #{forward.1} parent=5 // pred_check_branch
        %180 = sbr.rel (%p178) target = $region28
      $region27: #{forward.1} parent=5 // pred_region
        // Predicated region
        $region29: #{forward.1} parent=27 // pred_check
          %p181 = pneg %p45
        $region30: #{forward.1} parent=27 // pred_check_branch
          %183 = sbr.rel (%p181) target = $region32
        $region31: #{forward.1} parent=27 // pred_region
          %p184 = scmp.lt.s32.totalorder %s20, 1
          %s185 = scalar_select %p184, %s20, 1
          %s186 = smul.addr %s185, 20
          %s187 = smul.addr %s186, 4
          %s188 = scalar_lea.vmem %s0, %s187
        $region32: #{forward.1} parent=27 // pred_fallthru
          _
      $region28: #{forward.1} parent=5 // pred_fallthru
        _
      %p189 = scmp.le.s32.totalorder 1, %s13
      %p190 = scmp.lt.s32.totalorder %s13, 3
      %p191 = pnand %p189, %p190
      %p192 = pneg %p191
      // Predicated region
      $region33: #{forward.1} parent=5 // pred_check
        _
      $region34: #{forward.1} parent=5 // pred_check_branch
        %194 = sbr.rel (%p191) target = $region36
      $region35: #{forward.1} parent=5 // pred_region
        %s195 = ssub.s32 %s13, 1
        %p196 = scmp.lt.s32.totalorder %s22, 1
        %s197 = scalar_select %p196, %s22, 1
        %s198 = smul.addr %s197, 20
        %s199 = smul.addr %s198, 4
        %s200 = scalar_lea.vmem %s0, %s199
        %p201 = pneg %p51
        %p202 = pneg %p48
        %p203 = pneg %p72
        %p204 = pneg %p69
        %p205 = pneg %p93
        %p206 = pneg %p90
        %s207 = smul.u32 8, %s23
        %p208 = scmp.lt.s32.totalorder %s207, 7
        %s209 = scalar_select %p208, %s207, 7
        %s210 = smul.addr %s209, 8
        %s211 = scalar_lea.vmem %s3, %s210
        %p212 = pneg %p119
        %p213 = pneg %p116
        %p214 = pneg %p147
        %p215 = pneg %p144
        %s216 = sand.u32 %s134, 1
        %s217 = scalar_lea.sflag [#allocation4], %s216
        %s218 = sand.u32 %s134, 1
        %s219 = smul.addr %s218, 32
        %s220 = scalar_lea.vmem [#allocation3], %s219
        %p221 = scmp.lt.s32.totalorder %s22, 1
        %s222 = scalar_select %p221, %s22, 1
        %s223 = smul.addr %s222, 20
        %s224 = smul.addr %s223, 4
        %s225 = scalar_lea.vmem %s0, %s224
        %s226 = smul.u32 8, %s23
        %p227 = scmp.lt.s32.totalorder %s226, 7
        %s228 = scalar_select %p227, %s226, 7
        %s229 = smul.addr %s228, 8
        %s230 = scalar_lea.vmem %s3, %s229
        %s231 = smul.u32 8, %s23
        %s232 = smul.u32 8, %s23
        %s234 = smul.u32 %s23, 8
        %s235 = smul.u32 %s234, 2
        %s236 = smul.addr %s235, 4
        %s237 = scalar_lea.vmem %s225, %s236
        %v238 = vld [vmem:[%s237] sm:$0xf]
        %vm239 = vcmask 388096
        %240 = vst.msk [vmem:[#allocation2] sm:$0xf] %vm239, %v238
        %s241 = sadd.s32 %s234, 1
        %s242 = smul.u32 %s241, 2
        %s243 = smul.addr %s242, 4
        %s244 = scalar_lea.vmem %s225, %s243
        %v245 = vld [vmem:[%s244] sm:$0xf]
        %246 = vst.msk [vmem:[#allocation2 + $0x10] sm:$0xf] %vm239, %v245
        %s247 = sadd.s32 %s234, 2
        %s248 = smul.u32 %s247, 2
        %s249 = smul.addr %s248, 4
        %s250 = scalar_lea.vmem %s225, %s249
        %v251 = vld [vmem:[%s250] sm:$0xf]
        %252 = vst.msk [vmem:[#allocation2 + $0x20] sm:$0xf] %vm239, %v251
        %s253 = sadd.s32 %s234, 3
        %s254 = smul.u32 %s253, 2
        %s255 = smul.addr %s254, 4
        %s256 = scalar_lea.vmem %s225, %s255
        %v257 = vld [vmem:[%s256] sm:$0xf]
        %258 = vst.msk [vmem:[#allocation2 + $0x30] sm:$0xf] %vm239, %v257
        %s259 = sadd.s32 %s234, 4
        %s260 = smul.u32 %s259, 2
        %s261 = smul.addr %s260, 4
        %s262 = scalar_lea.vmem %s225, %s261
        %v263 = vld [vmem:[%s262] sm:$0xf]
        %264 = vst.msk [vmem:[#allocation2 + $0x40] sm:$0xf] %vm239, %v263
        %s265 = sadd.s32 %s234, 5
        %s266 = smul.u32 %s265, 2
        %s267 = smul.addr %s266, 4
        %s268 = scalar_lea.vmem %s225, %s267
        %v269 = vld [vmem:[%s268] sm:$0xf]
        %270 = vst.msk [vmem:[#allocation2 + $0x50] sm:$0xf] %vm239, %v269
        %s271 = sadd.s32 %s234, 6
        %s272 = smul.u32 %s271, 2
        %s273 = smul.addr %s272, 4
        %s274 = scalar_lea.vmem %s225, %s273
        %v275 = vld [vmem:[%s274] sm:$0xf]
        %276 = vst.msk [vmem:[#allocation2 + $0x60] sm:$0xf] %vm239, %v275
        %s277 = sadd.s32 %s234, 7
        %s278 = smul.u32 %s277, 2
        %s279 = smul.addr %s278, 4
        %s280 = scalar_lea.vmem %s225, %s279
        %v281 = vld [vmem:[%s280] sm:$0xf]
        %282 = vst.msk [vmem:[#allocation2 + $0x70] sm:$0xf] %vm239, %v281
        %v283 = vld [vmem:[%s237] sm:$0xf]
        %v284 = vld [vmem:[%s237 + $0x4] sm:$0x1]
        %vm285 = vsmask.f32 3328
        %vm286 = vsmask.f32 7440
        %vm287 = vmor %vm285, %vm286
        %v289 = vshrl.u32 %v283, 16
        %v291 = vrot.slane %v289, 4
        %v292 = vshll.u32 %v283, 16
        %v294 = vrot.slane %v292, 5
        %v295 = vor.u32 %v291, %v294
        %v296 = vrot.slane %v295, 4
        %v298 = vshll.u32 %v284, 16
        %v300 = vrot.slane %v298, 5
        %v301 = vsel %vm287, %v296, %v300
        %302 = vrot.lane.b32.xlu0 %v301, 48
        %v303 = vpop.permute.xlu0 %302
        %vm305 = vcmask 781696
        %306 = vst.msk [vmem:[#allocation2] sm:$0xf] %vm305, %v303
        %v307 = vld [vmem:[%s244] sm:$0xf]
        %v308 = vld [vmem:[%s244 + $0x4] sm:$0x1]
        %v310 = vshrl.u32 %v307, 16
        %v312 = vrot.slane %v310, 4
        %v313 = vshll.u32 %v307, 16
        %v315 = vrot.slane %v313, 5
        %v316 = vor.u32 %v312, %v315
        %v317 = vrot.slane %v316, 4
        %v319 = vshll.u32 %v308, 16
        %v321 = vrot.slane %v319, 5
        %v322 = vsel %vm287, %v317, %v321
        %323 = vrot.lane.b32.xlu0 %v322, 48
        %v324 = vpop.permute.xlu0 %323
        %326 = vst.msk [vmem:[#allocation2 + $0x10] sm:$0xf] %vm305, %v324
        %v327 = vld [vmem:[%s250] sm:$0xf]
        %v328 = vld [vmem:[%s250 + $0x4] sm:$0x1]
        %v330 = vshrl.u32 %v327, 16
        %v332 = vrot.slane %v330, 4
        %v333 = vshll.u32 %v327, 16
        %v335 = vrot.slane %v333, 5
        %v336 = vor.u32 %v332, %v335
        %v337 = vrot.slane %v336, 4
        %v339 = vshll.u32 %v328, 16
        %v341 = vrot.slane %v339, 5
        %v342 = vsel %vm287, %v337, %v341
        %343 = vrot.lane.b32.xlu0 %v342, 48
        %v344 = vpop.permute.xlu0 %343
        %346 = vst.msk [vmem:[#allocation2 + $0x20] sm:$0xf] %vm305, %v344
        %v347 = vld [vmem:[%s256] sm:$0xf]
        %v348 = vld [vmem:[%s256 + $0x4] sm:$0x1]
        %v350 = vshrl.u32 %v347, 16
        %v352 = vrot.slane %v350, 4
        %v353 = vshll.u32 %v347, 16
        %v355 = vrot.slane %v353, 5
        %v356 = vor.u32 %v352, %v355
        %v357 = vrot.slane %v356, 4
        %v359 = vshll.u32 %v348, 16
        %v361 = vrot.slane %v359, 5
        %v362 = vsel %vm287, %v357, %v361
        %363 = vrot.lane.b32.xlu0 %v362, 48
        %v364 = vpop.permute.xlu0 %363
        %366 = vst.msk [vmem:[#allocation2 + $0x30] sm:$0xf] %vm305, %v364
        %v367 = vld [vmem:[%s262] sm:$0xf]
        %v368 = vld [vmem:[%s262 + $0x4] sm:$0x1]
        %v370 = vshrl.u32 %v367, 16
        %v372 = vrot.slane %v370, 4
        %v373 = vshll.u32 %v367, 16
        %v375 = vrot.slane %v373, 5
        %v376 = vor.u32 %v372, %v375
        %v377 = vrot.slane %v376, 4
        %v379 = vshll.u32 %v368, 16
        %v381 = vrot.slane %v379, 5
        %v382 = vsel %vm287, %v377, %v381
        %383 = vrot.lane.b32.xlu0 %v382, 48
        %v384 = vpop.permute.xlu0 %383
        %386 = vst.msk [vmem:[#allocation2 + $0x40] sm:$0xf] %vm305, %v384
        %v387 = vld [vmem:[%s268] sm:$0xf]
        %v388 = vld [vmem:[%s268 + $0x4] sm:$0x1]
        %v390 = vshrl.u32 %v387, 16
        %v392 = vrot.slane %v390, 4
        %v393 = vshll.u32 %v387, 16
        %v395 = vrot.slane %v393, 5
        %v396 = vor.u32 %v392, %v395
        %v397 = vrot.slane %v396, 4
        %v399 = vshll.u32 %v388, 16
        %v401 = vrot.slane %v399, 5
        %v402 = vsel %vm287, %v397, %v401
        %403 = vrot.lane.b32.xlu0 %v402, 48
        %v404 = vpop.permute.xlu0 %403
        %406 = vst.msk [vmem:[#allocation2 + $0x50] sm:$0xf] %vm305, %v404
        %v407 = vld [vmem:[%s274] sm:$0xf]
        %v408 = vld [vmem:[%s274 + $0x4] sm:$0x1]
        %v410 = vshrl.u32 %v407, 16
        %v412 = vrot.slane %v410, 4
        %v413 = vshll.u32 %v407, 16
        %v415 = vrot.slane %v413, 5
        %v416 = vor.u32 %v412, %v415
        %v417 = vrot.slane %v416, 4
        %v419 = vshll.u32 %v408, 16
        %v421 = vrot.slane %v419, 5
        %v422 = vsel %vm287, %v417, %v421
        %423 = vrot.lane.b32.xlu0 %v422, 48
        %v424 = vpop.permute.xlu0 %423
        %426 = vst.msk [vmem:[#allocation2 + $0x60] sm:$0xf] %vm305, %v424
        %v427 = vld [vmem:[%s280] sm:$0xf]
        %v428 = vld [vmem:[%s280 + $0x4] sm:$0x1]
        %v430 = vshrl.u32 %v427, 16
        %v432 = vrot.slane %v430, 4
        %v433 = vshll.u32 %v427, 16
        %v435 = vrot.slane %v433, 5
        %v436 = vor.u32 %v432, %v435
        %v437 = vrot.slane %v436, 4
        %v439 = vshll.u32 %v428, 16
        %v441 = vrot.slane %v439, 5
        %v442 = vsel %vm287, %v437, %v441
        %443 = vrot.lane.b32.xlu0 %v442, 48
        %v444 = vpop.permute.xlu0 %443
        %446 = vst.msk [vmem:[#allocation2 + $0x70] sm:$0xf] %vm305, %v444
        %v447 = vld [vmem:[%s237] sm:$0xe]
        %v448 = vld [vmem:[%s237 + $0x4] sm:$0x1]
        %vm451 = vcmask 1042432
        %vm452 = vcmask 1046532
        %vm453 = vmor %vm451, %vm452
        %v454 = vrot.slane %v447, 5
        %v455 = vrot.slane %v454, 4
        %v456 = vrot.slane %v448, 5
        %v457 = vsel %vm453, %v455, %v456
        %458 = vrot.lane.b32.xlu0 %v457, 96
        %v459 = vpop.permute.xlu0 %458
        %v460 = vrot.slane %v459, 4
        %vm461 = vcmask 785408
        %v462 = vsel %vm461, %v460, %v459
        %vm464 = vcmask 1044224
        %vm465 = vcmask 130052
        %vm466 = vmor %vm465, %vm464
        %467 = vst.msk [vmem:[#allocation2] sm:$0xff] %vm466, %v462
        %v468 = vld [vmem:[%s244] sm:$0xe]
        %v469 = vld [vmem:[%s244 + $0x4] sm:$0x1]
        %v472 = vrot.slane %v468, 5
        %v473 = vrot.slane %v472, 4
        %v474 = vrot.slane %v469, 5
        %v475 = vsel %vm453, %v473, %v474
        %476 = vrot.lane.b32.xlu0 %v475, 96
        %v477 = vpop.permute.xlu0 %476
        %v478 = vrot.slane %v477, 4
        %v479 = vsel %vm461, %v478, %v477
        %481 = vst.msk [vmem:[#allocation2 + $0x10] sm:$0xff] %vm466, %v479
        %v482 = vld [vmem:[%s250] sm:$0xe]
        %v483 = vld [vmem:[%s250 + $0x4] sm:$0x1]
        %v486 = vrot.slane %v482, 5
        %v487 = vrot.slane %v486, 4
        %v488 = vrot.slane %v483, 5
        %v489 = vsel %vm453, %v487, %v488
        %490 = vrot.lane.b32.xlu0 %v489, 96
        %v491 = vpop.permute.xlu0 %490
        %v492 = vrot.slane %v491, 4
        %v493 = vsel %vm461, %v492, %v491
        %495 = vst.msk [vmem:[#allocation2 + $0x20] sm:$0xff] %vm466, %v493
        %v496 = vld [vmem:[%s256] sm:$0xe]
        %v497 = vld [vmem:[%s256 + $0x4] sm:$0x1]
        %v500 = vrot.slane %v496, 5
        %v501 = vrot.slane %v500, 4
        %v502 = vrot.slane %v497, 5
        %v503 = vsel %vm453, %v501, %v502
        %504 = vrot.lane.b32.xlu0 %v503, 96
        %v505 = vpop.permute.xlu0 %504
        %v506 = vrot.slane %v505, 4
        %v507 = vsel %vm461, %v506, %v505
        %509 = vst.msk [vmem:[#allocation2 + $0x30] sm:$0xff] %vm466, %v507
        %v510 = vld [vmem:[%s262] sm:$0xe]
        %v511 = vld [vmem:[%s262 + $0x4] sm:$0x1]
        %v514 = vrot.slane %v510, 5
        %v515 = vrot.slane %v514, 4
        %v516 = vrot.slane %v511, 5
        %v517 = vsel %vm453, %v515, %v516
        %518 = vrot.lane.b32.xlu0 %v517, 96
        %v519 = vpop.permute.xlu0 %518
        %v520 = vrot.slane %v519, 4
        %v521 = vsel %vm461, %v520, %v519
        %523 = vst.msk [vmem:[#allocation2 + $0x40] sm:$0xff] %vm466, %v521
        %v524 = vld [vmem:[%s268] sm:$0xe]
        %v525 = vld [vmem:[%s268 + $0x4] sm:$0x1]
        %v528 = vrot.slane %v524, 5
        %v529 = vrot.slane %v528, 4
        %v530 = vrot.slane %v525, 5
        %v531 = vsel %vm453, %v529, %v530
        %532 = vrot.lane.b32.xlu0 %v531, 96
        %v533 = vpop.permute.xlu0 %532
        %v534 = vrot.slane %v533, 4
        %v535 = vsel %vm461, %v534, %v533
        %537 = vst.msk [vmem:[#allocation2 + $0x50] sm:$0xff] %vm466, %v535
        %v538 = vld [vmem:[%s274] sm:$0xe]
        %v539 = vld [vmem:[%s274 + $0x4] sm:$0x1]
        %v542 = vrot.slane %v538, 5
        %v543 = vrot.slane %v542, 4
        %v544 = vrot.slane %v539, 5
        %v545 = vsel %vm453, %v543, %v544
        %546 = vrot.lane.b32.xlu0 %v545, 96
        %v547 = vpop.permute.xlu0 %546
        %v548 = vrot.slane %v547, 4
        %v549 = vsel %vm461, %v548, %v547
        %551 = vst.msk [vmem:[#allocation2 + $0x60] sm:$0xff] %vm466, %v549
        %v552 = vld [vmem:[%s280] sm:$0xe]
        %v553 = vld [vmem:[%s280 + $0x4] sm:$0x1]
        %v556 = vrot.slane %v552, 5
        %v557 = vrot.slane %v556, 4
        %v558 = vrot.slane %v553, 5
        %v559 = vsel %vm453, %v557, %v558
        %560 = vrot.lane.b32.xlu0 %v559, 96
        %v561 = vpop.permute.xlu0 %560
        %v562 = vrot.slane %v561, 4
        %v563 = vsel %vm461, %v562, %v561
        %565 = vst.msk [vmem:[#allocation2 + $0x70] sm:$0xff] %vm466, %v563
        %v566 = vld [vmem:[%s244] sm:$0xf]
        %568 = vrot.lane.b32.xlu0 %v566, 16
        %v569 = vpop.permute.xlu0 %568
        %vm571 = vcmask 519296
        %572 = vst.msk [vmem:[#allocation2 + $0x4] sm:$0xf] %vm571, %v569
        %v573 = vld [vmem:[%s250] sm:$0xf]
        %575 = vrot.lane.b32.xlu0 %v573, 16
        %v576 = vpop.permute.xlu0 %575
        %578 = vst.msk [vmem:[#allocation2 + $0x14] sm:$0xf] %vm571, %v576
        %v579 = vld [vmem:[%s256] sm:$0xf]
        %581 = vrot.lane.b32.xlu0 %v579, 16
        %v582 = vpop.permute.xlu0 %581
        %584 = vst.msk [vmem:[#allocation2 + $0x24] sm:$0xf] %vm571, %v582
        %v585 = vld [vmem:[%s262] sm:$0xf]
        %587 = vrot.lane.b32.xlu0 %v585, 16
        %v588 = vpop.permute.xlu0 %587
        %590 = vst.msk [vmem:[#allocation2 + $0x34] sm:$0xf] %vm571, %v588
        %v591 = vld [vmem:[%s268] sm:$0xf]
        %593 = vrot.lane.b32.xlu0 %v591, 16
        %v594 = vpop.permute.xlu0 %593
        %596 = vst.msk [vmem:[#allocation2 + $0x44] sm:$0xf] %vm571, %v594
        %v597 = vld [vmem:[%s274] sm:$0xf]
        %599 = vrot.lane.b32.xlu0 %v597, 16
        %v600 = vpop.permute.xlu0 %599
        %602 = vst.msk [vmem:[#allocation2 + $0x54] sm:$0xf] %vm571, %v600
        %v603 = vld [vmem:[%s280] sm:$0xf]
        %605 = vrot.lane.b32.xlu0 %v603, 16
        %v606 = vpop.permute.xlu0 %605
        %608 = vst.msk [vmem:[#allocation2 + $0x64] sm:$0xf] %vm571, %v606
        %s609 = sadd.s32 %s234, 8
        %s610 = smul.u32 %s609, 2
        %s611 = smul.addr %s610, 4
        %s612 = scalar_lea.vmem %s225, %s611
        %v613 = vld [vmem:[%s612] sm:$0xf]
        %615 = vrot.lane.b32.xlu0 %v613, 16
        %v616 = vpop.permute.xlu0 %615
        %618 = vst.msk [vmem:[#allocation2 + $0x74] sm:$0xf] %vm571, %v616
        %v619 = vld [vmem:[%s244] sm:$0xf]
        %v620 = vld [vmem:[%s244 + $0x4] sm:$0x1]
        %v622 = vshrl.u32 %v619, 16
        %v624 = vrot.slane %v622, 4
        %v625 = vshll.u32 %v619, 16
        %v627 = vrot.slane %v625, 5
        %v628 = vor.u32 %v624, %v627
        %v629 = vrot.slane %v628, 4
        %v631 = vshll.u32 %v620, 16
        %v633 = vrot.slane %v631, 5
        %v634 = vsel %vm287, %v629, %v633
        %635 = vrot.lane.b32.xlu0 %v634, 64
        %v636 = vpop.permute.xlu0 %635
        %vm638 = vcmask 912896
        %639 = vst.msk [vmem:[#allocation2 + $0x4] sm:$0xf] %vm638, %v636
        %v640 = vld [vmem:[%s250] sm:$0xf]
        %v641 = vld [vmem:[%s250 + $0x4] sm:$0x1]
        %v643 = vshrl.u32 %v640, 16
        %v645 = vrot.slane %v643, 4
        %v646 = vshll.u32 %v640, 16
        %v648 = vrot.slane %v646, 5
        %v649 = vor.u32 %v645, %v648
        %v650 = vrot.slane %v649, 4
        %v652 = vshll.u32 %v641, 16
        %v654 = vrot.slane %v652, 5
        %v655 = vsel %vm287, %v650, %v654
        %656 = vrot.lane.b32.xlu0 %v655, 64
        %v657 = vpop.permute.xlu0 %656
        %659 = vst.msk [vmem:[#allocation2 + $0x14] sm:$0xf] %vm638, %v657
        %v660 = vld [vmem:[%s256] sm:$0xf]
        %v661 = vld [vmem:[%s256 + $0x4] sm:$0x1]
        %v663 = vshrl.u32 %v660, 16
        %v665 = vrot.slane %v663, 4
        %v666 = vshll.u32 %v660, 16
        %v668 = vrot.slane %v666, 5
        %v669 = vor.u32 %v665, %v668
        %v670 = vrot.slane %v669, 4
        %v672 = vshll.u32 %v661, 16
        %v674 = vrot.slane %v672, 5
        %v675 = vsel %vm287, %v670, %v674
        %676 = vrot.lane.b32.xlu0 %v675, 64
        %v677 = vpop.permute.xlu0 %676
        %679 = vst.msk [vmem:[#allocation2 + $0x24] sm:$0xf] %vm638, %v677
        %v680 = vld [vmem:[%s262] sm:$0xf]
        %v681 = vld [vmem:[%s262 + $0x4] sm:$0x1]
        %v683 = vshrl.u32 %v680, 16
        %v685 = vrot.slane %v683, 4
        %v686 = vshll.u32 %v680, 16
        %v688 = vrot.slane %v686, 5
        %v689 = vor.u32 %v685, %v688
        %v690 = vrot.slane %v689, 4
        %v692 = vshll.u32 %v681, 16
        %v694 = vrot.slane %v692, 5
        %v695 = vsel %vm287, %v690, %v694
        %696 = vrot.lane.b32.xlu0 %v695, 64
        %v697 = vpop.permute.xlu0 %696
        %699 = vst.msk [vmem:[#allocation2 + $0x34] sm:$0xf] %vm638, %v697
        %v700 = vld [vmem:[%s268] sm:$0xf]
        %v701 = vld [vmem:[%s268 + $0x4] sm:$0x1]
        %v703 = vshrl.u32 %v700, 16
        %v705 = vrot.slane %v703, 4
        %v706 = vshll.u32 %v700, 16
        %v708 = vrot.slane %v706, 5
        %v709 = vor.u32 %v705, %v708
        %v710 = vrot.slane %v709, 4
        %v712 = vshll.u32 %v701, 16
        %v714 = vrot.slane %v712, 5
        %v715 = vsel %vm287, %v710, %v714
        %716 = vrot.lane.b32.xlu0 %v715, 64
        %v717 = vpop.permute.xlu0 %716
        %719 = vst.msk [vmem:[#allocation2 + $0x44] sm:$0xf] %vm638, %v717
        %v720 = vld [vmem:[%s274] sm:$0xf]
        %v721 = vld [vmem:[%s274 + $0x4] sm:$0x1]
        %v723 = vshrl.u32 %v720, 16
        %v725 = vrot.slane %v723, 4
        %v726 = vshll.u32 %v720, 16
        %v728 = vrot.slane %v726, 5
        %v729 = vor.u32 %v725, %v728
        %v730 = vrot.slane %v729, 4
        %v732 = vshll.u32 %v721, 16
        %v734 = vrot.slane %v732, 5
        %v735 = vsel %vm287, %v730, %v734
        %736 = vrot.lane.b32.xlu0 %v735, 64
        %v737 = vpop.permute.xlu0 %736
        %739 = vst.msk [vmem:[#allocation2 + $0x54] sm:$0xf] %vm638, %v737
        %v740 = vld [vmem:[%s280] sm:$0xf]
        %v741 = vld [vmem:[%s280 + $0x4] sm:$0x1]
        %v743 = vshrl.u32 %v740, 16
        %v745 = vrot.slane %v743, 4
        %v746 = vshll.u32 %v740, 16
        %v748 = vrot.slane %v746, 5
        %v749 = vor.u32 %v745, %v748
        %v750 = vrot.slane %v749, 4
        %v752 = vshll.u32 %v741, 16
        %v754 = vrot.slane %v752, 5
        %v755 = vsel %vm287, %v750, %v754
        %756 = vrot.lane.b32.xlu0 %v755, 64
        %v757 = vpop.permute.xlu0 %756
        %759 = vst.msk [vmem:[#allocation2 + $0x64] sm:$0xf] %vm638, %v757
        %v760 = vld [vmem:[%s612] sm:$0xf]
        %v761 = vld [vmem:[%s612 + $0x4] sm:$0x1]
        %v763 = vshrl.u32 %v760, 16
        %v765 = vrot.slane %v763, 4
        %v766 = vshll.u32 %v760, 16
        %v768 = vrot.slane %v766, 5
        %v769 = vor.u32 %v765, %v768
        %v770 = vrot.slane %v769, 4
        %v772 = vshll.u32 %v761, 16
        %v774 = vrot.slane %v772, 5
        %v775 = vsel %vm287, %v770, %v774
        %776 = vrot.lane.b32.xlu0 %v775, 64
        %v777 = vpop.permute.xlu0 %776
        %779 = vst.msk [vmem:[#allocation2 + $0x74] sm:$0xf] %vm638, %v777
        %v780 = vld [vmem:[%s244] sm:$0xe]
        %v781 = vld [vmem:[%s244 + $0x4] sm:$0x1]
        %v784 = vrot.slane %v780, 5
        %v785 = vrot.slane %v784, 4
        %v786 = vrot.slane %v781, 5
        %v787 = vsel %vm453, %v785, %v786
        %788 = vrot.lane.b32.xlu0 %v787, 112
        %v789 = vpop.permute.xlu0 %788
        %v790 = vrot.slane %v789, 4
        %vm791 = vcmask 916480
        %v792 = vsel %vm791, %v790, %v789
        %vm794 = vcmask 1044352
        %vm795 = vcmask 261124
        %vm796 = vmor %vm795, %vm794
        %797 = vst.msk [vmem:[#allocation2 + $0x4] sm:$0xff] %vm796, %v792
        %v798 = vld [vmem:[%s250] sm:$0xe]
        %v799 = vld [vmem:[%s250 + $0x4] sm:$0x1]
        %v802 = vrot.slane %v798, 5
        %v803 = vrot.slane %v802, 4
        %v804 = vrot.slane %v799, 5
        %v805 = vsel %vm453, %v803, %v804
        %806 = vrot.lane.b32.xlu0 %v805, 112
        %v807 = vpop.permute.xlu0 %806
        %v808 = vrot.slane %v807, 4
        %v809 = vsel %vm791, %v808, %v807
        %811 = vst.msk [vmem:[#allocation2 + $0x14] sm:$0xff] %vm796, %v809
        %v812 = vld [vmem:[%s256] sm:$0xe]
        %v813 = vld [vmem:[%s256 + $0x4] sm:$0x1]
        %v816 = vrot.slane %v812, 5
        %v817 = vrot.slane %v816, 4
        %v818 = vrot.slane %v813, 5
        %v819 = vsel %vm453, %v817, %v818
        %820 = vrot.lane.b32.xlu0 %v819, 112
        %v821 = vpop.permute.xlu0 %820
        %v822 = vrot.slane %v821, 4
        %v823 = vsel %vm791, %v822, %v821
        %825 = vst.msk [vmem:[#allocation2 + $0x24] sm:$0xff] %vm796, %v823
        %v826 = vld [vmem:[%s262] sm:$0xe]
        %v827 = vld [vmem:[%s262 + $0x4] sm:$0x1]
        %v830 = vrot.slane %v826, 5
        %v831 = vrot.slane %v830, 4
        %v832 = vrot.slane %v827, 5
        %v833 = vsel %vm453, %v831, %v832
        %834 = vrot.lane.b32.xlu0 %v833, 112
        %v835 = vpop.permute.xlu0 %834
        %v836 = vrot.slane %v835, 4
        %v837 = vsel %vm791, %v836, %v835
        %839 = vst.msk [vmem:[#allocation2 + $0x34] sm:$0xff] %vm796, %v837
        %v840 = vld [vmem:[%s268] sm:$0xe]
        %v841 = vld [vmem:[%s268 + $0x4] sm:$0x1]
        %v844 = vrot.slane %v840, 5
        %v845 = vrot.slane %v844, 4
        %v846 = vrot.slane %v841, 5
        %v847 = vsel %vm453, %v845, %v846
        %848 = vrot.lane.b32.xlu0 %v847, 112
        %v849 = vpop.permute.xlu0 %848
        %v850 = vrot.slane %v849, 4
        %v851 = vsel %vm791, %v850, %v849
        %853 = vst.msk [vmem:[#allocation2 + $0x44] sm:$0xff] %vm796, %v851
        %v854 = vld [vmem:[%s274] sm:$0xe]
        %v855 = vld [vmem:[%s274 + $0x4] sm:$0x1]
        %v858 = vrot.slane %v854, 5
        %v859 = vrot.slane %v858, 4
        %v860 = vrot.slane %v855, 5
        %v861 = vsel %vm453, %v859, %v860
        %862 = vrot.lane.b32.xlu0 %v861, 112
        %v863 = vpop.permute.xlu0 %862
        %v864 = vrot.slane %v863, 4
        %v865 = vsel %vm791, %v864, %v863
        %867 = vst.msk [vmem:[#allocation2 + $0x54] sm:$0xff] %vm796, %v865
        %v868 = vld [vmem:[%s280] sm:$0xe]
        %v869 = vld [vmem:[%s280 + $0x4] sm:$0x1]
        %v872 = vrot.slane %v868, 5
        %v873 = vrot.slane %v872, 4
        %v874 = vrot.slane %v869, 5
        %v875 = vsel %vm453, %v873, %v874
        %876 = vrot.lane.b32.xlu0 %v875, 112
        %v877 = vpop.permute.xlu0 %876
        %v878 = vrot.slane %v877, 4
        %v879 = vsel %vm791, %v878, %v877
        %881 = vst.msk [vmem:[#allocation2 + $0x64] sm:$0xff] %vm796, %v879
        %v882 = vld [vmem:[%s612] sm:$0xe]
        %v883 = vld [vmem:[%s612 + $0x4] sm:$0x1]
        %v886 = vrot.slane %v882, 5
        %v887 = vrot.slane %v886, 4
        %v888 = vrot.slane %v883, 5
        %v889 = vsel %vm453, %v887, %v888
        %890 = vrot.lane.b32.xlu0 %v889, 112
        %v891 = vpop.permute.xlu0 %890
        %v892 = vrot.slane %v891, 4
        %v893 = vsel %vm791, %v892, %v891
        %895 = vst.msk [vmem:[#allocation2 + $0x74] sm:$0xff] %vm796, %v893
        %v896 = vld [vmem:[%s250] sm:$0xf]
        %898 = vrot.lane.b32.xlu0 %v896, 32
        %v899 = vpop.permute.xlu0 %898
        %vm901 = vcmask 650496
        %902 = vst.msk [vmem:[#allocation2 + $0x8] sm:$0xf] %vm901, %v899
        %v903 = vld [vmem:[%s256] sm:$0xf]
        %905 = vrot.lane.b32.xlu0 %v903, 32
        %v906 = vpop.permute.xlu0 %905
        %908 = vst.msk [vmem:[#allocation2 + $0x18] sm:$0xf] %vm901, %v906
        %v909 = vld [vmem:[%s262] sm:$0xf]
        %911 = vrot.lane.b32.xlu0 %v909, 32
        %v912 = vpop.permute.xlu0 %911
        %914 = vst.msk [vmem:[#allocation2 + $0x28] sm:$0xf] %vm901, %v912
        %v915 = vld [vmem:[%s268] sm:$0xf]
        %917 = vrot.lane.b32.xlu0 %v915, 32
        %v918 = vpop.permute.xlu0 %917
        %920 = vst.msk [vmem:[#allocation2 + $0x38] sm:$0xf] %vm901, %v918
        %v921 = vld [vmem:[%s274] sm:$0xf]
        %923 = vrot.lane.b32.xlu0 %v921, 32
        %v924 = vpop.permute.xlu0 %923
        %926 = vst.msk [vmem:[#allocation2 + $0x48] sm:$0xf] %vm901, %v924
        %v927 = vld [vmem:[%s280] sm:$0xf]
        %929 = vrot.lane.b32.xlu0 %v927, 32
        %v930 = vpop.permute.xlu0 %929
        %932 = vst.msk [vmem:[#allocation2 + $0x58] sm:$0xf] %vm901, %v930
        %v933 = vld [vmem:[%s612] sm:$0xf]
        %935 = vrot.lane.b32.xlu0 %v933, 32
        %v936 = vpop.permute.xlu0 %935
        %938 = vst.msk [vmem:[#allocation2 + $0x68] sm:$0xf] %vm901, %v936
        %s939 = sadd.s32 %s234, 9
        %s940 = smul.u32 %s939, 2
        %s941 = smul.addr %s940, 4
        %s942 = scalar_lea.vmem %s225, %s941
        %v943 = vld [vmem:[%s942] sm:$0xf]
        %945 = vrot.lane.b32.xlu0 %v943, 32
        %v946 = vpop.permute.xlu0 %945
        %948 = vst.msk [vmem:[#allocation2 + $0x78] sm:$0xf] %vm901, %v946
        %v949 = vld [vmem:[%s250] sm:$0xf]
        %v950 = vld [vmem:[%s250 + $0x4] sm:$0x1]
        %v952 = vshrl.u32 %v949, 16
        %v954 = vrot.slane %v952, 4
        %v955 = vshll.u32 %v949, 16
        %v957 = vrot.slane %v955, 5
        %v958 = vor.u32 %v954, %v957
        %v959 = vrot.slane %v958, 4
        %v961 = vshll.u32 %v950, 16
        %v963 = vrot.slane %v961, 5
        %v964 = vsel %vm287, %v959, %v963
        %965 = vrot.lane.b32.xlu0 %v964, 80
        %v966 = vpop.permute.xlu0 %965
        %vm968 = vcmask 1044096
        %969 = vst.msk [vmem:[#allocation2 + $0x8] sm:$0xf] %vm968, %v966
        %v970 = vld [vmem:[%s256] sm:$0xf]
        %v971 = vld [vmem:[%s256 + $0x4] sm:$0x1]
        %v973 = vshrl.u32 %v970, 16
        %v975 = vrot.slane %v973, 4
        %v976 = vshll.u32 %v970, 16
        %v978 = vrot.slane %v976, 5
        %v979 = vor.u32 %v975, %v978
        %v980 = vrot.slane %v979, 4
        %v982 = vshll.u32 %v971, 16
        %v984 = vrot.slane %v982, 5
        %v985 = vsel %vm287, %v980, %v984
        %986 = vrot.lane.b32.xlu0 %v985, 80
        %v987 = vpop.permute.xlu0 %986
        %989 = vst.msk [vmem:[#allocation2 + $0x18] sm:$0xf] %vm968, %v987
        %v990 = vld [vmem:[%s262] sm:$0xf]
        %v991 = vld [vmem:[%s262 + $0x4] sm:$0x1]
        %v993 = vshrl.u32 %v990, 16
        %v995 = vrot.slane %v993, 4
        %v996 = vshll.u32 %v990, 16
        %v998 = vrot.slane %v996, 5
        %v999 = vor.u32 %v995, %v998
        %v1000 = vrot.slane %v999, 4
        %v1002 = vshll.u32 %v991, 16
        %v1004 = vrot.slane %v1002, 5
        %v1005 = vsel %vm287, %v1000, %v1004
        %1006 = vrot.lane.b32.xlu0 %v1005, 80
        %v1007 = vpop.permute.xlu0 %1006
        %1009 = vst.msk [vmem:[#allocation2 + $0x28] sm:$0xf] %vm968, %v1007
        %v1010 = vld [vmem:[%s268] sm:$0xf]
        %v1011 = vld [vmem:[%s268 + $0x4] sm:$0x1]
        %v1013 = vshrl.u32 %v1010, 16
        %v1015 = vrot.slane %v1013, 4
        %v1016 = vshll.u32 %v1010, 16
        %v1018 = vrot.slane %v1016, 5
        %v1019 = vor.u32 %v1015, %v1018
        %v1020 = vrot.slane %v1019, 4
        %v1022 = vshll.u32 %v1011, 16
        %v1024 = vrot.slane %v1022, 5
        %v1025 = vsel %vm287, %v1020, %v1024
        %1026 = vrot.lane.b32.xlu0 %v1025, 80
        %v1027 = vpop.permute.xlu0 %1026
        %1029 = vst.msk [vmem:[#allocation2 + $0x38] sm:$0xf] %vm968, %v1027
        %v1030 = vld [vmem:[%s274] sm:$0xf]
        %v1031 = vld [vmem:[%s274 + $0x4] sm:$0x1]
        %v1033 = vshrl.u32 %v1030, 16
        %v1035 = vrot.slane %v1033, 4
        %v1036 = vshll.u32 %v1030, 16
        %v1038 = vrot.slane %v1036, 5
        %v1039 = vor.u32 %v1035, %v1038
        %v1040 = vrot.slane %v1039, 4
        %v1042 = vshll.u32 %v1031, 16
        %v1044 = vrot.slane %v1042, 5
        %v1045 = vsel %vm287, %v1040, %v1044
        %1046 = vrot.lane.b32.xlu0 %v1045, 80
        %v1047 = vpop.permute.xlu0 %1046
        %1049 = vst.msk [vmem:[#allocation2 + $0x48] sm:$0xf] %vm968, %v1047
        %v1050 = vld [vmem:[%s280] sm:$0xf]
        %v1051 = vld [vmem:[%s280 + $0x4] sm:$0x1]
        %v1053 = vshrl.u32 %v1050, 16
        %v1055 = vrot.slane %v1053, 4
        %v1056 = vshll.u32 %v1050, 16
        %v1058 = vrot.slane %v1056, 5
        %v1059 = vor.u32 %v1055, %v1058
        %v1060 = vrot.slane %v1059, 4
        %v1062 = vshll.u32 %v1051, 16
        %v1064 = vrot.slane %v1062, 5
        %v1065 = vsel %vm287, %v1060, %v1064
        %1066 = vrot.lane.b32.xlu0 %v1065, 80
        %v1067 = vpop.permute.xlu0 %1066
        %1069 = vst.msk [vmem:[#allocation2 + $0x58] sm:$0xf] %vm968, %v1067
        %v1070 = vld [vmem:[%s612] sm:$0xf]
        %v1071 = vld [vmem:[%s612 + $0x4] sm:$0x1]
        %v1073 = vshrl.u32 %v1070, 16
        %v1075 = vrot.slane %v1073, 4
        %v1076 = vshll.u32 %v1070, 16
        %v1078 = vrot.slane %v1076, 5
        %v1079 = vor.u32 %v1075, %v1078
        %v1080 = vrot.slane %v1079, 4
        %v1082 = vshll.u32 %v1071, 16
        %v1084 = vrot.slane %v1082, 5
        %v1085 = vsel %vm287, %v1080, %v1084
        %1086 = vrot.lane.b32.xlu0 %v1085, 80
        %v1087 = vpop.permute.xlu0 %1086
        %1089 = vst.msk [vmem:[#allocation2 + $0x68] sm:$0xf] %vm968, %v1087
        %v1090 = vld [vmem:[%s942] sm:$0xf]
        %v1091 = vld [vmem:[%s942 + $0x4] sm:$0x1]
        %v1093 = vshrl.u32 %v1090, 16
        %v1095 = vrot.slane %v1093, 4
        %v1096 = vshll.u32 %v1090, 16
        %v1098 = vrot.slane %v1096, 5
        %v1099 = vor.u32 %v1095, %v1098
        %v1100 = vrot.slane %v1099, 4
        %v1102 = vshll.u32 %v1091, 16
        %v1104 = vrot.slane %v1102, 5
        %v1105 = vsel %vm287, %v1100, %v1104
        %1106 = vrot.lane.b32.xlu0 %v1105, 80
        %v1107 = vpop.permute.xlu0 %1106
        %1109 = vst.msk [vmem:[#allocation2 + $0x78] sm:$0xf] %vm968, %v1107
        %v1110 = vld [vmem:[%s250] sm:$0xe]
        %v1111 = vld [vmem:[%s250 + $0x4] sm:$0x1]
        %v1114 = vrot.slane %v1110, 5
        %v1115 = vrot.slane %v1114, 4
        %v1116 = vrot.slane %v1111, 5
        %v1117 = vsel %vm453, %v1115, %v1116
        %1119 = vst.msk [vmem:[#allocation2 + $0xc] sm:$0xf] %vm239, %v1117
        %v1120 = vld [vmem:[%s256] sm:$0xe]
        %v1121 = vld [vmem:[%s256 + $0x4] sm:$0x1]
        %v1124 = vrot.slane %v1120, 5
        %v1125 = vrot.slane %v1124, 4
        %v1126 = vrot.slane %v1121, 5
        %v1127 = vsel %vm453, %v1125, %v1126
        %1129 = vst.msk [vmem:[#allocation2 + $0x1c] sm:$0xf] %vm239, %v1127
        %v1130 = vld [vmem:[%s262] sm:$0xe]
        %v1131 = vld [vmem:[%s262 + $0x4] sm:$0x1]
        %v1134 = vrot.slane %v1130, 5
        %v1135 = vrot.slane %v1134, 4
        %v1136 = vrot.slane %v1131, 5
        %v1137 = vsel %vm453, %v1135, %v1136
        %1139 = vst.msk [vmem:[#allocation2 + $0x2c] sm:$0xf] %vm239, %v1137
        %v1140 = vld [vmem:[%s268] sm:$0xe]
        %v1141 = vld [vmem:[%s268 + $0x4] sm:$0x1]
        %v1144 = vrot.slane %v1140, 5
        %v1145 = vrot.slane %v1144, 4
        %v1146 = vrot.slane %v1141, 5
        %v1147 = vsel %vm453, %v1145, %v1146
        %1149 = vst.msk [vmem:[#allocation2 + $0x3c] sm:$0xf] %vm239, %v1147
        %v1150 = vld [vmem:[%s274] sm:$0xe]
        %v1151 = vld [vmem:[%s274 + $0x4] sm:$0x1]
        %v1154 = vrot.slane %v1150, 5
        %v1155 = vrot.slane %v1154, 4
        %v1156 = vrot.slane %v1151, 5
        %v1157 = vsel %vm453, %v1155, %v1156
        %1159 = vst.msk [vmem:[#allocation2 + $0x4c] sm:$0xf] %vm239, %v1157
        %v1160 = vld [vmem:[%s280] sm:$0xe]
        %v1161 = vld [vmem:[%s280 + $0x4] sm:$0x1]
        %v1164 = vrot.slane %v1160, 5
        %v1165 = vrot.slane %v1164, 4
        %v1166 = vrot.slane %v1161, 5
        %v1167 = vsel %vm453, %v1165, %v1166
        %1169 = vst.msk [vmem:[#allocation2 + $0x5c] sm:$0xf] %vm239, %v1167
        %v1170 = vld [vmem:[%s612] sm:$0xe]
        %v1171 = vld [vmem:[%s612 + $0x4] sm:$0x1]
        %v1174 = vrot.slane %v1170, 5
        %v1175 = vrot.slane %v1174, 4
        %v1176 = vrot.slane %v1171, 5
        %v1177 = vsel %vm453, %v1175, %v1176
        %1179 = vst.msk [vmem:[#allocation2 + $0x6c] sm:$0xf] %vm239, %v1177
        %v1180 = vld [vmem:[%s942] sm:$0xe]
        %v1181 = vld [vmem:[%s942 + $0x4] sm:$0x1]
        %v1184 = vrot.slane %v1180, 5
        %v1185 = vrot.slane %v1184, 4
        %v1186 = vrot.slane %v1181, 5
        %v1187 = vsel %vm453, %v1185, %v1186
        %1189 = vst.msk [vmem:[#allocation2 + $0x7c] sm:$0xf] %vm239, %v1187
        %v1190 = vld [vmem:[#allocation2] sm:$0xff]
        %v1191 = vld [vmem:[#allocation2 + $0x8] sm:$0xff]
        %v1192 = vld [vmem:[#allocation2 + $0x10] sm:$0xff]
        %v1193 = vld [vmem:[#allocation2 + $0x18] sm:$0xff]
        %v1194 = vld [vmem:[#allocation2 + $0x20] sm:$0xff]
        %v1195 = vld [vmem:[#allocation2 + $0x28] sm:$0xff]
        %v1196 = vld [vmem:[#allocation2 + $0x30] sm:$0xff]
        %v1197 = vld [vmem:[#allocation2 + $0x38] sm:$0xff]
        %v1198 = vld [vmem:[#allocation2 + $0x40] sm:$0xff]
        %v1199 = vld [vmem:[#allocation2 + $0x48] sm:$0xff]
        %v1200 = vld [vmem:[#allocation2 + $0x50] sm:$0xff]
        %v1201 = vld [vmem:[#allocation2 + $0x58] sm:$0xff]
        %v1202 = vld [vmem:[#allocation2 + $0x60] sm:$0xff]
        %v1203 = vld [vmem:[#allocation2 + $0x68] sm:$0xff]
        %v1204 = vld [vmem:[#allocation2 + $0x70] sm:$0xff]
        %v1205 = vld [vmem:[#allocation2 + $0x78] sm:$0xff]
        %v1206 = vld [vmem:[%s1] sm:$0xff]
        %v1207 = vld [vmem:[%s1 + $0x8] sm:$0xff]
        %v1208 = vld [vmem:[%s1 + $0x10] sm:$0xf]
        %v1209 = vld [vmem:[%s1 + $0x14] sm:$0xff]
        %v1210 = vld [vmem:[%s1 + $0x1c] sm:$0xff]
        %v1211 = vld [vmem:[%s1 + $0x24] sm:$0xf]
        %v1212 = vld [vmem:[%s1 + $0x28] sm:$0xff]
        %v1213 = vld [vmem:[%s1 + $0x30] sm:$0xff]
        %v1214 = vld [vmem:[%s1 + $0x38] sm:$0xf]
        %v1215 = vld [vmem:[%s1 + $0x3c] sm:$0xff]
        %v1216 = vld [vmem:[%s1 + $0x44] sm:$0xff]
        %v1217 = vld [vmem:[%s1 + $0x4c] sm:$0xf]
        %v1218 = vld [vmem:[%s1 + $0x50] sm:$0xff]
        %v1219 = vld [vmem:[%s1 + $0x58] sm:$0xff]
        %v1220 = vld [vmem:[%s1 + $0x60] sm:$0xf]
        %v1221 = vld [vmem:[%s1 + $0x64] sm:$0xff]
        %v1222 = vld [vmem:[%s1 + $0x6c] sm:$0xff]
        %v1223 = vld [vmem:[%s1 + $0x74] sm:$0xf]
        %v1224 = vld [vmem:[%s1 + $0x78] sm:$0xff]
        %v1225 = vld [vmem:[%s1 + $0x80] sm:$0xff]
        %v1226 = vld [vmem:[%s1 + $0x88] sm:$0xf]
        %v1227 = vld [vmem:[%s1 + $0x8c] sm:$0xff]
        %v1228 = vld [vmem:[%s1 + $0x94] sm:$0xff]
        %v1229 = vld [vmem:[%s1 + $0x9c] sm:$0xf]
        %v1230 = vld [vmem:[%s1 + $0xa0] sm:$0xff]
        %v1231 = vld [vmem:[%s1 + $0xa8] sm:$0xff]
        %v1232 = vld [vmem:[%s1 + $0xb0] sm:$0xf]
        %v1233 = vld [vmem:[%s1 + $0xb4] sm:$0xff]
        %v1234 = vld [vmem:[%s1 + $0xbc] sm:$0xff]
        %v1235 = vld [vmem:[%s1 + $0xc4] sm:$0xf]
        %v1236 = vld [vmem:[%s1 + $0xc8] sm:$0xff]
        %v1237 = vld [vmem:[%s1 + $0xd0] sm:$0xff]
        %v1238 = vld [vmem:[%s1 + $0xd8] sm:$0xf]
        %v1239 = vld [vmem:[%s1 + $0xdc] sm:$0xff]
        %v1240 = vld [vmem:[%s1 + $0xe4] sm:$0xff]
        %v1241 = vld [vmem:[%s1 + $0xec] sm:$0xf]
        %v1242 = vld [vmem:[%s1 + $0xf0] sm:$0xff]
        %v1243 = vld [vmem:[%s1 + $0xf8] sm:$0xff]
        %v1244 = vld [vmem:[%s1 + $0x100] sm:$0xf]
        %v1245 = vld [vmem:[%s1 + $0x104] sm:$0xff]
        %v1246 = vld [vmem:[%s1 + $0x10c] sm:$0xff]
        %v1247 = vld [vmem:[%s1 + $0x114] sm:$0xf]
        %v1248 = vld [vmem:[%s1 + $0x118] sm:$0xff]
        %v1249 = vld [vmem:[%s1 + $0x120] sm:$0xff]
        %v1250 = vld [vmem:[%s1 + $0x128] sm:$0xf]
        %v1251 = vld [vmem:[%s1 + $0x12c] sm:$0xff]
        %v1252 = vld [vmem:[%s1 + $0x134] sm:$0xff]
        %v1253 = vld [vmem:[%s1 + $0x13c] sm:$0xf]
        %v1254 = vld [vmem:[%s1 + $0x140] sm:$0xff]
        %v1255 = vld [vmem:[%s1 + $0x148] sm:$0xff]
        %v1256 = vld [vmem:[%s1 + $0x150] sm:$0xf]
        %v1257 = vld [vmem:[%s1 + $0x154] sm:$0xff]
        %v1258 = vld [vmem:[%s1 + $0x15c] sm:$0xff]
        %v1259 = vld [vmem:[%s1 + $0x164] sm:$0xf]
        %v1260 = vld [vmem:[%s1 + $0x168] sm:$0xff]
        %v1261 = vld [vmem:[%s1 + $0x170] sm:$0xff]
        %v1262 = vld [vmem:[%s1 + $0x178] sm:$0xf]
        %v1263 = vld [vmem:[%s1 + $0x17c] sm:$0xff]
        %v1264 = vld [vmem:[%s1 + $0x184] sm:$0xff]
        %v1265 = vld [vmem:[%s1 + $0x18c] sm:$0xf]
        %v1266 = vld [vmem:[%s1 + $0x190] sm:$0xff]
        %v1267 = vld [vmem:[%s1 + $0x198] sm:$0xff]
        %v1268 = vld [vmem:[%s1 + $0x1a0] sm:$0xf]
        %v1269 = vld [vmem:[%s1 + $0x1a4] sm:$0xff]
        %v1270 = vld [vmem:[%s1 + $0x1ac] sm:$0xff]
        %v1271 = vld [vmem:[%s1 + $0x1b4] sm:$0xf]
        %v1272 = vld [vmem:[%s1 + $0x1b8] sm:$0xff]
        %v1273 = vld [vmem:[%s1 + $0x1c0] sm:$0xff]
        %v1274 = vld [vmem:[%s1 + $0x1c8] sm:$0xf]
        %v1275 = vld [vmem:[%s1 + $0x1cc] sm:$0xff]
        %v1276 = vld [vmem:[%s1 + $0x1d4] sm:$0xff]
        %v1277 = vld [vmem:[%s1 + $0x1dc] sm:$0xf]
        %v1278 = vld [vmem:[%s1 + $0x1e0] sm:$0xff]
        %v1279 = vld [vmem:[%s1 + $0x1e8] sm:$0xff]
        %v1280 = vld [vmem:[%s1 + $0x1f0] sm:$0xf]
        %v1281 = vld [vmem:[%s1 + $0x1f4] sm:$0xff]
        %v1282 = vld [vmem:[%s1 + $0x1fc] sm:$0xff]
        %v1283 = vld [vmem:[%s1 + $0x204] sm:$0xf]
        %v1284 = vld [vmem:[%s1 + $0x208] sm:$0xff]
        %v1285 = vld [vmem:[%s1 + $0x210] sm:$0xff]
        %v1286 = vld [vmem:[%s1 + $0x218] sm:$0xf]
        %v1287 = vld [vmem:[%s1 + $0x21c] sm:$0xff]
        %v1288 = vld [vmem:[%s1 + $0x224] sm:$0xff]
        %v1289 = vld [vmem:[%s1 + $0x22c] sm:$0xf]
        %v1290 = vld [vmem:[%s1 + $0x230] sm:$0xff]
        %v1291 = vld [vmem:[%s1 + $0x238] sm:$0xff]
        %v1292 = vld [vmem:[%s1 + $0x240] sm:$0xf]
        %v1293 = vld [vmem:[%s1 + $0x244] sm:$0xff]
        %v1294 = vld [vmem:[%s1 + $0x24c] sm:$0xff]
        %v1295 = vld [vmem:[%s1 + $0x254] sm:$0xf]
        %v1296 = vld [vmem:[%s1 + $0x258] sm:$0xff]
        %v1297 = vld [vmem:[%s1 + $0x260] sm:$0xff]
        %v1298 = vld [vmem:[%s1 + $0x268] sm:$0xf]
        %v1299 = vld [vmem:[%s1 + $0x26c] sm:$0xff]
        %v1300 = vld [vmem:[%s1 + $0x274] sm:$0xff]
        %v1301 = vld [vmem:[%s1 + $0x27c] sm:$0xf]
        %v1302 = vld [vmem:[%s1 + $0x280] sm:$0xff]
        %v1303 = vld [vmem:[%s1 + $0x288] sm:$0xff]
        %v1304 = vld [vmem:[%s1 + $0x290] sm:$0xf]
        %v1305 = vld [vmem:[%s1 + $0x294] sm:$0xff]
        %v1306 = vld [vmem:[%s1 + $0x29c] sm:$0xff]
        %v1307 = vld [vmem:[%s1 + $0x2a4] sm:$0xf]
        %v1308 = vld [vmem:[%s1 + $0x2a8] sm:$0xff]
        %v1309 = vld [vmem:[%s1 + $0x2b0] sm:$0xff]
        %v1310 = vld [vmem:[%s1 + $0x2b8] sm:$0xf]
        %v1311 = vld [vmem:[%s1 + $0x2bc] sm:$0xff]
        %v1312 = vld [vmem:[%s1 + $0x2c4] sm:$0xff]
        %v1313 = vld [vmem:[%s1 + $0x2cc] sm:$0xf]
        %v1314 = vld [vmem:[%s1 + $0x2d0] sm:$0xff]
        %v1315 = vld [vmem:[%s1 + $0x2d8] sm:$0xff]
        %v1316 = vld [vmem:[%s1 + $0x2e0] sm:$0xf]
        %v1317 = vld [vmem:[%s1 + $0x2e4] sm:$0xff]
        %v1318 = vld [vmem:[%s1 + $0x2ec] sm:$0xff]
        %v1319 = vld [vmem:[%s1 + $0x2f4] sm:$0xf]
        %v1320 = vld [vmem:[%s1 + $0x2f8] sm:$0xff]
        %v1321 = vld [vmem:[%s1 + $0x300] sm:$0xff]
        %v1322 = vld [vmem:[%s1 + $0x308] sm:$0xf]
        %v1323 = vld [vmem:[%s1 + $0x30c] sm:$0xff]
        %v1324 = vld [vmem:[%s1 + $0x314] sm:$0xff]
        %v1325 = vld [vmem:[%s1 + $0x31c] sm:$0xf]
        %v1326 = vld [vmem:[%s1 + $0x320] sm:$0xff]
        %v1327 = vld [vmem:[%s1 + $0x328] sm:$0xff]
        %v1328 = vld [vmem:[%s1 + $0x330] sm:$0xf]
        %v1329 = vld [vmem:[%s1 + $0x334] sm:$0xff]
        %v1330 = vld [vmem:[%s1 + $0x33c] sm:$0xff]
        %v1331 = vld [vmem:[%s1 + $0x344] sm:$0xf]
        %v1332 = vld [vmem:[%s1 + $0x348] sm:$0xff]
        %v1333 = vld [vmem:[%s1 + $0x350] sm:$0xff]
        %v1334 = vld [vmem:[%s1 + $0x358] sm:$0xf]
        %v1335 = vld [vmem:[%s1 + $0x35c] sm:$0xff]
        %v1336 = vld [vmem:[%s1 + $0x364] sm:$0xff]
        %v1337 = vld [vmem:[%s1 + $0x36c] sm:$0xf]
        %v1338 = vld [vmem:[%s1 + $0x370] sm:$0xff]
        %v1339 = vld [vmem:[%s1 + $0x378] sm:$0xff]
        %v1340 = vld [vmem:[%s1 + $0x380] sm:$0xf]
        %v1341 = vld [vmem:[%s1 + $0x384] sm:$0xff]
        %v1342 = vld [vmem:[%s1 + $0x38c] sm:$0xff]
        %v1343 = vld [vmem:[%s1 + $0x394] sm:$0xf]
        %v1344 = vld [vmem:[%s1 + $0x398] sm:$0xff]
        %v1345 = vld [vmem:[%s1 + $0x3a0] sm:$0xff]
        %v1346 = vld [vmem:[%s1 + $0x3a8] sm:$0xf]
        %v1347 = vld [vmem:[%s1 + $0x3ac] sm:$0xff]
        %v1348 = vld [vmem:[%s1 + $0x3b4] sm:$0xff]
        %v1349 = vld [vmem:[%s1 + $0x3bc] sm:$0xf]
        %v1350 = vld [vmem:[%s1 + $0x3c0] sm:$0xff]
        %v1351 = vld [vmem:[%s1 + $0x3c8] sm:$0xff]
        %v1352 = vld [vmem:[%s1 + $0x3d0] sm:$0xf]
        %v1353 = vld [vmem:[%s1 + $0x3d4] sm:$0xff]
        %v1354 = vld [vmem:[%s1 + $0x3dc] sm:$0xff]
        %v1355 = vld [vmem:[%s1 + $0x3e4] sm:$0xf]
        %v1356 = vld [vmem:[%s1 + $0x3e8] sm:$0xff]
        %v1357 = vld [vmem:[%s1 + $0x3f0] sm:$0xff]
        %v1358 = vld [vmem:[%s1 + $0x3f8] sm:$0xf]
        %v1359 = vld [vmem:[%s1 + $0x3fc] sm:$0xff]
        %v1360 = vld [vmem:[%s1 + $0x404] sm:$0xff]
        %v1361 = vld [vmem:[%s1 + $0x40c] sm:$0xf]
        %v1362 = vld [vmem:[%s1 + $0x410] sm:$0xff]
        %v1363 = vld [vmem:[%s1 + $0x418] sm:$0xff]
        %v1364 = vld [vmem:[%s1 + $0x420] sm:$0xf]
        %v1365 = vld [vmem:[%s1 + $0x424] sm:$0xff]
        %v1366 = vld [vmem:[%s1 + $0x42c] sm:$0xff]
        %v1367 = vld [vmem:[%s1 + $0x434] sm:$0xf]
        %v1384 = vunpack.c.l.b16 %v1190
        %v1385 = vunpack.c.h.b16 %v1190
        %v1386 = vunpack.c.l.b16 %v1191
        %v1387 = vunpack.c.h.b16 %v1191
        %v1388 = vunpack.c.l.b16 %v1192
        %v1389 = vunpack.c.h.b16 %v1192
        %v1390 = vunpack.c.l.b16 %v1193
        %v1391 = vunpack.c.h.b16 %v1193
        %v1392 = vunpack.c.l.b16 %v1194
        %v1393 = vunpack.c.h.b16 %v1194
        %v1394 = vunpack.c.l.b16 %v1195
        %v1395 = vunpack.c.h.b16 %v1195
        %v1396 = vunpack.c.l.b16 %v1196
        %v1397 = vunpack.c.h.b16 %v1196
        %v1398 = vunpack.c.l.b16 %v1197
        %v1399 = vunpack.c.h.b16 %v1197
        %v1400 = vunpack.c.l.b16 %v1198
        %v1401 = vunpack.c.h.b16 %v1198
        %v1402 = vunpack.c.l.b16 %v1199
        %v1403 = vunpack.c.h.b16 %v1199
        %v1404 = vunpack.c.l.b16 %v1200
        %v1405 = vunpack.c.h.b16 %v1200
        %v1406 = vunpack.c.l.b16 %v1201
        %v1407 = vunpack.c.h.b16 %v1201
        %v1408 = vunpack.c.l.b16 %v1202
        %v1409 = vunpack.c.h.b16 %v1202
        %v1410 = vunpack.c.l.b16 %v1203
        %v1411 = vunpack.c.h.b16 %v1203
        %v1412 = vunpack.c.l.b16 %v1204
        %v1413 = vunpack.c.h.b16 %v1204
        %v1414 = vunpack.c.l.b16 %v1205
        %v1415 = vunpack.c.h.b16 %v1205
        %v1416 = vpack.c.b16 %v1388, %v1384
        %v1417 = vpack.c.b16 %v1389, %v1385
        %v1418 = vpack.c.b16 %v1390, %v1386
        %v1419 = vpack.c.b16 %v1391, %v1387
        %v1420 = vpack.c.b16 %v1396, %v1392
        %v1421 = vpack.c.b16 %v1397, %v1393
        %v1422 = vpack.c.b16 %v1398, %v1394
        %v1423 = vpack.c.b16 %v1399, %v1395
        %v1424 = vpack.c.b16 %v1404, %v1400
        %v1425 = vpack.c.b16 %v1405, %v1401
        %v1426 = vpack.c.b16 %v1406, %v1402
        %v1427 = vpack.c.b16 %v1407, %v1403
        %v1428 = vpack.c.b16 %v1412, %v1408
        %v1429 = vpack.c.b16 %v1413, %v1409
        %v1430 = vpack.c.b16 %v1414, %v1410
        %v1431 = vpack.c.b16 %v1415, %v1411
        %v1606 = vunpack.c.l.b16 %v1206
        %v1607 = vunpack.c.h.b16 %v1206
        %v1608 = vunpack.c.l.b16 %v1207
        %v1609 = vunpack.c.h.b16 %v1207
        %v1610 = vunpack.c.l.b16 %v1208
        %v1611 = vunpack.c.l.b16 %v1209
        %v1612 = vunpack.c.h.b16 %v1209
        %v1613 = vunpack.c.l.b16 %v1210
        %v1614 = vunpack.c.h.b16 %v1210
        %v1615 = vunpack.c.l.b16 %v1211
        %v1616 = vunpack.c.l.b16 %v1212
        %v1617 = vunpack.c.h.b16 %v1212
        %v1618 = vunpack.c.l.b16 %v1213
        %v1619 = vunpack.c.h.b16 %v1213
        %v1620 = vunpack.c.l.b16 %v1214
        %v1621 = vunpack.c.l.b16 %v1215
        %v1622 = vunpack.c.h.b16 %v1215
        %v1623 = vunpack.c.l.b16 %v1216
        %v1624 = vunpack.c.h.b16 %v1216
        %v1625 = vunpack.c.l.b16 %v1217
        %v1626 = vunpack.c.l.b16 %v1218
        %v1627 = vunpack.c.h.b16 %v1218
        %v1628 = vunpack.c.l.b16 %v1219
        %v1629 = vunpack.c.h.b16 %v1219
        %v1630 = vunpack.c.l.b16 %v1220
        %v1631 = vunpack.c.l.b16 %v1221
        %v1632 = vunpack.c.h.b16 %v1221
        %v1633 = vunpack.c.l.b16 %v1222
        %v1634 = vunpack.c.h.b16 %v1222
        %v1635 = vunpack.c.l.b16 %v1223
        %v1636 = vunpack.c.l.b16 %v1224
        %v1637 = vunpack.c.h.b16 %v1224
        %v1638 = vunpack.c.l.b16 %v1225
        %v1639 = vunpack.c.h.b16 %v1225
        %v1640 = vunpack.c.l.b16 %v1226
        %v1641 = vunpack.c.l.b16 %v1227
        %v1642 = vunpack.c.h.b16 %v1227
        %v1643 = vunpack.c.l.b16 %v1228
        %v1644 = vunpack.c.h.b16 %v1228
        %v1645 = vunpack.c.l.b16 %v1229
        %v1646 = vunpack.c.l.b16 %v1230
        %v1647 = vunpack.c.h.b16 %v1230
        %v1648 = vunpack.c.l.b16 %v1231
        %v1649 = vunpack.c.h.b16 %v1231
        %v1650 = vunpack.c.l.b16 %v1232
        %v1651 = vunpack.c.l.b16 %v1233
        %v1652 = vunpack.c.h.b16 %v1233
        %v1653 = vunpack.c.l.b16 %v1234
        %v1654 = vunpack.c.h.b16 %v1234
        %v1655 = vunpack.c.l.b16 %v1235
        %v1656 = vunpack.c.l.b16 %v1236
        %v1657 = vunpack.c.h.b16 %v1236
        %v1658 = vunpack.c.l.b16 %v1237
        %v1659 = vunpack.c.h.b16 %v1237
        %v1660 = vunpack.c.l.b16 %v1238
        %v1661 = vunpack.c.l.b16 %v1239
        %v1662 = vunpack.c.h.b16 %v1239
        %v1663 = vunpack.c.l.b16 %v1240
        %v1664 = vunpack.c.h.b16 %v1240
        %v1665 = vunpack.c.l.b16 %v1241
        %v1666 = vunpack.c.l.b16 %v1242
        %v1667 = vunpack.c.h.b16 %v1242
        %v1668 = vunpack.c.l.b16 %v1243
        %v1669 = vunpack.c.h.b16 %v1243
        %v1670 = vunpack.c.l.b16 %v1244
        %v1671 = vunpack.c.l.b16 %v1245
        %v1672 = vunpack.c.h.b16 %v1245
        %v1673 = vunpack.c.l.b16 %v1246
        %v1674 = vunpack.c.h.b16 %v1246
        %v1675 = vunpack.c.l.b16 %v1247
        %v1676 = vunpack.c.l.b16 %v1248
        %v1677 = vunpack.c.h.b16 %v1248
        %v1678 = vunpack.c.l.b16 %v1249
        %v1679 = vunpack.c.h.b16 %v1249
        %v1680 = vunpack.c.l.b16 %v1250
        %v1681 = vunpack.c.l.b16 %v1251
        %v1682 = vunpack.c.h.b16 %v1251
        %v1683 = vunpack.c.l.b16 %v1252
        %v1684 = vunpack.c.h.b16 %v1252
        %v1685 = vunpack.c.l.b16 %v1253
        %v1686 = vunpack.c.l.b16 %v1254
        %v1687 = vunpack.c.h.b16 %v1254
        %v1688 = vunpack.c.l.b16 %v1255
        %v1689 = vunpack.c.h.b16 %v1255
        %v1690 = vunpack.c.l.b16 %v1256
        %v1691 = vunpack.c.l.b16 %v1257
        %v1692 = vunpack.c.h.b16 %v1257
        %v1693 = vunpack.c.l.b16 %v1258
        %v1694 = vunpack.c.h.b16 %v1258
        %v1695 = vunpack.c.l.b16 %v1259
        %v1696 = vunpack.c.l.b16 %v1260
        %v1697 = vunpack.c.h.b16 %v1260
        %v1698 = vunpack.c.l.b16 %v1261
        %v1699 = vunpack.c.h.b16 %v1261
        %v1700 = vunpack.c.l.b16 %v1262
        %v1701 = vunpack.c.l.b16 %v1263
        %v1702 = vunpack.c.h.b16 %v1263
        %v1703 = vunpack.c.l.b16 %v1264
        %v1704 = vunpack.c.h.b16 %v1264
        %v1705 = vunpack.c.l.b16 %v1265
        %v1706 = vunpack.c.l.b16 %v1266
        %v1707 = vunpack.c.h.b16 %v1266
        %v1708 = vunpack.c.l.b16 %v1267
        %v1709 = vunpack.c.h.b16 %v1267
        %v1710 = vunpack.c.l.b16 %v1268
        %v1711 = vunpack.c.l.b16 %v1269
        %v1712 = vunpack.c.h.b16 %v1269
        %v1713 = vunpack.c.l.b16 %v1270
        %v1714 = vunpack.c.h.b16 %v1270
        %v1715 = vunpack.c.l.b16 %v1271
        %v1716 = vunpack.c.l.b16 %v1272
        %v1717 = vunpack.c.h.b16 %v1272
        %v1718 = vunpack.c.l.b16 %v1273
        %v1719 = vunpack.c.h.b16 %v1273
        %v1720 = vunpack.c.l.b16 %v1274
        %v1721 = vunpack.c.l.b16 %v1275
        %v1722 = vunpack.c.h.b16 %v1275
        %v1723 = vunpack.c.l.b16 %v1276
        %v1724 = vunpack.c.h.b16 %v1276
        %v1725 = vunpack.c.l.b16 %v1277
        %v1726 = vunpack.c.l.b16 %v1278
        %v1727 = vunpack.c.h.b16 %v1278
        %v1728 = vunpack.c.l.b16 %v1279
        %v1729 = vunpack.c.h.b16 %v1279
        %v1730 = vunpack.c.l.b16 %v1280
        %v1731 = vunpack.c.l.b16 %v1281
        %v1732 = vunpack.c.h.b16 %v1281
        %v1733 = vunpack.c.l.b16 %v1282
        %v1734 = vunpack.c.h.b16 %v1282
        %v1735 = vunpack.c.l.b16 %v1283
        %v1736 = vunpack.c.l.b16 %v1284
        %v1737 = vunpack.c.h.b16 %v1284
        %v1738 = vunpack.c.l.b16 %v1285
        %v1739 = vunpack.c.h.b16 %v1285
        %v1740 = vunpack.c.l.b16 %v1286
        %v1741 = vunpack.c.l.b16 %v1287
        %v1742 = vunpack.c.h.b16 %v1287
        %v1743 = vunpack.c.l.b16 %v1288
        %v1744 = vunpack.c.h.b16 %v1288
        %v1745 = vunpack.c.l.b16 %v1289
        %v1746 = vunpack.c.l.b16 %v1290
        %v1747 = vunpack.c.h.b16 %v1290
        %v1748 = vunpack.c.l.b16 %v1291
        %v1749 = vunpack.c.h.b16 %v1291
        %v1750 = vunpack.c.l.b16 %v1292
        %v1751 = vunpack.c.l.b16 %v1293
        %v1752 = vunpack.c.h.b16 %v1293
        %v1753 = vunpack.c.l.b16 %v1294
        %v1754 = vunpack.c.h.b16 %v1294
        %v1755 = vunpack.c.l.b16 %v1295
        %v1756 = vunpack.c.l.b16 %v1296
        %v1757 = vunpack.c.h.b16 %v1296
        %v1758 = vunpack.c.l.b16 %v1297
        %v1759 = vunpack.c.h.b16 %v1297
        %v1760 = vunpack.c.l.b16 %v1298
        %v1761 = vunpack.c.l.b16 %v1299
        %v1762 = vunpack.c.h.b16 %v1299
        %v1763 = vunpack.c.l.b16 %v1300
        %v1764 = vunpack.c.h.b16 %v1300
        %v1765 = vunpack.c.l.b16 %v1301
        %v1766 = vunpack.c.l.b16 %v1302
        %v1767 = vunpack.c.h.b16 %v1302
        %v1768 = vunpack.c.l.b16 %v1303
        %v1769 = vunpack.c.h.b16 %v1303
        %v1770 = vunpack.c.l.b16 %v1304
        %v1771 = vunpack.c.l.b16 %v1305
        %v1772 = vunpack.c.h.b16 %v1305
        %v1773 = vunpack.c.l.b16 %v1306
        %v1774 = vunpack.c.h.b16 %v1306
        %v1775 = vunpack.c.l.b16 %v1307
        %v1776 = vunpack.c.l.b16 %v1308
        %v1777 = vunpack.c.h.b16 %v1308
        %v1778 = vunpack.c.l.b16 %v1309
        %v1779 = vunpack.c.h.b16 %v1309
        %v1780 = vunpack.c.l.b16 %v1310
        %v1781 = vunpack.c.l.b16 %v1311
        %v1782 = vunpack.c.h.b16 %v1311
        %v1783 = vunpack.c.l.b16 %v1312
        %v1784 = vunpack.c.h.b16 %v1312
        %v1785 = vunpack.c.l.b16 %v1313
        %v1786 = vunpack.c.l.b16 %v1314
        %v1787 = vunpack.c.h.b16 %v1314
        %v1788 = vunpack.c.l.b16 %v1315
        %v1789 = vunpack.c.h.b16 %v1315
        %v1790 = vunpack.c.l.b16 %v1316
        %v1791 = vunpack.c.l.b16 %v1317
        %v1792 = vunpack.c.h.b16 %v1317
        %v1793 = vunpack.c.l.b16 %v1318
        %v1794 = vunpack.c.h.b16 %v1318
        %v1795 = vunpack.c.l.b16 %v1319
        %v1796 = vunpack.c.l.b16 %v1320
        %v1797 = vunpack.c.h.b16 %v1320
        %v1798 = vunpack.c.l.b16 %v1321
        %v1799 = vunpack.c.h.b16 %v1321
        %v1800 = vunpack.c.l.b16 %v1322
        %v1801 = vunpack.c.l.b16 %v1323
        %v1802 = vunpack.c.h.b16 %v1323
        %v1803 = vunpack.c.l.b16 %v1324
        %v1804 = vunpack.c.h.b16 %v1324
        %v1805 = vunpack.c.l.b16 %v1325
        %v1806 = vunpack.c.l.b16 %v1326
        %v1807 = vunpack.c.h.b16 %v1326
        %v1808 = vunpack.c.l.b16 %v1327
        %v1809 = vunpack.c.h.b16 %v1327
        %v1810 = vunpack.c.l.b16 %v1328
        %v1811 = vunpack.c.l.b16 %v1329
        %v1812 = vunpack.c.h.b16 %v1329
        %v1813 = vunpack.c.l.b16 %v1330
        %v1814 = vunpack.c.h.b16 %v1330
        %v1815 = vunpack.c.l.b16 %v1331
        %v1816 = vunpack.c.l.b16 %v1332
        %v1817 = vunpack.c.h.b16 %v1332
        %v1818 = vunpack.c.l.b16 %v1333
        %v1819 = vunpack.c.h.b16 %v1333
        %v1820 = vunpack.c.l.b16 %v1334
        %v1821 = vunpack.c.l.b16 %v1335
        %v1822 = vunpack.c.h.b16 %v1335
        %v1823 = vunpack.c.l.b16 %v1336
        %v1824 = vunpack.c.h.b16 %v1336
        %v1825 = vunpack.c.l.b16 %v1337
        %v1826 = vunpack.c.l.b16 %v1338
        %v1827 = vunpack.c.h.b16 %v1338
        %v1828 = vunpack.c.l.b16 %v1339
        %v1829 = vunpack.c.h.b16 %v1339
        %v1830 = vunpack.c.l.b16 %v1340
        %v1831 = vunpack.c.l.b16 %v1341
        %v1832 = vunpack.c.h.b16 %v1341
        %v1833 = vunpack.c.l.b16 %v1342
        %v1834 = vunpack.c.h.b16 %v1342
        %v1835 = vunpack.c.l.b16 %v1343
        %v1836 = vunpack.c.l.b16 %v1344
        %v1837 = vunpack.c.h.b16 %v1344
        %v1838 = vunpack.c.l.b16 %v1345
        %v1839 = vunpack.c.h.b16 %v1345
        %v1840 = vunpack.c.l.b16 %v1346
        %v1841 = vunpack.c.l.b16 %v1347
        %v1842 = vunpack.c.h.b16 %v1347
        %v1843 = vunpack.c.l.b16 %v1348
        %v1844 = vunpack.c.h.b16 %v1348
        %v1845 = vunpack.c.l.b16 %v1349
        %v1846 = vunpack.c.l.b16 %v1350
        %v1847 = vunpack.c.h.b16 %v1350
        %v1848 = vunpack.c.l.b16 %v1351
        %v1849 = vunpack.c.h.b16 %v1351
        %v1850 = vunpack.c.l.b16 %v1352
        %v1851 = vunpack.c.l.b16 %v1353
        %v1852 = vunpack.c.h.b16 %v1353
        %v1853 = vunpack.c.l.b16 %v1354
        %v1854 = vunpack.c.h.b16 %v1354
        %v1855 = vunpack.c.l.b16 %v1355
        %v1856 = vunpack.c.l.b16 %v1356
        %v1857 = vunpack.c.h.b16 %v1356
        %v1858 = vunpack.c.l.b16 %v1357
        %v1859 = vunpack.c.h.b16 %v1357
        %v1860 = vunpack.c.l.b16 %v1358
        %v1861 = vunpack.c.l.b16 %v1359
        %v1862 = vunpack.c.h.b16 %v1359
        %v1863 = vunpack.c.l.b16 %v1360
        %v1864 = vunpack.c.h.b16 %v1360
        %v1865 = vunpack.c.l.b16 %v1361
        %v1866 = vunpack.c.l.b16 %v1362
        %v1867 = vunpack.c.h.b16 %v1362
        %v1868 = vunpack.c.l.b16 %v1363
        %v1869 = vunpack.c.h.b16 %v1363
        %v1870 = vunpack.c.l.b16 %v1364
        %v1871 = vunpack.c.l.b16 %v1365
        %v1872 = vunpack.c.h.b16 %v1365
        %v1873 = vunpack.c.l.b16 %v1366
        %v1874 = vunpack.c.h.b16 %v1366
        %v1875 = vunpack.c.l.b16 %v1367
        %v1876 = vpack.c.b16 %v1611, %v1606
        %v1877 = vpack.c.b16 %v1612, %v1607
        %v1878 = vpack.c.b16 %v1613, %v1608
        %v1879 = vpack.c.b16 %v1614, %v1609
        %v1880 = vpack.c.b16 %v1615, %v1610
        %v1881 = vpack.c.b16 %v1621, %v1616
        %v1882 = vpack.c.b16 %v1622, %v1617
        %v1883 = vpack.c.b16 %v1623, %v1618
        %v1884 = vpack.c.b16 %v1624, %v1619
        %v1885 = vpack.c.b16 %v1625, %v1620
        %v1886 = vpack.c.b16 %v1631, %v1626
        %v1887 = vpack.c.b16 %v1632, %v1627
        %v1888 = vpack.c.b16 %v1633, %v1628
        %v1889 = vpack.c.b16 %v1634, %v1629
        %v1890 = vpack.c.b16 %v1635, %v1630
        %v1891 = vpack.c.b16 %v1641, %v1636
        %v1892 = vpack.c.b16 %v1642, %v1637
        %v1893 = vpack.c.b16 %v1643, %v1638
        %v1894 = vpack.c.b16 %v1644, %v1639
        %v1895 = vpack.c.b16 %v1645, %v1640
        %v1896 = vpack.c.b16 %v1651, %v1646
        %v1897 = vpack.c.b16 %v1652, %v1647
        %v1898 = vpack.c.b16 %v1653, %v1648
        %v1899 = vpack.c.b16 %v1654, %v1649
        %v1900 = vpack.c.b16 %v1655, %v1650
        %v1901 = vpack.c.b16 %v1661, %v1656
        %v1902 = vpack.c.b16 %v1662, %v1657
        %v1903 = vpack.c.b16 %v1663, %v1658
        %v1904 = vpack.c.b16 %v1664, %v1659
        %v1905 = vpack.c.b16 %v1665, %v1660
        %v1906 = vpack.c.b16 %v1671, %v1666
        %v1907 = vpack.c.b16 %v1672, %v1667
        %v1908 = vpack.c.b16 %v1673, %v1668
        %v1909 = vpack.c.b16 %v1674, %v1669
        %v1910 = vpack.c.b16 %v1675, %v1670
        %v1911 = vpack.c.b16 %v1681, %v1676
        %v1912 = vpack.c.b16 %v1682, %v1677
        %v1913 = vpack.c.b16 %v1683, %v1678
        %v1914 = vpack.c.b16 %v1684, %v1679
        %v1915 = vpack.c.b16 %v1685, %v1680
        %v1916 = vpack.c.b16 %v1691, %v1686
        %v1917 = vpack.c.b16 %v1692, %v1687
        %v1918 = vpack.c.b16 %v1693, %v1688
        %v1919 = vpack.c.b16 %v1694, %v1689
        %v1920 = vpack.c.b16 %v1695, %v1690
        %v1921 = vpack.c.b16 %v1701, %v1696
        %v1922 = vpack.c.b16 %v1702, %v1697
        %v1923 = vpack.c.b16 %v1703, %v1698
        %v1924 = vpack.c.b16 %v1704, %v1699
        %v1925 = vpack.c.b16 %v1705, %v1700
        %v1926 = vpack.c.b16 %v1711, %v1706
        %v1927 = vpack.c.b16 %v1712, %v1707
        %v1928 = vpack.c.b16 %v1713, %v1708
        %v1929 = vpack.c.b16 %v1714, %v1709
        %v1930 = vpack.c.b16 %v1715, %v1710
        %v1931 = vpack.c.b16 %v1721, %v1716
        %v1932 = vpack.c.b16 %v1722, %v1717
        %v1933 = vpack.c.b16 %v1723, %v1718
        %v1934 = vpack.c.b16 %v1724, %v1719
        %v1935 = vpack.c.b16 %v1725, %v1720
        %v1936 = vpack.c.b16 %v1731, %v1726
        %v1937 = vpack.c.b16 %v1732, %v1727
        %v1938 = vpack.c.b16 %v1733, %v1728
        %v1939 = vpack.c.b16 %v1734, %v1729
        %v1940 = vpack.c.b16 %v1735, %v1730
        %v1941 = vpack.c.b16 %v1741, %v1736
        %v1942 = vpack.c.b16 %v1742, %v1737
        %v1943 = vpack.c.b16 %v1743, %v1738
        %v1944 = vpack.c.b16 %v1744, %v1739
        %v1945 = vpack.c.b16 %v1745, %v1740
        %v1946 = vpack.c.b16 %v1751, %v1746
        %v1947 = vpack.c.b16 %v1752, %v1747
        %v1948 = vpack.c.b16 %v1753, %v1748
        %v1949 = vpack.c.b16 %v1754, %v1749
        %v1950 = vpack.c.b16 %v1755, %v1750
        %v1951 = vpack.c.b16 %v1761, %v1756
        %v1952 = vpack.c.b16 %v1762, %v1757
        %v1953 = vpack.c.b16 %v1763, %v1758
        %v1954 = vpack.c.b16 %v1764, %v1759
        %v1955 = vpack.c.b16 %v1765, %v1760
        %v1956 = vpack.c.b16 %v1771, %v1766
        %v1957 = vpack.c.b16 %v1772, %v1767
        %v1958 = vpack.c.b16 %v1773, %v1768
        %v1959 = vpack.c.b16 %v1774, %v1769
        %v1960 = vpack.c.b16 %v1775, %v1770
        %v1961 = vpack.c.b16 %v1781, %v1776
        %v1962 = vpack.c.b16 %v1782, %v1777
        %v1963 = vpack.c.b16 %v1783, %v1778
        %v1964 = vpack.c.b16 %v1784, %v1779
        %v1965 = vpack.c.b16 %v1785, %v1780
        %v1966 = vpack.c.b16 %v1791, %v1786
        %v1967 = vpack.c.b16 %v1792, %v1787
        %v1968 = vpack.c.b16 %v1793, %v1788
        %v1969 = vpack.c.b16 %v1794, %v1789
        %v1970 = vpack.c.b16 %v1795, %v1790
        %v1971 = vpack.c.b16 %v1801, %v1796
        %v1972 = vpack.c.b16 %v1802, %v1797
        %v1973 = vpack.c.b16 %v1803, %v1798
        %v1974 = vpack.c.b16 %v1804, %v1799
        %v1975 = vpack.c.b16 %v1805, %v1800
        %v1976 = vpack.c.b16 %v1811, %v1806
        %v1977 = vpack.c.b16 %v1812, %v1807
        %v1978 = vpack.c.b16 %v1813, %v1808
        %v1979 = vpack.c.b16 %v1814, %v1809
        %v1980 = vpack.c.b16 %v1815, %v1810
        %v1981 = vpack.c.b16 %v1821, %v1816
        %v1982 = vpack.c.b16 %v1822, %v1817
        %v1983 = vpack.c.b16 %v1823, %v1818
        %v1984 = vpack.c.b16 %v1824, %v1819
        %v1985 = vpack.c.b16 %v1825, %v1820
        %v1986 = vpack.c.b16 %v1831, %v1826
        %v1987 = vpack.c.b16 %v1832, %v1827
        %v1988 = vpack.c.b16 %v1833, %v1828
        %v1989 = vpack.c.b16 %v1834, %v1829
        %v1990 = vpack.c.b16 %v1835, %v1830
        %v1991 = vpack.c.b16 %v1841, %v1836
        %v1992 = vpack.c.b16 %v1842, %v1837
        %v1993 = vpack.c.b16 %v1843, %v1838
        %v1994 = vpack.c.b16 %v1844, %v1839
        %v1995 = vpack.c.b16 %v1845, %v1840
        %v1996 = vpack.c.b16 %v1851, %v1846
        %v1997 = vpack.c.b16 %v1852, %v1847
        %v1998 = vpack.c.b16 %v1853, %v1848
        %v1999 = vpack.c.b16 %v1854, %v1849
        %v2000 = vpack.c.b16 %v1855, %v1850
        %v2001 = vpack.c.b16 %v1861, %v1856
        %v2002 = vpack.c.b16 %v1862, %v1857
        %v2003 = vpack.c.b16 %v1863, %v1858
        %v2004 = vpack.c.b16 %v1864, %v1859
        %v2005 = vpack.c.b16 %v1865, %v1860
        %v2006 = vpack.c.b16 %v1871, %v1866
        %v2007 = vpack.c.b16 %v1872, %v1867
        %v2008 = vpack.c.b16 %v1873, %v1868
        %v2009 = vpack.c.b16 %v1874, %v1869
        %v2010 = vpack.c.b16 %v1875, %v1870
        %vm2146 = vcmask 392192
        %v2148 = vsel %vm2146, %v1419, 0
        %v2151 = vsel %vm2146, %v1423, 0
        %v2154 = vsel %vm2146, %v1427, 0
        %v2157 = vsel %vm2146, %v1431, 0
        %2159 = vmatprep.subr.bf16.mxu0 %v1912
        %2160 = vmatpush1.bf16.msra.mxu0 %v1911
        %2161 = vmatprep.subr.bf16.mxu0 %v1907
        %2162 = vmatpush1.bf16.msra.mxu0 %v1906
        %2163 = vmatprep.subr.bf16.mxu0 %v1902
        %2164 = vmatpush1.bf16.msra.mxu0 %v1901
        %2165 = vmatprep.subr.bf16.mxu0 %v1897
        %2166 = vmatpush1.bf16.msra.mxu0 %v1896
        %2167 = vmatprep.subr.bf16.mxu0 %v1892
        %2168 = vmatpush1.bf16.msra.mxu0 %v1891
        %2169 = vmatprep.subr.bf16.mxu0 %v1887
        %2170 = vmatpush1.bf16.msra.mxu0 %v1886
        %2171 = vmatprep.subr.bf16.mxu0 %v1882
        %2172 = vmatpush1.bf16.msra.mxu0 %v1881
        %2173 = vmatprep.subr.bf16.mxu0 %v1877
        %2174 = vmatpush1.bf16.msra.mxu0 %v1876
        %2175 = vmatprep.subr.bf16.mxu0 %v1952
        %2176 = vmatpush2.bf16.msra.mxu0 %v1951
        %2177 = vmatprep.subr.bf16.mxu0 %v1947
        %2178 = vmatpush2.bf16.msra.mxu0 %v1946
        %2179 = vmatprep.subr.bf16.mxu0 %v1942
        %2180 = vmatpush2.bf16.msra.mxu0 %v1941
        %2181 = vmatprep.subr.bf16.mxu0 %v1937
        %2182 = vmatpush2.bf16.msra.mxu0 %v1936
        %2183 = vmatprep.subr.bf16.mxu0 %v1932
        %2184 = vmatpush2.bf16.msra.mxu0 %v1931
        %2185 = vmatprep.subr.bf16.mxu0 %v1927
        %2186 = vmatpush2.bf16.msra.mxu0 %v1926
        %2187 = vmatprep.subr.bf16.mxu0 %v1922
        %2188 = vmatpush2.bf16.msra.mxu0 %v1921
        %2189 = vmatprep.subr.bf16.mxu0 %v1917
        %2190 = vmatpush2.bf16.msra.mxu0 %v1916
        %2191 = vmatprep.mubr.bf16.mxu0 %v1417
        %2192 = vmatmul.mubr.bf16.gmra.mxu0 %v1416
        %v2193 = vpop.f32.mrf.mxu0
        %v2194 = vadd.f32 0.0, %v2193
        %v2195 = vpop.f32.mrf.mxu0
        %v2196 = vadd.f32 0.0, %v2195
        %v2197 = vpop.f32.mrf.mxu0
        %v2198 = vadd.f32 0.0, %v2197
        %v2199 = vpop.f32.mrf.mxu0
        %v2200 = vadd.f32 0.0, %v2199
        %2201 = vmatprep.mubr.bf16.mxu0 %v1421
        %2202 = vmatmul.mubr.bf16.gmra.mxu0 %v1420
        %v2203 = vpop.f32.mrf.mxu0
        %v2204 = vadd.f32 0.0, %v2203
        %v2205 = vpop.f32.mrf.mxu0
        %v2206 = vadd.f32 0.0, %v2205
        %v2207 = vpop.f32.mrf.mxu0
        %v2208 = vadd.f32 0.0, %v2207
        %v2209 = vpop.f32.mrf.mxu0
        %v2210 = vadd.f32 0.0, %v2209
        %2211 = vmatprep.mubr.bf16.mxu0 %v1425
        %2212 = vmatmul.mubr.bf16.gmra.mxu0 %v1424
        %v2213 = vpop.f32.mrf.mxu0
        %v2214 = vadd.f32 0.0, %v2213
        %v2215 = vpop.f32.mrf.mxu0
        %v2216 = vadd.f32 0.0, %v2215
        %v2217 = vpop.f32.mrf.mxu0
        %v2218 = vadd.f32 0.0, %v2217
        %v2219 = vpop.f32.mrf.mxu0
        %v2220 = vadd.f32 0.0, %v2219
        %2221 = vmatprep.mubr.bf16.mxu0 %v1429
        %2222 = vmatmul.mubr.bf16.gmra.mxu0 %v1428
        %v2223 = vpop.f32.mrf.mxu0
        %v2224 = vadd.f32 0.0, %v2223
        %v2225 = vpop.f32.mrf.mxu0
        %v2226 = vadd.f32 0.0, %v2225
        %v2227 = vpop.f32.mrf.mxu0
        %v2228 = vadd.f32 0.0, %v2227
        %v2229 = vpop.f32.mrf.mxu0
        %v2230 = vadd.f32 0.0, %v2229
        %2231 = vdwg.mxu0
        %2232 = vmatprep.subr.bf16.mxu0 %v1992
        %2233 = vmatpush1.bf16.msra.mxu0 %v1991
        %2234 = vmatprep.subr.bf16.mxu0 %v1987
        %2235 = vmatpush1.bf16.msra.mxu0 %v1986
        %2236 = vmatprep.subr.bf16.mxu0 %v1982
        %2237 = vmatpush1.bf16.msra.mxu0 %v1981
        %2238 = vmatprep.subr.bf16.mxu0 %v1977
        %2239 = vmatpush1.bf16.msra.mxu0 %v1976
        %2240 = vmatprep.subr.bf16.mxu0 %v1972
        %2241 = vmatpush1.bf16.msra.mxu0 %v1971
        %2242 = vmatprep.subr.bf16.mxu0 %v1967
        %2243 = vmatpush1.bf16.msra.mxu0 %v1966
        %2244 = vmatprep.subr.bf16.mxu0 %v1962
        %2245 = vmatpush1.bf16.msra.mxu0 %v1961
        %2246 = vmatprep.subr.bf16.mxu0 %v1957
        %2247 = vmatpush1.bf16.msra.mxu0 %v1956
        %2248 = vmatprep.subr.bf16.mxu0 0
        %2249 = vmatpush2.bf16.msra.mxu0 0
        %2250 = vmatprep.subr.bf16.mxu0 0
        %2251 = vmatpush2.bf16.msra.mxu0 0
        %2252 = vmatprep.subr.bf16.mxu0 0
        %2253 = vmatpush2.bf16.msra.mxu0 0
        %2254 = vmatprep.subr.bf16.mxu0 0
        %2255 = vmatpush2.bf16.msra.mxu0 0
        %2256 = vmatprep.subr.bf16.mxu0 0
        %2257 = vmatpush2.bf16.msra.mxu0 0
        %2258 = vmatprep.subr.bf16.mxu0 %v2007
        %2259 = vmatpush2.bf16.msra.mxu0 %v2006
        %2260 = vmatprep.subr.bf16.mxu0 %v2002
        %2261 = vmatpush2.bf16.msra.mxu0 %v2001
        %2262 = vmatprep.subr.bf16.mxu0 %v1997
        %2263 = vmatpush2.bf16.msra.mxu0 %v1996
        %2264 = vmatprep.mubr.bf16.mxu0 %v2148
        %2265 = vmatmul.mubr.bf16.gmra.mxu0 %v1418
        %v2266 = vpop.f32.mrf.mxu0
        %v2267 = vadd.f32 %v2194, %v2266
        %v2268 = vpop.f32.mrf.mxu0
        %v2269 = vadd.f32 %v2196, %v2268
        %v2270 = vpop.f32.mrf.mxu0
        %v2271 = vadd.f32 %v2198, %v2270
        %v2272 = vpop.f32.mrf.mxu0
        %v2273 = vadd.f32 %v2200, %v2272
        %2274 = vmatprep.mubr.bf16.mxu0 %v2151
        %2275 = vmatmul.mubr.bf16.gmra.mxu0 %v1422
        %v2276 = vpop.f32.mrf.mxu0
        %v2277 = vadd.f32 %v2204, %v2276
        %v2278 = vpop.f32.mrf.mxu0
        %v2279 = vadd.f32 %v2206, %v2278
        %v2280 = vpop.f32.mrf.mxu0
        %v2281 = vadd.f32 %v2208, %v2280
        %v2282 = vpop.f32.mrf.mxu0
        %v2283 = vadd.f32 %v2210, %v2282
        %2284 = vmatprep.mubr.bf16.mxu0 %v2154
        %2285 = vmatmul.mubr.bf16.gmra.mxu0 %v1426
        %v2286 = vpop.f32.mrf.mxu0
        %v2287 = vadd.f32 %v2214, %v2286
        %v2288 = vpop.f32.mrf.mxu0
        %v2289 = vadd.f32 %v2216, %v2288
        %v2290 = vpop.f32.mrf.mxu0
        %v2291 = vadd.f32 %v2218, %v2290
        %v2292 = vpop.f32.mrf.mxu0
        %v2293 = vadd.f32 %v2220, %v2292
        %2294 = vmatprep.mubr.bf16.mxu0 %v2157
        %2295 = vmatmul.mubr.bf16.gmra.mxu0 %v1430
        %v2296 = vpop.f32.mrf.mxu0
        %v2297 = vadd.f32 %v2224, %v2296
        %v2298 = vpop.f32.mrf.mxu0
        %v2299 = vadd.f32 %v2226, %v2298
        %v2300 = vpop.f32.mrf.mxu0
        %v2301 = vadd.f32 %v2228, %v2300
        %v2302 = vpop.f32.mrf.mxu0
        %v2303 = vadd.f32 %v2230, %v2302
        %2304 = vdwg.mxu0
        %2305 = vmatprep.subr.bf16.mxu0 %v1914
        %2306 = vmatpush1.bf16.msra.mxu0 %v1913
        %2307 = vmatprep.subr.bf16.mxu0 %v1909
        %2308 = vmatpush1.bf16.msra.mxu0 %v1908
        %2309 = vmatprep.subr.bf16.mxu0 %v1904
        %2310 = vmatpush1.bf16.msra.mxu0 %v1903
        %2311 = vmatprep.subr.bf16.mxu0 %v1899
        %2312 = vmatpush1.bf16.msra.mxu0 %v1898
        %2313 = vmatprep.subr.bf16.mxu0 %v1894
        %2314 = vmatpush1.bf16.msra.mxu0 %v1893
        %2315 = vmatprep.subr.bf16.mxu0 %v1889
        %2316 = vmatpush1.bf16.msra.mxu0 %v1888
        %2317 = vmatprep.subr.bf16.mxu0 %v1884
        %2318 = vmatpush1.bf16.msra.mxu0 %v1883
        %2319 = vmatprep.subr.bf16.mxu0 %v1879
        %2320 = vmatpush1.bf16.msra.mxu0 %v1878
        %2321 = vmatprep.subr.bf16.mxu0 %v1954
        %2322 = vmatpush2.bf16.msra.mxu0 %v1953
        %2323 = vmatprep.subr.bf16.mxu0 %v1949
        %2324 = vmatpush2.bf16.msra.mxu0 %v1948
        %2325 = vmatprep.subr.bf16.mxu0 %v1944
        %2326 = vmatpush2.bf16.msra.mxu0 %v1943
        %2327 = vmatprep.subr.bf16.mxu0 %v1939
        %2328 = vmatpush2.bf16.msra.mxu0 %v1938
        %2329 = vmatprep.subr.bf16.mxu0 %v1934
        %2330 = vmatpush2.bf16.msra.mxu0 %v1933
        %2331 = vmatprep.subr.bf16.mxu0 %v1929
        %2332 = vmatpush2.bf16.msra.mxu0 %v1928
        %2333 = vmatprep.subr.bf16.mxu0 %v1924
        %2334 = vmatpush2.bf16.msra.mxu0 %v1923
        %2335 = vmatprep.subr.bf16.mxu0 %v1919
        %2336 = vmatpush2.bf16.msra.mxu0 %v1918
        %2337 = vmatprep.mubr.bf16.mxu0 %v1417
        %2338 = vmatmul.mubr.bf16.gmra.mxu0 %v1416
        %v2339 = vpop.f32.mrf.mxu0
        %v2340 = vadd.f32 0.0, %v2339
        %v2341 = vpop.f32.mrf.mxu0
        %v2342 = vadd.f32 0.0, %v2341
        %v2343 = vpop.f32.mrf.mxu0
        %v2344 = vadd.f32 0.0, %v2343
        %v2345 = vpop.f32.mrf.mxu0
        %v2346 = vadd.f32 0.0, %v2345
        %2347 = vmatprep.mubr.bf16.mxu0 %v1421
        %2348 = vmatmul.mubr.bf16.gmra.mxu0 %v1420
        %v2349 = vpop.f32.mrf.mxu0
        %v2350 = vadd.f32 0.0, %v2349
        %v2351 = vpop.f32.mrf.mxu0
        %v2352 = vadd.f32 0.0, %v2351
        %v2353 = vpop.f32.mrf.mxu0
        %v2354 = vadd.f32 0.0, %v2353
        %v2355 = vpop.f32.mrf.mxu0
        %v2356 = vadd.f32 0.0, %v2355
        %2357 = vmatprep.mubr.bf16.mxu0 %v1425
        %2358 = vmatmul.mubr.bf16.gmra.mxu0 %v1424
        %v2359 = vpop.f32.mrf.mxu0
        %v2360 = vadd.f32 0.0, %v2359
        %v2361 = vpop.f32.mrf.mxu0
        %v2362 = vadd.f32 0.0, %v2361
        %v2363 = vpop.f32.mrf.mxu0
        %v2364 = vadd.f32 0.0, %v2363
        %v2365 = vpop.f32.mrf.mxu0
        %v2366 = vadd.f32 0.0, %v2365
        %2367 = vmatprep.mubr.bf16.mxu0 %v1429
        %2368 = vmatmul.mubr.bf16.gmra.mxu0 %v1428
        %v2369 = vpop.f32.mrf.mxu0
        %v2370 = vadd.f32 0.0, %v2369
        %v2371 = vpop.f32.mrf.mxu0
        %v2372 = vadd.f32 0.0, %v2371
        %v2373 = vpop.f32.mrf.mxu0
        %v2374 = vadd.f32 0.0, %v2373
        %v2375 = vpop.f32.mrf.mxu0
        %v2376 = vadd.f32 0.0, %v2375
        %2377 = vdwg.mxu0
        %2378 = vmatprep.subr.bf16.mxu0 %v1994
        %2379 = vmatpush1.bf16.msra.mxu0 %v1993
        %2380 = vmatprep.subr.bf16.mxu0 %v1989
        %2381 = vmatpush1.bf16.msra.mxu0 %v1988
        %2382 = vmatprep.subr.bf16.mxu0 %v1984
        %2383 = vmatpush1.bf16.msra.mxu0 %v1983
        %2384 = vmatprep.subr.bf16.mxu0 %v1979
        %2385 = vmatpush1.bf16.msra.mxu0 %v1978
        %2386 = vmatprep.subr.bf16.mxu0 %v1974
        %2387 = vmatpush1.bf16.msra.mxu0 %v1973
        %2388 = vmatprep.subr.bf16.mxu0 %v1969
        %2389 = vmatpush1.bf16.msra.mxu0 %v1968
        %2390 = vmatprep.subr.bf16.mxu0 %v1964
        %2391 = vmatpush1.bf16.msra.mxu0 %v1963
        %2392 = vmatprep.subr.bf16.mxu0 %v1959
        %2393 = vmatpush1.bf16.msra.mxu0 %v1958
        %2394 = vmatprep.subr.bf16.mxu0 0
        %2395 = vmatpush2.bf16.msra.mxu0 0
        %2396 = vmatprep.subr.bf16.mxu0 0
        %2397 = vmatpush2.bf16.msra.mxu0 0
        %2398 = vmatprep.subr.bf16.mxu0 0
        %2399 = vmatpush2.bf16.msra.mxu0 0
        %2400 = vmatprep.subr.bf16.mxu0 0
        %2401 = vmatpush2.bf16.msra.mxu0 0
        %2402 = vmatprep.subr.bf16.mxu0 0
        %2403 = vmatpush2.bf16.msra.mxu0 0
        %2404 = vmatprep.subr.bf16.mxu0 %v2009
        %2405 = vmatpush2.bf16.msra.mxu0 %v2008
        %2406 = vmatprep.subr.bf16.mxu0 %v2004
        %2407 = vmatpush2.bf16.msra.mxu0 %v2003
        %2408 = vmatprep.subr.bf16.mxu0 %v1999
        %2409 = vmatpush2.bf16.msra.mxu0 %v1998
        %2410 = vmatprep.mubr.bf16.mxu0 %v2148
        %2411 = vmatmul.mubr.bf16.gmra.mxu0 %v1418
        %v2412 = vpop.f32.mrf.mxu0
        %v2413 = vadd.f32 %v2340, %v2412
        %v2414 = vpop.f32.mrf.mxu0
        %v2415 = vadd.f32 %v2342, %v2414
        %v2416 = vpop.f32.mrf.mxu0
        %v2417 = vadd.f32 %v2344, %v2416
        %v2418 = vpop.f32.mrf.mxu0
        %v2419 = vadd.f32 %v2346, %v2418
        %2420 = vmatprep.mubr.bf16.mxu0 %v2151
        %2421 = vmatmul.mubr.bf16.gmra.mxu0 %v1422
        %v2422 = vpop.f32.mrf.mxu0
        %v2423 = vadd.f32 %v2350, %v2422
        %v2424 = vpop.f32.mrf.mxu0
        %v2425 = vadd.f32 %v2352, %v2424
        %v2426 = vpop.f32.mrf.mxu0
        %v2427 = vadd.f32 %v2354, %v2426
        %v2428 = vpop.f32.mrf.mxu0
        %v2429 = vadd.f32 %v2356, %v2428
        %2430 = vmatprep.mubr.bf16.mxu0 %v2154
        %2431 = vmatmul.mubr.bf16.gmra.mxu0 %v1426
        %v2432 = vpop.f32.mrf.mxu0
        %v2433 = vadd.f32 %v2360, %v2432
        %v2434 = vpop.f32.mrf.mxu0
        %v2435 = vadd.f32 %v2362, %v2434
        %v2436 = vpop.f32.mrf.mxu0
        %v2437 = vadd.f32 %v2364, %v2436
        %v2438 = vpop.f32.mrf.mxu0
        %v2439 = vadd.f32 %v2366, %v2438
        %2440 = vmatprep.mubr.bf16.mxu0 %v2157
        %2441 = vmatmul.mubr.bf16.gmra.mxu0 %v1430
        %v2442 = vpop.f32.mrf.mxu0
        %v2443 = vadd.f32 %v2370, %v2442
        %v2444 = vpop.f32.mrf.mxu0
        %v2445 = vadd.f32 %v2372, %v2444
        %v2446 = vpop.f32.mrf.mxu0
        %v2447 = vadd.f32 %v2374, %v2446
        %v2448 = vpop.f32.mrf.mxu0
        %v2449 = vadd.f32 %v2376, %v2448
        %2450 = vdwg.mxu0
        %2451 = vmatprep.subr.bf16.mxu0 0
        %2452 = vmatpush1.bf16.msra.mxu0 %v1915
        %2453 = vmatprep.subr.bf16.mxu0 0
        %2454 = vmatpush1.bf16.msra.mxu0 %v1910
        %2455 = vmatprep.subr.bf16.mxu0 0
        %2456 = vmatpush1.bf16.msra.mxu0 %v1905
        %2457 = vmatprep.subr.bf16.mxu0 0
        %2458 = vmatpush1.bf16.msra.mxu0 %v1900
        %2459 = vmatprep.subr.bf16.mxu0 0
        %2460 = vmatpush1.bf16.msra.mxu0 %v1895
        %2461 = vmatprep.subr.bf16.mxu0 0
        %2462 = vmatpush1.bf16.msra.mxu0 %v1890
        %2463 = vmatprep.subr.bf16.mxu0 0
        %2464 = vmatpush1.bf16.msra.mxu0 %v1885
        %2465 = vmatprep.subr.bf16.mxu0 0
        %2466 = vmatpush1.bf16.msra.mxu0 %v1880
        %2467 = vmatprep.subr.bf16.mxu0 0
        %2468 = vmatpush2.bf16.msra.mxu0 %v1955
        %2469 = vmatprep.subr.bf16.mxu0 0
        %2470 = vmatpush2.bf16.msra.mxu0 %v1950
        %2471 = vmatprep.subr.bf16.mxu0 0
        %2472 = vmatpush2.bf16.msra.mxu0 %v1945
        %2473 = vmatprep.subr.bf16.mxu0 0
        %2474 = vmatpush2.bf16.msra.mxu0 %v1940
        %2475 = vmatprep.subr.bf16.mxu0 0
        %2476 = vmatpush2.bf16.msra.mxu0 %v1935
        %2477 = vmatprep.subr.bf16.mxu0 0
        %2478 = vmatpush2.bf16.msra.mxu0 %v1930
        %2479 = vmatprep.subr.bf16.mxu0 0
        %2480 = vmatpush2.bf16.msra.mxu0 %v1925
        %2481 = vmatprep.subr.bf16.mxu0 0
        %2482 = vmatpush2.bf16.msra.mxu0 %v1920
        %2483 = vmatprep.mubr.bf16.mxu0 %v1417
        %2484 = vmatmul.mubr.bf16.gmra.mxu0 %v1416
        %v2485 = vpop.f32.mrf.mxu0
        %v2486 = vadd.f32 0.0, %v2485
        %v2487 = vpop.f32.mrf.mxu0
        %v2488 = vpop.f32.mrf.mxu0
        %v2489 = vadd.f32 0.0, %v2488
        %v2490 = vpop.f32.mrf.mxu0
        %2491 = vmatprep.mubr.bf16.mxu0 %v1421
        %2492 = vmatmul.mubr.bf16.gmra.mxu0 %v1420
        %v2493 = vpop.f32.mrf.mxu0
        %v2494 = vadd.f32 0.0, %v2493
        %v2495 = vpop.f32.mrf.mxu0
        %v2496 = vpop.f32.mrf.mxu0
        %v2497 = vadd.f32 0.0, %v2496
        %v2498 = vpop.f32.mrf.mxu0
        %2499 = vmatprep.mubr.bf16.mxu0 %v1425
        %2500 = vmatmul.mubr.bf16.gmra.mxu0 %v1424
        %v2501 = vpop.f32.mrf.mxu0
        %v2502 = vadd.f32 0.0, %v2501
        %v2503 = vpop.f32.mrf.mxu0
        %v2504 = vpop.f32.mrf.mxu0
        %v2505 = vadd.f32 0.0, %v2504
        %v2506 = vpop.f32.mrf.mxu0
        %2507 = vmatprep.mubr.bf16.mxu0 %v1429
        %2508 = vmatmul.mubr.bf16.gmra.mxu0 %v1428
        %v2509 = vpop.f32.mrf.mxu0
        %v2510 = vadd.f32 0.0, %v2509
        %v2511 = vpop.f32.mrf.mxu0
        %v2512 = vpop.f32.mrf.mxu0
        %v2513 = vadd.f32 0.0, %v2512
        %v2514 = vpop.f32.mrf.mxu0
        %2515 = vdwg.mxu0
        %2516 = vmatprep.subr.bf16.mxu0 0
        %2517 = vmatpush1.bf16.msra.mxu0 %v1995
        %2518 = vmatprep.subr.bf16.mxu0 0
        %2519 = vmatpush1.bf16.msra.mxu0 %v1990
        %2520 = vmatprep.subr.bf16.mxu0 0
        %2521 = vmatpush1.bf16.msra.mxu0 %v1985
        %2522 = vmatprep.subr.bf16.mxu0 0
        %2523 = vmatpush1.bf16.msra.mxu0 %v1980
        %2524 = vmatprep.subr.bf16.mxu0 0
        %2525 = vmatpush1.bf16.msra.mxu0 %v1975
        %2526 = vmatprep.subr.bf16.mxu0 0
        %2527 = vmatpush1.bf16.msra.mxu0 %v1970
        %2528 = vmatprep.subr.bf16.mxu0 0
        %2529 = vmatpush1.bf16.msra.mxu0 %v1965
        %2530 = vmatprep.subr.bf16.mxu0 0
        %2531 = vmatpush1.bf16.msra.mxu0 %v1960
        %2532 = vmatprep.subr.bf16.mxu0 0
        %2533 = vmatpush2.bf16.msra.mxu0 0
        %2534 = vmatprep.subr.bf16.mxu0 0
        %2535 = vmatpush2.bf16.msra.mxu0 0
        %2536 = vmatprep.subr.bf16.mxu0 0
        %2537 = vmatpush2.bf16.msra.mxu0 0
        %2538 = vmatprep.subr.bf16.mxu0 0
        %2539 = vmatpush2.bf16.msra.mxu0 0
        %2540 = vmatprep.subr.bf16.mxu0 0
        %2541 = vmatpush2.bf16.msra.mxu0 0
        %2542 = vmatprep.subr.bf16.mxu0 0
        %2543 = vmatpush2.bf16.msra.mxu0 %v2010
        %2544 = vmatprep.subr.bf16.mxu0 0
        %2545 = vmatpush2.bf16.msra.mxu0 %v2005
        %2546 = vmatprep.subr.bf16.mxu0 0
        %2547 = vmatpush2.bf16.msra.mxu0 %v2000
        %2548 = vmatprep.mubr.bf16.mxu0 %v2148
        %2549 = vmatmul.mubr.bf16.gmra.mxu0 %v1418
        %v2550 = vpop.f32.mrf.mxu0
        %v2551 = vadd.f32 %v2486, %v2550
        %v2552 = vpop.f32.mrf.mxu0
        %v2553 = vpop.f32.mrf.mxu0
        %v2554 = vadd.f32 %v2489, %v2553
        %v2555 = vpop.f32.mrf.mxu0
        %2556 = vmatprep.mubr.bf16.mxu0 %v2151
        %2557 = vmatmul.mubr.bf16.gmra.mxu0 %v1422
        %v2558 = vpop.f32.mrf.mxu0
        %v2559 = vadd.f32 %v2494, %v2558
        %v2560 = vpop.f32.mrf.mxu0
        %v2561 = vpop.f32.mrf.mxu0
        %v2562 = vadd.f32 %v2497, %v2561
        %v2563 = vpop.f32.mrf.mxu0
        %2564 = vmatprep.mubr.bf16.mxu0 %v2154
        %2565 = vmatmul.mubr.bf16.gmra.mxu0 %v1426
        %v2566 = vpop.f32.mrf.mxu0
        %v2567 = vadd.f32 %v2502, %v2566
        %v2568 = vpop.f32.mrf.mxu0
        %v2569 = vpop.f32.mrf.mxu0
        %v2570 = vadd.f32 %v2505, %v2569
        %v2571 = vpop.f32.mrf.mxu0
        %2572 = vmatprep.mubr.bf16.mxu0 %v2157
        %2573 = vmatmul.mubr.bf16.gmra.mxu0 %v1430
        %v2574 = vpop.f32.mrf.mxu0
        %v2575 = vadd.f32 %v2510, %v2574
        %v2576 = vpop.f32.mrf.mxu0
        %v2577 = vpop.f32.mrf.mxu0
        %v2578 = vadd.f32 %v2513, %v2577
        %v2579 = vpop.f32.mrf.mxu0
        %2580 = vdwg.mxu0
        %v2581 = vld [vmem:[%s230] sm:$0xff]
        %v2582 = vld [vmem:[%s230 + $0x8] sm:$0xff]
        %v2583 = vld [vmem:[%s230 + $0x10] sm:$0xff]
        %v2584 = vld [vmem:[%s230 + $0x18] sm:$0xff]
        %v2585 = vld [vmem:[%s230 + $0x20] sm:$0xff]
        %v2586 = vld [vmem:[%s230 + $0x28] sm:$0xff]
        %v2587 = vld [vmem:[%s230 + $0x30] sm:$0xff]
        %v2588 = vld [vmem:[%s230 + $0x38] sm:$0xff]
        %s2589 = scalar_lea.vmem %s230, 64
        %v2590 = vld [vmem:[%s2589] sm:$0xff]
        %v2591 = vld [vmem:[%s2589 + $0x8] sm:$0xff]
        %v2592 = vld [vmem:[%s2589 + $0x10] sm:$0xff]
        %v2593 = vld [vmem:[%s2589 + $0x18] sm:$0xff]
        %v2594 = vld [vmem:[%s2589 + $0x20] sm:$0xff]
        %v2595 = vld [vmem:[%s2589 + $0x28] sm:$0xff]
        %v2596 = vld [vmem:[%s2589 + $0x30] sm:$0xff]
        %v2597 = vld [vmem:[%s2589 + $0x38] sm:$0xff]
        %2599 = vset.pattern.permute.xlu0 0
        %2600 = vperm.xlu0 %2599, %v2581
        %v2601 = vpop.permute.xlu0 %2600
        %2604 = vset.pattern.permute.xlu0 0
        %2605 = vperm.xlu0 %2604, %v2582
        %v2606 = vpop.permute.xlu0 %2605
        %2609 = vset.pattern.permute.xlu0 0
        %2610 = vperm.xlu0 %2609, %v2583
        %v2611 = vpop.permute.xlu0 %2610
        %2614 = vset.pattern.permute.xlu0 0
        %2615 = vperm.xlu0 %2614, %v2584
        %v2616 = vpop.permute.xlu0 %2615
        %2619 = vset.pattern.permute.xlu0 0
        %2620 = vperm.xlu0 %2619, %v2585
        %v2621 = vpop.permute.xlu0 %2620
        %2624 = vset.pattern.permute.xlu0 0
        %2625 = vperm.xlu0 %2624, %v2586
        %v2626 = vpop.permute.xlu0 %2625
        %2629 = vset.pattern.permute.xlu0 0
        %2630 = vperm.xlu0 %2629, %v2587
        %v2631 = vpop.permute.xlu0 %2630
        %2634 = vset.pattern.permute.xlu0 0
        %2635 = vperm.xlu0 %2634, %v2588
        %v2636 = vpop.permute.xlu0 %2635
        %v2638 = vadd.f32 %v2267, %v2601
        %v2639 = vadd.f32 %v2271, %v2606
        %v2640 = vadd.f32 %v2277, %v2611
        %v2641 = vadd.f32 %v2281, %v2616
        %v2642 = vadd.f32 %v2287, %v2621
        %v2643 = vadd.f32 %v2291, %v2626
        %v2644 = vadd.f32 %v2297, %v2631
        %v2645 = vadd.f32 %v2301, %v2636
        %2647 = vset.pattern.permute.xlu0 0
        %2648 = vperm.xlu0 %2647, %v2590
        %v2649 = vpop.permute.xlu0 %2648
        %2652 = vset.pattern.permute.xlu0 0
        %2653 = vperm.xlu0 %2652, %v2591
        %v2654 = vpop.permute.xlu0 %2653
        %2657 = vset.pattern.permute.xlu0 0
        %2658 = vperm.xlu0 %2657, %v2592
        %v2659 = vpop.permute.xlu0 %2658
        %2662 = vset.pattern.permute.xlu0 0
        %2663 = vperm.xlu0 %2662, %v2593
        %v2664 = vpop.permute.xlu0 %2663
        %2667 = vset.pattern.permute.xlu0 0
        %2668 = vperm.xlu0 %2667, %v2594
        %v2669 = vpop.permute.xlu0 %2668
        %2672 = vset.pattern.permute.xlu0 0
        %2673 = vperm.xlu0 %2672, %v2595
        %v2674 = vpop.permute.xlu0 %2673
        %2677 = vset.pattern.permute.xlu0 0
        %2678 = vperm.xlu0 %2677, %v2596
        %v2679 = vpop.permute.xlu0 %2678
        %2682 = vset.pattern.permute.xlu0 0
        %2683 = vperm.xlu0 %2682, %v2597
        %v2684 = vpop.permute.xlu0 %2683
        %v2686 = vadd.f32 %v2638, %v2649
        %v2687 = vadd.f32 %v2639, %v2654
        %v2688 = vadd.f32 %v2640, %v2659
        %v2689 = vadd.f32 %v2641, %v2664
        %v2690 = vadd.f32 %v2642, %v2669
        %v2691 = vadd.f32 %v2643, %v2674
        %v2692 = vadd.f32 %v2644, %v2679
        %v2693 = vadd.f32 %v2645, %v2684
        %2702 = vrot.lane.b32.xlu0 %v2638, 64
        %v2703 = vpop.permute.xlu0 %2702
        %2704 = vrot.lane.b32.xlu0 %v2639, 64
        %v2705 = vpop.permute.xlu0 %2704
        %2706 = vrot.lane.b32.xlu0 %v2640, 64
        %v2707 = vpop.permute.xlu0 %2706
        %2708 = vrot.lane.b32.xlu0 %v2641, 64
        %v2709 = vpop.permute.xlu0 %2708
        %2710 = vrot.lane.b32.xlu0 %v2642, 64
        %v2711 = vpop.permute.xlu0 %2710
        %2712 = vrot.lane.b32.xlu0 %v2643, 64
        %v2713 = vpop.permute.xlu0 %2712
        %2714 = vrot.lane.b32.xlu0 %v2644, 64
        %v2715 = vpop.permute.xlu0 %2714
        %2716 = vrot.lane.b32.xlu0 %v2645, 64
        %v2717 = vpop.permute.xlu0 %2716
        %v2726 = vmax.f32 %v2686, %v2703
        %v2727 = vmax.f32 %v2687, %v2705
        %v2728 = vmax.f32 %v2688, %v2707
        %v2729 = vmax.f32 %v2689, %v2709
        %v2730 = vmax.f32 %v2690, %v2711
        %v2731 = vmax.f32 %v2691, %v2713
        %v2732 = vmax.f32 %v2692, %v2715
        %v2733 = vmax.f32 %v2693, %v2717
        %v2734 = vadd.f32 %v2269, %v2601
        %v2735 = vadd.f32 %v2273, %v2606
        %v2736 = vadd.f32 %v2279, %v2611
        %v2737 = vadd.f32 %v2283, %v2616
        %v2738 = vadd.f32 %v2289, %v2621
        %v2739 = vadd.f32 %v2293, %v2626
        %v2740 = vadd.f32 %v2299, %v2631
        %v2741 = vadd.f32 %v2303, %v2636
        %v2742 = vmax.f32 %v2726, %v2734
        %v2743 = vmax.f32 %v2727, %v2735
        %v2744 = vmax.f32 %v2728, %v2736
        %v2745 = vmax.f32 %v2729, %v2737
        %v2746 = vmax.f32 %v2730, %v2738
        %v2747 = vmax.f32 %v2731, %v2739
        %v2748 = vmax.f32 %v2732, %v2740
        %v2749 = vmax.f32 %v2733, %v2741
        %v2750 = vadd.f32 %v2269, %v2649
        %v2751 = vadd.f32 %v2273, %v2654
        %v2752 = vadd.f32 %v2279, %v2659
        %v2753 = vadd.f32 %v2283, %v2664
        %v2754 = vadd.f32 %v2289, %v2669
        %v2755 = vadd.f32 %v2293, %v2674
        %v2756 = vadd.f32 %v2299, %v2679
        %v2757 = vadd.f32 %v2303, %v2684
        %2766 = vrot.lane.b32.xlu0 %v2750, 64
        %v2767 = vpop.permute.xlu0 %2766
        %2768 = vrot.lane.b32.xlu0 %v2751, 64
        %v2769 = vpop.permute.xlu0 %2768
        %2770 = vrot.lane.b32.xlu0 %v2752, 64
        %v2771 = vpop.permute.xlu0 %2770
        %2772 = vrot.lane.b32.xlu0 %v2753, 64
        %v2773 = vpop.permute.xlu0 %2772
        %2774 = vrot.lane.b32.xlu0 %v2754, 64
        %v2775 = vpop.permute.xlu0 %2774
        %2776 = vrot.lane.b32.xlu0 %v2755, 64
        %v2777 = vpop.permute.xlu0 %2776
        %2778 = vrot.lane.b32.xlu0 %v2756, 64
        %v2779 = vpop.permute.xlu0 %2778
        %2780 = vrot.lane.b32.xlu0 %v2757, 64
        %v2781 = vpop.permute.xlu0 %2780
        %v2790 = vmax.f32 %v2742, %v2767
        %v2791 = vmax.f32 %v2743, %v2769
        %v2792 = vmax.f32 %v2744, %v2771
        %v2793 = vmax.f32 %v2745, %v2773
        %v2794 = vmax.f32 %v2746, %v2775
        %v2795 = vmax.f32 %v2747, %v2777
        %v2796 = vmax.f32 %v2748, %v2779
        %v2797 = vmax.f32 %v2749, %v2781
        %v2798 = vmax.f32 %v2790, %v2413
        %v2799 = vmax.f32 %v2791, %v2417
        %v2800 = vmax.f32 %v2792, %v2423
        %v2801 = vmax.f32 %v2793, %v2427
        %v2802 = vmax.f32 %v2794, %v2433
        %v2803 = vmax.f32 %v2795, %v2437
        %v2804 = vmax.f32 %v2796, %v2443
        %v2805 = vmax.f32 %v2797, %v2447
        %2814 = vrot.lane.b32.xlu0 %v2413, 64
        %v2815 = vpop.permute.xlu0 %2814
        %2816 = vrot.lane.b32.xlu0 %v2417, 64
        %v2817 = vpop.permute.xlu0 %2816
        %2818 = vrot.lane.b32.xlu0 %v2423, 64
        %v2819 = vpop.permute.xlu0 %2818
        %2820 = vrot.lane.b32.xlu0 %v2427, 64
        %v2821 = vpop.permute.xlu0 %2820
        %2822 = vrot.lane.b32.xlu0 %v2433, 64
        %v2823 = vpop.permute.xlu0 %2822
        %2824 = vrot.lane.b32.xlu0 %v2437, 64
        %v2825 = vpop.permute.xlu0 %2824
        %2826 = vrot.lane.b32.xlu0 %v2443, 64
        %v2827 = vpop.permute.xlu0 %2826
        %2828 = vrot.lane.b32.xlu0 %v2447, 64
        %v2829 = vpop.permute.xlu0 %2828
        %v2838 = vmax.f32 %v2798, %v2815
        %v2839 = vmax.f32 %v2799, %v2817
        %v2840 = vmax.f32 %v2800, %v2819
        %v2841 = vmax.f32 %v2801, %v2821
        %v2842 = vmax.f32 %v2802, %v2823
        %v2843 = vmax.f32 %v2803, %v2825
        %v2844 = vmax.f32 %v2804, %v2827
        %v2845 = vmax.f32 %v2805, %v2829
        %v2846 = vadd.f32 %v2415, %v2649
        %v2847 = vadd.f32 %v2419, %v2654
        %v2848 = vadd.f32 %v2425, %v2659
        %v2849 = vadd.f32 %v2429, %v2664
        %v2850 = vadd.f32 %v2435, %v2669
        %v2851 = vadd.f32 %v2439, %v2674
        %v2852 = vadd.f32 %v2445, %v2679
        %v2853 = vadd.f32 %v2449, %v2684
        %v2854 = vmax.f32 %v2838, %v2846
        %v2855 = vmax.f32 %v2839, %v2847
        %v2856 = vmax.f32 %v2840, %v2848
        %v2857 = vmax.f32 %v2841, %v2849
        %v2858 = vmax.f32 %v2842, %v2850
        %v2859 = vmax.f32 %v2843, %v2851
        %v2860 = vmax.f32 %v2844, %v2852
        %v2861 = vmax.f32 %v2845, %v2853
        %2870 = vrot.lane.b32.xlu0 %v2415, 64
        %v2871 = vpop.permute.xlu0 %2870
        %2872 = vrot.lane.b32.xlu0 %v2419, 64
        %v2873 = vpop.permute.xlu0 %2872
        %2874 = vrot.lane.b32.xlu0 %v2425, 64
        %v2875 = vpop.permute.xlu0 %2874
        %2876 = vrot.lane.b32.xlu0 %v2429, 64
        %v2877 = vpop.permute.xlu0 %2876
        %2878 = vrot.lane.b32.xlu0 %v2435, 64
        %v2879 = vpop.permute.xlu0 %2878
        %2880 = vrot.lane.b32.xlu0 %v2439, 64
        %v2881 = vpop.permute.xlu0 %2880
        %2882 = vrot.lane.b32.xlu0 %v2445, 64
        %v2883 = vpop.permute.xlu0 %2882
        %2884 = vrot.lane.b32.xlu0 %v2449, 64
        %v2885 = vpop.permute.xlu0 %2884
        %v2894 = vmax.f32 %v2854, %v2871
        %v2895 = vmax.f32 %v2855, %v2873
        %v2896 = vmax.f32 %v2856, %v2875
        %v2897 = vmax.f32 %v2857, %v2877
        %v2898 = vmax.f32 %v2858, %v2879
        %v2899 = vmax.f32 %v2859, %v2881
        %v2900 = vmax.f32 %v2860, %v2883
        %v2901 = vmax.f32 %v2861, %v2885
        %v2902 = vmax.f32 %v2894, %v2551
        %v2903 = vmax.f32 %v2895, %v2554
        %v2904 = vmax.f32 %v2896, %v2559
        %v2905 = vmax.f32 %v2897, %v2562
        %v2906 = vmax.f32 %v2898, %v2567
        %v2907 = vmax.f32 %v2899, %v2570
        %v2908 = vmax.f32 %v2900, %v2575
        %v2909 = vmax.f32 %v2901, %v2578
        %v2910 = vld [vmem:[%s2] sm:$0x1]
        %v2912 = vlaneseq
        %v2913 = vshrl.u32 %v2912, 7
        %v2914 = vsub.s32 0, %v2913
        %v2915 = vrot.slane %v2910, %v2914
        %v2917 = vadd.f32 %v2902, %v2915
        %v2918 = vadd.f32 %v2903, %v2915
        %v2919 = vadd.f32 %v2904, %v2915
        %v2920 = vadd.f32 %v2905, %v2915
        %v2921 = vadd.f32 %v2906, %v2915
        %v2922 = vadd.f32 %v2907, %v2915
        %v2923 = vadd.f32 %v2908, %v2915
        %v2924 = vadd.f32 %v2909, %v2915
        %v2925 = vmax.f32 %v2917, 0.0
        %v2926 = vmax.f32 %v2918, 0.0
        %v2927 = vmax.f32 %v2919, 0.0
        %v2928 = vmax.f32 %v2920, 0.0
        %v2929 = vmax.f32 %v2921, 0.0
        %v2930 = vmax.f32 %v2922, 0.0
        %v2931 = vmax.f32 %v2923, 0.0
        %v2932 = vmax.f32 %v2924, 0.0
        %v2933 = vpack.c.bf16 %v2926, %v2925
        %v2934 = vpack.c.bf16 %v2928, %v2927
        %v2935 = vpack.c.bf16 %v2930, %v2929
        %v2936 = vpack.c.bf16 %v2932, %v2931
        %v2941 = vunpack.c.l.b16 %v2933
        %v2942 = vunpack.c.h.b16 %v2933
        %v2943 = vunpack.c.l.b16 %v2934
        %v2944 = vunpack.c.h.b16 %v2934
        %v2945 = vunpack.c.l.b16 %v2935
        %v2946 = vunpack.c.h.b16 %v2935
        %v2947 = vunpack.c.l.b16 %v2936
        %v2948 = vunpack.c.h.b16 %v2936
        %v2949 = vpack.c.b16 %v2941, %v2941
        %v2950 = vpack.c.b16 %v2942, %v2942
        %v2951 = vpack.c.b16 %v2943, %v2943
        %v2952 = vpack.c.b16 %v2944, %v2944
        %v2953 = vpack.c.b16 %v2945, %v2945
        %v2954 = vpack.c.b16 %v2946, %v2946
        %v2955 = vpack.c.b16 %v2947, %v2947
        %v2956 = vpack.c.b16 %v2948, %v2948
        %vm2965 = vcmask 519168
        %2966 = vst.msk [vmem:[%s220] sm:$0xf] %vm2965, %v2949
        %2967 = vst.msk [vmem:[%s220 + $0x4] sm:$0xf] %vm2965, %v2950
        %2968 = vst.msk [vmem:[%s220 + $0x8] sm:$0xf] %vm2965, %v2951
        %2969 = vst.msk [vmem:[%s220 + $0xc] sm:$0xf] %vm2965, %v2952
        %2970 = vst.msk [vmem:[%s220 + $0x10] sm:$0xf] %vm2965, %v2953
        %2971 = vst.msk [vmem:[%s220 + $0x14] sm:$0xf] %vm2965, %v2954
        %2972 = vst.msk [vmem:[%s220 + $0x18] sm:$0xf] %vm2965, %v2955
        %2973 = vst.msk [vmem:[%s220 + $0x1c] sm:$0xf] %vm2965, %v2956
        %s2974 = sand.u32 %s134, 1
        %s2975 = scalar_lea.sflag [#allocation4], %s2974
        %s2976 = sand.u32 %s134, 1
        %s2977 = smul.addr %s2976, 32
        %s2978 = scalar_lea.vmem [#allocation3], %s2977
        // Predicated region
        $region37: #{forward.1} parent=35 // pred_check
          %p2979 = pneg %p144
        $region38: #{forward.1} parent=35 // pred_check_branch
          %2981 = sbr.rel (%p2979) target = $region40
        $region39: #{forward.1} parent=35 // pred_region
          %s2982 = smul.u32 8, %s23
          %s2984 = ssub.s32 512, 512
          %2985 = vsyncadd %s2975, %s2984
          %s2986 = smul.addr %s22, 8
          %s2987 = sadd.s32 %s2982, %s2986
          %s2988 = smul.addr %s2987, 64
          %s2989 = scalar_lea.hbm %s4, %s2988
          %s2990 = sshll.u32 %s2978, 4
          %s2991 = int_to_ptr.vmem [resolvable:$true] %s2990
          %2996 = dma.vmem_to_hbm [thread:$0]  %s2991, 512, %s2989, %s2975, 64, 64, 4
        $region40: #{forward.1} parent=35 // pred_fallthru
          _
      $region36: #{forward.1} parent=5 // pred_fallthru
        _
      %p2997 = scmp.le.s32.totalorder 2, %s13
      // Predicated region
      $region41: #{forward.1} parent=5 // pred_check
        %p2998 = pneg %p2997
      $region42: #{forward.1} parent=5 // pred_check_branch
        %3000 = sbr.rel (%p2998) target = $region44
      $region43: #{forward.1} parent=5 // pred_region
        %s3001 = ssub.s32 %s13, 2
        // Predicated region
        $region45: #{forward.1} parent=43 // pred_check
          %p3002 = pneg %p150
        $region46: #{forward.1} parent=43 // pred_check_branch
          %3004 = sbr.rel (%p3002) target = $region48
        $region47: #{forward.1} parent=43 // pred_region
          %s3005 = sand.u32 %s135, 1
          %s3006 = scalar_lea.sflag [#allocation4], %s3005
          %s3007 = sand.u32 %s135, 1
          %s3008 = smul.addr %s3007, 32
          %s3009 = scalar_lea.vmem [#allocation3], %s3008
          %3010 = dma.done %s3006, 512
        $region48: #{forward.1} parent=43 // pred_fallthru
          _
      $region44: #{forward.1} parent=5 // pred_fallthru
        _
    $region6: #{forward.1} parent=1 // loop_footer
      %s17 = sadd.s32 1, %s13
    $region7: #{forward.1} parent=1 // loop_footer_branch
      %12 = sbr.rel target = $region3
    $region8: #{forward.1} parent=1 // loop_exit
      _
    %3011 = vsyncpa [#allocation4], 1
    %s3012 = scalar_lea.sflag [#allocation4], 1
    %3013 = vsyncpa %s3012, 1

</llo_original>
